<compile_context>
chip_gen: v5e
topology: v5e:2x2
jax: 0.10.0
libtpu: 0.0.40
codegen_flags: <defaults>
</compile_context>

<pallas_src>
import functools
import math

import jax
import jax.numpy as jnp
from jax.experimental import pallas as pl
from jax.experimental.pallas import tpu as pltpu

LANE = 128


def _round_up(x, m):
    return (x + m - 1) // m * m


# ----------------------------------------------------------------------------- kernels
def lin_relu_kernel(x_ref, w_ref, b_ref, o_ref):
    # h = relu(x @ W1 + b1); dropout is identity in eval mode.
    y = jnp.dot(x_ref[...], w_ref[...], preferred_element_type=jnp.float32) + b_ref[...]
    o_ref[...] = jnp.maximum(y, 0.0).astype(o_ref.dtype)


def _conv_accumulate(k, a_in_ref, a_out_ref, h_nbr_ref, acc_in, acc_out):
    @pl.when(k == 0)
    def _():
        acc_in[...] = jnp.zeros_like(acc_in)
        acc_out[...] = jnp.zeros_like(acc_out)

    h_nbr = h_nbr_ref[...]
    acc_in[...] += jnp.dot(a_in_ref[...], h_nbr, preferred_element_type=jnp.float32)
    acc_out[...] += jnp.dot(a_out_ref[...], h_nbr, preferred_element_type=jnp.float32)


def _conv_combine(acc_in, acc_out, h_row_ref, w_in_ref, w_out_ref, w_root_ref,
                  b_root_ref, alpha):
    m_in = acc_in[...].astype(jnp.bfloat16)
    m_out = acc_out[...].astype(jnp.bfloat16)
    return (alpha * jnp.dot(m_out, w_out_ref[...], preferred_element_type=jnp.float32)
            + (1.0 - alpha) * jnp.dot(m_in, w_in_ref[...], preferred_element_type=jnp.float32)
            + jnp.dot(h_row_ref[...], w_root_ref[...], preferred_element_type=jnp.float32)
            + b_root_ref[...])


def dir_conv_linear_kernel(a_in_ref, a_out_ref, h_nbr_ref, h_row_ref,
                           w_in_ref, w_out_ref, w_root_ref, b_root_ref,
                           w_next_ref, b_next_ref,
                           o_ref, acc_in, acc_out, *, alpha):
    # DirGNNConv(GCNConv) fused with the following Linear (lin2).
    k = pl.program_id(1)
    _conv_accumulate(k, a_in_ref, a_out_ref, h_nbr_ref, acc_in, acc_out)

    @pl.when(k == pl.num_programs(1) - 1)
    def _():
        y = _conv_combine(acc_in, acc_out, h_row_ref, w_in_ref, w_out_ref,
                          w_root_ref, b_root_ref, alpha)
        y = jnp.dot(y.astype(jnp.bfloat16), w_next_ref[...],
                    preferred_element_type=jnp.float32) + b_next_ref[...]
        o_ref[...] = y.astype(o_ref.dtype)


def dir_conv_logsoftmax_kernel(a_in_ref, a_out_ref, h_nbr_ref, h_row_ref,
                               w_in_ref, w_out_ref, w_root_ref, b_root_ref,
                               o_ref, acc_in, acc_out, *, alpha, num_valid):
    # DirGNNConv(GCNConv) fused with the final log_softmax (masking padded class lanes).
    k = pl.program_id(1)
    _conv_accumulate(k, a_in_ref, a_out_ref, h_nbr_ref, acc_in, acc_out)

    @pl.when(k == pl.num_programs(1) - 1)
    def _():
        y = _conv_combine(acc_in, acc_out, h_row_ref, w_in_ref, w_out_ref,
                          w_root_ref, b_root_ref, alpha)
        lane = jax.lax.broadcasted_iota(jnp.int32, y.shape, 1)
        y = jnp.where(lane < num_valid, y, -1e30)
        s = y - jnp.max(y, axis=-1, keepdims=True)
        lse = jnp.log(jnp.sum(jnp.exp(s), axis=-1, keepdims=True))
        o_ref[...] = (s - lse).astype(o_ref.dtype)


# ----------------------------------------------------------------------------- wrappers
def lin_relu(x, w, b, *, tm=128):
    n, fin = x.shape
    fout = w.shape[1]
    return pl.pallas_call(
        lin_relu_kernel,
        out_shape=jax.ShapeDtypeStruct((n, fout), jnp.bfloat16),
        grid_spec=pltpu.PrefetchScalarGridSpec(
            num_scalar_prefetch=0,
            grid=(n // tm,),
            in_specs=[pl.BlockSpec((tm, fin), lambda i: (i, 0)),
                      pl.BlockSpec((fin, fout), lambda i: (0, 0)),
                      pl.BlockSpec((1, fout), lambda i: (0, 0))],
            out_specs=pl.BlockSpec((tm, fout), lambda i: (i, 0))),
        compiler_params=pltpu.CompilerParams(dimension_semantics=("parallel",)),
    )(x, w, b)


def dir_conv_linear(a_in, a_out, h, w_in, w_out, w_root, b_root, w_next, b_next,
                    *, alpha=0.5, tm=128, tk=128):
    n, f = h.shape
    c = w_next.shape[1]
    return pl.pallas_call(
        functools.partial(dir_conv_linear_kernel, alpha=alpha),
        out_shape=jax.ShapeDtypeStruct((n, c), jnp.bfloat16),
        grid_spec=pltpu.PrefetchScalarGridSpec(
            num_scalar_prefetch=0,
            grid=(n // tm, n // tk),
            in_specs=[
                pl.BlockSpec((tm, tk), lambda i, k: (i, k)),   # A_in tile
                pl.BlockSpec((tm, tk), lambda i, k: (i, k)),   # A_out tile
                pl.BlockSpec((tk, f), lambda i, k: (k, 0)),    # neighbor features
                pl.BlockSpec((tm, f), lambda i, k: (i, 0)),    # root features
                pl.BlockSpec((f, f), lambda i, k: (0, 0)),     # W_in  (GCN in-direction)
                pl.BlockSpec((f, f), lambda i, k: (0, 0)),     # W_out (GCN out-direction)
                pl.BlockSpec((f, f), lambda i, k: (0, 0)),     # W_root
                pl.BlockSpec((1, f), lambda i, k: (0, 0)),     # b_root
                pl.BlockSpec((f, c), lambda i, k: (0, 0)),     # W2 (fused lin2)
                pl.BlockSpec((1, c), lambda i, k: (0, 0)),     # b2
            ],
            out_specs=pl.BlockSpec((tm, c), lambda i, k: (i, 0)),
            scratch_shapes=[pltpu.VMEM((tm, f), jnp.float32),
                            pltpu.VMEM((tm, f), jnp.float32)]),
        compiler_params=pltpu.CompilerParams(
            dimension_semantics=("parallel", "arbitrary")),
    )(a_in, a_out, h, h, w_in, w_out, w_root, b_root, w_next, b_next)


def dir_conv_logsoftmax(a_in, a_out, h, w_in, w_out, w_root, b_root,
                        *, num_classes, alpha=0.5, tm=128, tk=128):
    n, f = h.shape
    return pl.pallas_call(
        functools.partial(dir_conv_logsoftmax_kernel, alpha=alpha, num_valid=num_classes),
        out_shape=jax.ShapeDtypeStruct((n, f), jnp.float32),
        grid_spec=pltpu.PrefetchScalarGridSpec(
            num_scalar_prefetch=0,
            grid=(n // tm, n // tk),
            in_specs=[
                pl.BlockSpec((tm, tk), lambda i, k: (i, k)),
                pl.BlockSpec((tm, tk), lambda i, k: (i, k)),
                pl.BlockSpec((tk, f), lambda i, k: (k, 0)),
                pl.BlockSpec((tm, f), lambda i, k: (i, 0)),
                pl.BlockSpec((f, f), lambda i, k: (0, 0)),
                pl.BlockSpec((f, f), lambda i, k: (0, 0)),
                pl.BlockSpec((f, f), lambda i, k: (0, 0)),
                pl.BlockSpec((1, f), lambda i, k: (0, 0)),
            ],
            out_specs=pl.BlockSpec((tm, f), lambda i, k: (i, 0)),
            scratch_shapes=[pltpu.VMEM((tm, f), jnp.float32),
                            pltpu.VMEM((tm, f), jnp.float32)]),
        compiler_params=pltpu.CompilerParams(
            dimension_semantics=("parallel", "arbitrary")),
    )(a_in, a_out, h, h, w_in, w_out, w_root, b_root)


# ----------------------------------------------------------------------------- params / glue
def init_linear(key, fan_in, fan_out, pad_in, pad_out):
    # torch.nn.Linear default init (uniform +-1/sqrt(fan_in)); zero-padded to lane width.
    k1, k2 = jax.random.split(key)
    bound = 1.0 / math.sqrt(fan_in)
    w = jax.random.uniform(k1, (fan_in, fan_out), jnp.float32, -bound, bound)
    b = jax.random.uniform(k2, (1, fan_out), jnp.float32, -bound, bound)
    wp = jnp.zeros((pad_in, pad_out), jnp.float32).at[:fan_in, :fan_out].set(w)
    bp = jnp.zeros((1, pad_out), jnp.float32).at[:, :fan_out].set(b)
    return wp.astype(jnp.bfloat16), bp


def init_glorot(key, fan_in, fan_out, pad_in, pad_out):
    # GCNConv linear weight (glorot, no bias); zero-padded to lane width.
    bound = math.sqrt(6.0 / (fan_in + fan_out))
    w = jax.random.uniform(key, (fan_in, fan_out), jnp.float32, -bound, bound)
    wp = jnp.zeros((pad_in, pad_out), jnp.float32).at[:fan_in, :fan_out].set(w)
    return wp.astype(jnp.bfloat16)


def init_params(key, F, H, C, Fp, Hp, Cp):
    keys = jax.random.split(key, 8)
    p = {}
    p["w1"], p["b1"] = init_linear(keys[0], F, H, Fp, Hp)
    p["w2"], p["b2"] = init_linear(keys[1], H, C, Hp, Cp)
    # conv1 = DirGNNConv(GCNConv(H, H, bias=False), alpha=0.5, root_weight=True)
    p["c1_w_in"] = init_glorot(keys[2], H, H, Hp, Hp)
    p["c1_w_out"] = init_glorot(keys[3], H, H, Hp, Hp)
    p["c1_w_root"], p["c1_b_root"] = init_linear(keys[4], H, H, Hp, Hp)
    # conv2 = DirGNNConv(GCNConv(C, C, bias=False), alpha=0.5, root_weight=True)
    p["c2_w_in"] = init_glorot(keys[5], C, C, Cp, Cp)
    p["c2_w_out"] = init_glorot(keys[6], C, C, Cp, Cp)
    p["c2_w_root"], p["c2_b_root"] = init_linear(keys[7], C, C, Cp, Cp)
    return p


def build_norm_adj(edge_index, n, n_pad):
    # gcn_norm semantics (no self loops, edge_weight=1):
    #   A_in[i,j]  = deg_in(i)^-1/2 * deg_in(j)^-1/2  * (#edges j->i)       (original direction)
    #   A_out[i,j] = deg_out(i)^-1/2 * deg_out(j)^-1/2 * (#edges i->j)      (edge_index.flip([0]))
    src, dst = edge_index[0], edge_index[1]
    a = jnp.zeros((n, n), jnp.float32).at[dst, src].add(1.0)

    def norm(mat):
        deg = jnp.sum(mat, axis=1)
        dinv = jnp.where(deg > 0, jax.lax.rsqrt(jnp.maximum(deg, 1e-12)), 0.0)
        return dinv[:, None] * mat * dinv[None, :]

    pad = ((0, n_pad - n), (0, n_pad - n))
    a_in = jnp.pad(norm(a), pad).astype(jnp.bfloat16)
    a_out = jnp.pad(norm(a.T), pad).astype(jnp.bfloat16)
    return a_in, a_out


# ----------------------------------------------------------------------------- forward
def dirgnn_forward(params, x_p, a_in_p, a_out_p, *, num_classes):
    h = lin_relu(x_p, params["w1"], params["b1"])                      # K1: lin1 + relu
    h2 = dir_conv_linear(a_in_p, a_out_p, h,                           # K2: conv1 + lin2
                         params["c1_w_in"], params["c1_w_out"],
                         params["c1_w_root"], params["c1_b_root"],
                         params["w2"], params["b2"])
    out = dir_conv_logsoftmax(a_in_p, a_out_p, h2,                     # K3: conv2 + log_softmax
                              params["c2_w_in"], params["c2_w_out"],
                              params["c2_w_root"], params["c2_b_root"],
                              num_classes=num_classes)
    return out


def reference_forward(p, x_p, a_in_p, a_out_p, num_classes):
    # Pure-JAX mirror (same bf16 quantization points) used as a correctness reference.
    f32 = jnp.float32
    h = jnp.maximum(jnp.dot(x_p, p["w1"], preferred_element_type=f32) + p["b1"], 0.0)
    h = h.astype(jnp.bfloat16)

    def conv(feat, w_in, w_out, w_root, b_root):
        m_in = jnp.dot(a_in_p, feat, preferred_element_type=f32).astype(jnp.bfloat16)
        m_out = jnp.dot(a_out_p, feat, preferred_element_type=f32).astype(jnp.bfloat16)
        return (0.5 * jnp.dot(m_out, w_out, preferred_element_type=f32)
                + 0.5 * jnp.dot(m_in, w_in, preferred_element_type=f32)
                + jnp.dot(feat, w_root, preferred_element_type=f32) + b_root)

    y1 = conv(h, p["c1_w_in"], p["c1_w_out"], p["c1_w_root"], p["c1_b_root"])
    h2 = (jnp.dot(y1.astype(jnp.bfloat16), p["w2"], preferred_element_type=f32)
          + p["b2"]).astype(jnp.bfloat16)
    y2 = conv(h2, p["c2_w_in"], p["c2_w_out"], p["c2_w_root"], p["c2_b_root"])
    lane = jnp.arange(y2.shape[1])
    y2 = jnp.where(lane < num_classes, y2, -1e30)
    return jax.nn.log_softmax(y2, axis=1)


# ----------------------------------------------------------------------------- main
if __name__ == "__main__":
    N, F, H, C, E = 200, 32, 64, 8, 800
    TM = TK = 128
    Np = _round_up(N, 128)
    Fp, Hp, Cp = _round_up(F, LANE), _round_up(H, LANE), _round_up(C, LANE)

    key = jax.random.PRNGKey(0)
    kx, ke, kp = jax.random.split(key, 3)

    x = jax.random.normal(kx, (N, F), jnp.float32)
    edge_index = jax.random.randint(ke, (2, E), 0, N, jnp.int32)

    x_p = jnp.pad(x, ((0, Np - N), (0, Fp - F))).astype(jnp.bfloat16)
    a_in_p, a_out_p = build_norm_adj(edge_index, N, Np)
    params = init_params(kp, F, H, C, Fp, Hp, Cp)

    fwd = jax.jit(functools.partial(dirgnn_forward, num_classes=C))
    out_p = jax.block_until_ready(fwd(params, x_p, a_in_p, a_out_p))
    out = out_p[:N, :C]

    ref = reference_forward(params, x_p, a_in_p, a_out_p, C)[:N, :C]

    assert out.shape == (N, C)
    # rows of log_softmax must exp-sum to 1
    assert bool(jnp.all(jnp.abs(jnp.sum(jnp.exp(out), axis=1) - 1.0) < 1e-3))
    # match the pure-JAX reference (bf16 matmuls, f32 accumulation)
    assert bool(jnp.max(jnp.abs(out - jnp.asarray(ref, jnp.float32))) < 5e-2)
    print("KERNEL_OK")
</pallas_src>

<mosaic_0001>
module attributes {stable_mosaic.version = 11 : i64} {
  func.func @lin_relu_kernel(%arg0: i32, %arg1: memref<128x128xbf16, #tpu.memory_space<vmem>>, %arg2: memref<128x128xbf16, #tpu.memory_space<vmem>>, %arg3: memref<1x128xf32, #tpu.memory_space<vmem>>, %arg4: memref<128x128xbf16, #tpu.memory_space<vmem>>) attributes {dimension_semantics = [#tpu.dimension_semantics<parallel>], iteration_bounds = array<i64: 2>, scalar_prefetch = 0 : i64, scratch_operands = 0 : i64, tpu.core_type = #tpu.core_type<tc>, window_params = [{transform_indices = @transform_0, window_bounds = array<i64: 128, 128>}, {pipeline_mode = #tpu.pipeline_mode<synchronous>, transform_indices = @transform_1, window_bounds = array<i64: 128, 128>}, {pipeline_mode = #tpu.pipeline_mode<synchronous>, transform_indices = @transform_2, window_bounds = array<i64: 1, 128>}, {transform_indices = @transform_3, window_bounds = array<i64: 128, 128>}]} {
    %c0 = arith.constant 0 : index
    %c0_0 = arith.constant 0 : index
    %0 = vector.load %arg1[%c0, %c0_0] : memref<128x128xbf16, #tpu.memory_space<vmem>>, vector<128x128xbf16>
    %c0_1 = arith.constant 0 : index
    %c0_2 = arith.constant 0 : index
    %1 = vector.load %arg2[%c0_1, %c0_2] : memref<128x128xbf16, #tpu.memory_space<vmem>>, vector<128x128xbf16>
    %cst = arith.constant dense<0.000000e+00> : vector<128x128xf32>
    %2 = tpu.matmul %0, %1, %cst {dimension_numbers = #tpu.dot_dimension_numbers<[1], [0], [0], [1], [0, 0, 1, 1], [], []>} : vector<128x128xbf16>, vector<128x128xbf16>, vector<128x128xf32> -> vector<128x128xf32>
    %c0_3 = arith.constant 0 : index
    %c0_4 = arith.constant 0 : index
    %3 = vector.load %arg3[%c0_3, %c0_4] : memref<1x128xf32, #tpu.memory_space<vmem>>, vector<1x128xf32>
    %4 = vector.broadcast %3 : vector<1x128xf32> to vector<128x128xf32>
    %5 = arith.addf %2, %4 : vector<128x128xf32>
    %cst_5 = arith.constant 0.000000e+00 : f32
    %6 = vector.broadcast %cst_5 : f32 to vector<128x128xf32>
    %7 = arith.maximumf %5, %6 : vector<128x128xf32>
    %8 = arith.truncf %7 : vector<128x128xf32> to vector<128x128xbf16>
    %c0_6 = arith.constant 0 : index
    %c0_7 = arith.constant 0 : index
    %9 = vector.load %arg4[%c0_6, %c0_7] : memref<128x128xbf16, #tpu.memory_space<vmem>>, vector<128x128xbf16>
    tpu.vector_store %arg4[%c0_6, %c0_7], %8 {strides = array<i32>} : memref<128x128xbf16, #tpu.memory_space<vmem>>, vector<128x128xbf16>,
    return
  }
  func.func @transform_0(%arg0: i32) -> (i32, i32) {
    %c0_i32 = arith.constant 0 : i32
    %c0_i32_0 = arith.constant 0 : i32
    return %arg0, %c0_i32 : i32, i32
  }
  func.func @transform_1(%arg0: i32) -> (i32, i32) {
    %c0_i32 = arith.constant 0 : i32
    %c0_i32_0 = arith.constant 0 : i32
    %c0_i32_1 = arith.constant 0 : i32
    return %c0_i32, %c0_i32_0 : i32, i32
  }
  func.func @transform_2(%arg0: i32) -> (i32, i32) {
    %c0_i32 = arith.constant 0 : i32
    %c0_i32_0 = arith.constant 0 : i32
    %c0_i32_1 = arith.constant 0 : i32
    return %c0_i32, %c0_i32_0 : i32, i32
  }
  func.func @transform_3(%arg0: i32) -> (i32, i32) {
    %c0_i32 = arith.constant 0 : i32
    %c0_i32_0 = arith.constant 0 : i32
    return %arg0, %c0_i32 : i32, i32
  }
}

module attributes {stable_mosaic.version = 11 : i64} {
  func.func @dir_conv_logsoftmax_kernel(%arg0: i32, %arg1: i32, %arg2: memref<128x128xbf16, #tpu.memory_space<vmem>>, %arg3: memref<128x128xbf16, #tpu.memory_space<vmem>>, %arg4: memref<128x128xbf16, #tpu.memory_space<vmem>>, %arg5: memref<128x128xbf16, #tpu.memory_space<vmem>>, %arg6: memref<128x128xbf16, #tpu.memory_space<vmem>>, %arg7: memref<128x128xbf16, #tpu.memory_space<vmem>>, %arg8: memref<128x128xbf16, #tpu.memory_space<vmem>>, %arg9: memref<1x128xf32, #tpu.memory_space<vmem>>, %arg10: memref<128x128xf32, #tpu.memory_space<vmem>>, %arg11: memref<128x128xf32, #tpu.memory_space<vmem>>, %arg12: memref<128x128xf32, #tpu.memory_space<vmem>>) attributes {dimension_semantics = [#tpu.dimension_semantics<parallel>, #tpu.dimension_semantics<arbitrary>], iteration_bounds = array<i64: 2, 2>, scalar_prefetch = 0 : i64, scratch_operands = 2 : i64, tpu.core_type = #tpu.core_type<tc>, window_params = [{transform_indices = @transform_0, window_bounds = array<i64: 128, 128>}, {transform_indices = @transform_1, window_bounds = array<i64: 128, 128>}, {transform_indices = @transform_2, window_bounds = array<i64: 128, 128>}, {transform_indices = @transform_3, window_bounds = array<i64: 128, 128>}, {pipeline_mode = #tpu.pipeline_mode<synchronous>, transform_indices = @transform_4, window_bounds = array<i64: 128, 128>}, {pipeline_mode = #tpu.pipeline_mode<synchronous>, transform_indices = @transform_5, window_bounds = array<i64: 128, 128>}, {pipeline_mode = #tpu.pipeline_mode<synchronous>, transform_indices = @transform_6, window_bounds = array<i64: 128, 128>}, {pipeline_mode = #tpu.pipeline_mode<synchronous>, transform_indices = @transform_7, window_bounds = array<i64: 1, 128>}, {transform_indices = @transform_8, window_bounds = array<i64: 128, 128>}]} {
    %c0_i32 = arith.constant 0 : i32
    %0 = arith.cmpi eq, %arg1, %c0_i32 : i32
    %1 = arith.extui %0 : i1 to i32
    %c0_i32_0 = arith.constant 0 : i32
    %2 = arith.cmpi ne, %1, %c0_i32_0 : i32
    scf.if %2 {
      %cst_16 = arith.constant 0.000000e+00 : f32
      %17 = vector.broadcast %cst_16 : f32 to vector<128x128xf32>
      %c0_17 = arith.constant 0 : index
      %c0_18 = arith.constant 0 : index
      %18 = vector.load %arg11[%c0_17, %c0_18] : memref<128x128xf32, #tpu.memory_space<vmem>>, vector<128x128xf32>
      tpu.vector_store %arg11[%c0_17, %c0_18], %17 {strides = array<i32>} : memref<128x128xf32, #tpu.memory_space<vmem>>, vector<128x128xf32>,
      %cst_19 = arith.constant 0.000000e+00 : f32
      %19 = vector.broadcast %cst_19 : f32 to vector<128x128xf32>
      %c0_20 = arith.constant 0 : index
      %c0_21 = arith.constant 0 : index
      %20 = vector.load %arg12[%c0_20, %c0_21] : memref<128x128xf32, #tpu.memory_space<vmem>>, vector<128x128xf32>
      tpu.vector_store %arg12[%c0_20, %c0_21], %19 {strides = array<i32>} : memref<128x128xf32, #tpu.memory_space<vmem>>, vector<128x128xf32>,
    } else {
    }
    %c0 = arith.constant 0 : index
    %c0_1 = arith.constant 0 : index
    %3 = vector.load %arg4[%c0, %c0_1] : memref<128x128xbf16, #tpu.memory_space<vmem>>, vector<128x128xbf16>
    %c0_2 = arith.constant 0 : index
    %c0_3 = arith.constant 0 : index
    %4 = vector.load %arg11[%c0_2, %c0_3] : memref<128x128xf32, #tpu.memory_space<vmem>>, vector<128x128xf32>
    %c0_4 = arith.constant 0 : index
    %c0_5 = arith.constant 0 : index
    %5 = vector.load %arg2[%c0_4, %c0_5] : memref<128x128xbf16, #tpu.memory_space<vmem>>, vector<128x128xbf16>
    %cst = arith.constant dense<0.000000e+00> : vector<128x128xf32>
    %6 = tpu.matmul %5, %3, %cst {dimension_numbers = #tpu.dot_dimension_numbers<[1], [0], [0], [1], [0, 0, 1, 1], [], []>} : vector<128x128xbf16>, vector<128x128xbf16>, vector<128x128xf32> -> vector<128x128xf32>
    %7 = arith.addf %4, %6 : vector<128x128xf32>
    %c0_6 = arith.constant 0 : index
    %c0_7 = arith.constant 0 : index
    %8 = vector.load %arg11[%c0_6, %c0_7] : memref<128x128xf32, #tpu.memory_space<vmem>>, vector<128x128xf32>
    tpu.vector_store %arg11[%c0_6, %c0_7], %7 {strides = array<i32>} : memref<128x128xf32, #tpu.memory_space<vmem>>, vector<128x128xf32>,
    %c0_8 = arith.constant 0 : index
    %c0_9 = arith.constant 0 : index
    %9 = vector.load %arg12[%c0_8, %c0_9] : memref<128x128xf32, #tpu.memory_space<vmem>>, vector<128x128xf32>
    %c0_10 = arith.constant 0 : index
    %c0_11 = arith.constant 0 : index
    %10 = vector.load %arg3[%c0_10, %c0_11] : memref<128x128xbf16, #tpu.memory_space<vmem>>, vector<128x128xbf16>
    %cst_12 = arith.constant dense<0.000000e+00> : vector<128x128xf32>
    %11 = tpu.matmul %10, %3, %cst_12 {dimension_numbers = #tpu.dot_dimension_numbers<[1], [0], [0], [1], [0, 0, 1, 1], [], []>} : vector<128x128xbf16>, vector<128x128xbf16>, vector<128x128xf32> -> vector<128x128xf32>
    %12 = arith.addf %9, %11 : vector<128x128xf32>
    %c0_13 = arith.constant 0 : index
    %c0_14 = arith.constant 0 : index
    %13 = vector.load %arg12[%c0_13, %c0_14] : memref<128x128xf32, #tpu.memory_space<vmem>>, vector<128x128xf32>
    tpu.vector_store %arg12[%c0_13, %c0_14], %12 {strides = array<i32>} : memref<128x128xf32, #tpu.memory_space<vmem>>, vector<128x128xf32>,
    %c1_i32 = arith.constant 1 : i32
    %14 = arith.cmpi eq, %arg1, %c1_i32 : i32
    %15 = arith.extui %14 : i1 to i32
    %c0_i32_15 = arith.constant 0 : i32
    %16 = arith.cmpi ne, %15, %c0_i32_15 : i32
    scf.if %16 {
      %c0_16 = arith.constant 0 : index
      %c0_17 = arith.constant 0 : index
      %17 = vector.load %arg11[%c0_16, %c0_17] : memref<128x128xf32, #tpu.memory_space<vmem>>, vector<128x128xf32>
      %18 = arith.truncf %17 : vector<128x128xf32> to vector<128x128xbf16>
      %c0_18 = arith.constant 0 : index
      %c0_19 = arith.constant 0 : index
      %19 = vector.load %arg12[%c0_18, %c0_19] : memref<128x128xf32, #tpu.memory_space<vmem>>, vector<128x128xf32>
      %20 = arith.truncf %19 : vector<128x128xf32> to vector<128x128xbf16>
      %c0_20 = arith.constant 0 : index
      %c0_21 = arith.constant 0 : index
      %21 = vector.load %arg7[%c0_20, %c0_21] : memref<128x128xbf16, #tpu.memory_space<vmem>>, vector<128x128xbf16>
      %cst_22 = arith.constant dense<0.000000e+00> : vector<128x128xf32>
      %22 = tpu.matmul %20, %21, %cst_22 {dimension_numbers = #tpu.dot_dimension_numbers<[1], [0], [0], [1], [0, 0, 1, 1], [], []>} : vector<128x128xbf16>, vector<128x128xbf16>, vector<128x128xf32> -> vector<128x128xf32>
      %cst_23 = arith.constant 5.000000e-01 : f32
      %23 = vector.broadcast %cst_23 : f32 to vector<128x128xf32>
      %24 = arith.mulf %23, %22 : vector<128x128xf32>
      %c0_24 = arith.constant 0 : index
      %c0_25 = arith.constant 0 : index
      %25 = vector.load %arg6[%c0_24, %c0_25] : memref<128x128xbf16, #tpu.memory_space<vmem>>, vector<128x128xbf16>
      %cst_26 = arith.constant dense<0.000000e+00> : vector<128x128xf32>
      %26 = tpu.matmul %18, %25, %cst_26 {dimension_numbers = #tpu.dot_dimension_numbers<[1], [0], [0], [1], [0, 0, 1, 1], [], []>} : vector<128x128xbf16>, vector<128x128xbf16>, vector<128x128xf32> -> vector<128x128xf32>
      %cst_27 = arith.constant 5.000000e-01 : f32
      %27 = vector.broadcast %cst_27 : f32 to vector<128x128xf32>
      %28 = arith.mulf %27, %26 : vector<128x128xf32>
      %29 = arith.addf %24, %28 : vector<128x128xf32>
      %c0_28 = arith.constant 0 : index
      %c0_29 = arith.constant 0 : index
      %30 = vector.load %arg5[%c0_28, %c0_29] : memref<128x128xbf16, #tpu.memory_space<vmem>>, vector<128x128xbf16>
      %c0_30 = arith.constant 0 : index
      %c0_31 = arith.constant 0 : index
      %31 = vector.load %arg8[%c0_30, %c0_31] : memref<128x128xbf16, #tpu.memory_space<vmem>>, vector<128x128xbf16>
      %cst_32 = arith.constant dense<0.000000e+00> : vector<128x128xf32>
      %32 = tpu.matmul %30, %31, %cst_32 {dimension_numbers = #tpu.dot_dimension_numbers<[1], [0], [0], [1], [0, 0, 1, 1], [], []>} : vector<128x128xbf16>, vector<128x128xbf16>, vector<128x128xf32> -> vector<128x128xf32>
      %33 = arith.addf %29, %32 : vector<128x128xf32>
      %c0_33 = arith.constant 0 : index
      %c0_34 = arith.constant 0 : index
      %34 = vector.load %arg9[%c0_33, %c0_34] : memref<1x128xf32, #tpu.memory_space<vmem>>, vector<1x128xf32>
      %35 = vector.broadcast %34 : vector<1x128xf32> to vector<128x128xf32>
      %36 = arith.addf %33, %35 : vector<128x128xf32>
      %37 = tpu.iota {dimensions = array<i32: 1>} : vector<128x128xi32>
      %c8_i32 = arith.constant 8 : i32
      %38 = vector.broadcast %c8_i32 : i32 to vector<128x128xi32>
      %39 = arith.cmpi slt, %37, %38 : vector<128x128xi32>
      %cst_35 = arith.constant -1.000000e+30 : f32
      %40 = vector.broadcast %cst_35 : f32 to vector<128x128xf32>
      %41 = arith.select %39, %36, %40 : vector<128x128xi1>, vector<128x128xf32>
      %cst_36 = arith.constant dense<0xFF800000> : vector<128xf32>
      %42 = vector.multi_reduction <maximumf>, %41, %cst_36 [1] : vector<128x128xf32> to vector<128xf32>
      %43 = vector.shape_cast %42 : vector<128xf32> to vector<128x1xf32>
      %44 = vector.broadcast %43 : vector<128x1xf32> to vector<128x128xf32>
      %45 = arith.subf %41, %44 : vector<128x128xf32>
      %46 = math.exp %45 : vector<128x128xf32>
      %cst_37 = arith.constant dense<0.000000e+00> : vector<128xf32>
      %47 = vector.multi_reduction <add>, %46, %cst_37 [1] : vector<128x128xf32> to vector<128xf32>
      %48 = vector.shape_cast %47 : vector<128xf32> to vector<128x1xf32>
      %49 = math.log %48 : vector<128x1xf32>
      %50 = vector.broadcast %49 : vector<128x1xf32> to vector<128x128xf32>
      %51 = arith.subf %45, %50 : vector<128x128xf32>
      %c0_38 = arith.constant 0 : index
      %c0_39 = arith.constant 0 : index
      %52 = vector.load %arg10[%c0_38, %c0_39] : memref<128x128xf32, #tpu.memory_space<vmem>>, vector<128x128xf32>
      tpu.vector_store %arg10[%c0_38, %c0_39], %51 {strides = array<i32>} : memref<128x128xf32, #tpu.memory_space<vmem>>, vector<128x128xf32>,
    } else {
    }
    return
  }
  func.func @transform_0(%arg0: i32, %arg1: i32) -> (i32, i32) {
    %c0_i32 = arith.constant 0 : i32
    return %arg0, %arg1 : i32, i32
  }
  func.func @transform_1(%arg0: i32, %arg1: i32) -> (i32, i32) {
    %c0_i32 = arith.constant 0 : i32
    return %arg0, %arg1 : i32, i32
  }
  func.func @transform_2(%arg0: i32, %arg1: i32) -> (i32, i32) {
    %c0_i32 = arith.constant 0 : i32
    %c0_i32_0 = arith.constant 0 : i32
    return %arg1, %c0_i32 : i32, i32
  }
  func.func @transform_3(%arg0: i32, %arg1: i32) -> (i32, i32) {
    %c0_i32 = arith.constant 0 : i32
    %c0_i32_0 = arith.constant 0 : i32
    return %arg0, %c0_i32 : i32, i32
  }
  func.func @transform_4(%arg0: i32, %arg1: i32) -> (i32, i32) {
    %c0_i32 = arith.constant 0 : i32
    %c0_i32_0 = arith.constant 0 : i32
    %c0_i32_1 = arith.constant 0 : i32
    return %c0_i32, %c0_i32_0 : i32, i32
  }
  func.func @transform_5(%arg0: i32, %arg1: i32) -> (i32, i32) {
    %c0_i32 = arith.constant 0 : i32
    %c0_i32_0 = arith.constant 0 : i32
    %c0_i32_1 = arith.constant 0 : i32
    return %c0_i32, %c0_i32_0 : i32, i32
  }
  func.func @transform_6(%arg0: i32, %arg1: i32) -> (i32, i32) {
    %c0_i32 = arith.constant 0 : i32
    %c0_i32_0 = arith.constant 0 : i32
    %c0_i32_1 = arith.constant 0 : i32
    return %c0_i32, %c0_i32_0 : i32, i32
  }
  func.func @transform_7(%arg0: i32, %arg1: i32) -> (i32, i32) {
    %c0_i32 = arith.constant 0 : i32
    %c0_i32_0 = arith.constant 0 : i32
    %c0_i32_1 = arith.constant 0 : i32
    return %c0_i32, %c0_i32_0 : i32, i32
  }
  func.func @transform_8(%arg0: i32, %arg1: i32) -> (i32, i32) {
    %c0_i32 = arith.constant 0 : i32
    %c0_i32_0 = arith.constant 0 : i32
    return %arg0, %c0_i32 : i32, i32
  }
}

module attributes {stable_mosaic.version = 11 : i64} {
  func.func @dir_conv_linear_kernel(%arg0: i32, %arg1: i32, %arg2: memref<128x128xbf16, #tpu.memory_space<vmem>>, %arg3: memref<128x128xbf16, #tpu.memory_space<vmem>>, %arg4: memref<128x128xbf16, #tpu.memory_space<vmem>>, %arg5: memref<128x128xbf16, #tpu.memory_space<vmem>>, %arg6: memref<128x128xbf16, #tpu.memory_space<vmem>>, %arg7: memref<128x128xbf16, #tpu.memory_space<vmem>>, %arg8: memref<128x128xbf16, #tpu.memory_space<vmem>>, %arg9: memref<1x128xf32, #tpu.memory_space<vmem>>, %arg10: memref<128x128xbf16, #tpu.memory_space<vmem>>, %arg11: memref<1x128xf32, #tpu.memory_space<vmem>>, %arg12: memref<128x128xbf16, #tpu.memory_space<vmem>>, %arg13: memref<128x128xf32, #tpu.memory_space<vmem>>, %arg14: memref<128x128xf32, #tpu.memory_space<vmem>>) attributes {dimension_semantics = [#tpu.dimension_semantics<parallel>, #tpu.dimension_semantics<arbitrary>], iteration_bounds = array<i64: 2, 2>, scalar_prefetch = 0 : i64, scratch_operands = 2 : i64, tpu.core_type = #tpu.core_type<tc>, window_params = [{transform_indices = @transform_0, window_bounds = array<i64: 128, 128>}, {transform_indices = @transform_1, window_bounds = array<i64: 128, 128>}, {transform_indices = @transform_2, window_bounds = array<i64: 128, 128>}, {transform_indices = @transform_3, window_bounds = array<i64: 128, 128>}, {pipeline_mode = #tpu.pipeline_mode<synchronous>, transform_indices = @transform_4, window_bounds = array<i64: 128, 128>}, {pipeline_mode = #tpu.pipeline_mode<synchronous>, transform_indices = @transform_5, window_bounds = array<i64: 128, 128>}, {pipeline_mode = #tpu.pipeline_mode<synchronous>, transform_indices = @transform_6, window_bounds = array<i64: 128, 128>}, {pipeline_mode = #tpu.pipeline_mode<synchronous>, transform_indices = @transform_7, window_bounds = array<i64: 1, 128>}, {pipeline_mode = #tpu.pipeline_mode<synchronous>, transform_indices = @transform_8, window_bounds = array<i64: 128, 128>}, {pipeline_mode = #tpu.pipeline_mode<synchronous>, transform_indices = @transform_9, window_bounds = array<i64: 1, 128>}, {transform_indices = @transform_10, window_bounds = array<i64: 128, 128>}]} {
    %c0_i32 = arith.constant 0 : i32
    %0 = arith.cmpi eq, %arg1, %c0_i32 : i32
    %1 = arith.extui %0 : i1 to i32
    %c0_i32_0 = arith.constant 0 : i32
    %2 = arith.cmpi ne, %1, %c0_i32_0 : i32
    scf.if %2 {
      %cst_16 = arith.constant 0.000000e+00 : f32
      %17 = vector.broadcast %cst_16 : f32 to vector<128x128xf32>
      %c0_17 = arith.constant 0 : index
      %c0_18 = arith.constant 0 : index
      %18 = vector.load %arg13[%c0_17, %c0_18] : memref<128x128xf32, #tpu.memory_space<vmem>>, vector<128x128xf32>
      tpu.vector_store %arg13[%c0_17, %c0_18], %17 {strides = array<i32>} : memref<128x128xf32, #tpu.memory_space<vmem>>, vector<128x128xf32>,
      %cst_19 = arith.constant 0.000000e+00 : f32
      %19 = vector.broadcast %cst_19 : f32 to vector<128x128xf32>
      %c0_20 = arith.constant 0 : index
      %c0_21 = arith.constant 0 : index
      %20 = vector.load %arg14[%c0_20, %c0_21] : memref<128x128xf32, #tpu.memory_space<vmem>>, vector<128x128xf32>
      tpu.vector_store %arg14[%c0_20, %c0_21], %19 {strides = array<i32>} : memref<128x128xf32, #tpu.memory_space<vmem>>, vector<128x128xf32>,
    } else {
    }
    %c0 = arith.constant 0 : index
    %c0_1 = arith.constant 0 : index
    %3 = vector.load %arg4[%c0, %c0_1] : memref<128x128xbf16, #tpu.memory_space<vmem>>, vector<128x128xbf16>
    %c0_2 = arith.constant 0 : index
    %c0_3 = arith.constant 0 : index
    %4 = vector.load %arg13[%c0_2, %c0_3] : memref<128x128xf32, #tpu.memory_space<vmem>>, vector<128x128xf32>
    %c0_4 = arith.constant 0 : index
    %c0_5 = arith.constant 0 : index
    %5 = vector.load %arg2[%c0_4, %c0_5] : memref<128x128xbf16, #tpu.memory_space<vmem>>, vector<128x128xbf16>
    %cst = arith.constant dense<0.000000e+00> : vector<128x128xf32>
    %6 = tpu.matmul %5, %3, %cst {dimension_numbers = #tpu.dot_dimension_numbers<[1], [0], [0], [1], [0, 0, 1, 1], [], []>} : vector<128x128xbf16>, vector<128x128xbf16>, vector<128x128xf32> -> vector<128x128xf32>
    %7 = arith.addf %4, %6 : vector<128x128xf32>
    %c0_6 = arith.constant 0 : index
    %c0_7 = arith.constant 0 : index
    %8 = vector.load %arg13[%c0_6, %c0_7] : memref<128x128xf32, #tpu.memory_space<vmem>>, vector<128x128xf32>
    tpu.vector_store %arg13[%c0_6, %c0_7], %7 {strides = array<i32>} : memref<128x128xf32, #tpu.memory_space<vmem>>, vector<128x128xf32>,
    %c0_8 = arith.constant 0 : index
    %c0_9 = arith.constant 0 : index
    %9 = vector.load %arg14[%c0_8, %c0_9] : memref<128x128xf32, #tpu.memory_space<vmem>>, vector<128x128xf32>
    %c0_10 = arith.constant 0 : index
    %c0_11 = arith.constant 0 : index
    %10 = vector.load %arg3[%c0_10, %c0_11] : memref<128x128xbf16, #tpu.memory_space<vmem>>, vector<128x128xbf16>
    %cst_12 = arith.constant dense<0.000000e+00> : vector<128x128xf32>
    %11 = tpu.matmul %10, %3, %cst_12 {dimension_numbers = #tpu.dot_dimension_numbers<[1], [0], [0], [1], [0, 0, 1, 1], [], []>} : vector<128x128xbf16>, vector<128x128xbf16>, vector<128x128xf32> -> vector<128x128xf32>
    %12 = arith.addf %9, %11 : vector<128x128xf32>
    %c0_13 = arith.constant 0 : index
    %c0_14 = arith.constant 0 : index
    %13 = vector.load %arg14[%c0_13, %c0_14] : memref<128x128xf32, #tpu.memory_space<vmem>>, vector<128x128xf32>
    tpu.vector_store %arg14[%c0_13, %c0_14], %12 {strides = array<i32>} : memref<128x128xf32, #tpu.memory_space<vmem>>, vector<128x128xf32>,
    %c1_i32 = arith.constant 1 : i32
    %14 = arith.cmpi eq, %arg1, %c1_i32 : i32
    %15 = arith.extui %14 : i1 to i32
    %c0_i32_15 = arith.constant 0 : i32
    %16 = arith.cmpi ne, %15, %c0_i32_15 : i32
    scf.if %16 {
      %c0_16 = arith.constant 0 : index
      %c0_17 = arith.constant 0 : index
      %17 = vector.load %arg13[%c0_16, %c0_17] : memref<128x128xf32, #tpu.memory_space<vmem>>, vector<128x128xf32>
      %18 = arith.truncf %17 : vector<128x128xf32> to vector<128x128xbf16>
      %c0_18 = arith.constant 0 : index
      %c0_19 = arith.constant 0 : index
      %19 = vector.load %arg14[%c0_18, %c0_19] : memref<128x128xf32, #tpu.memory_space<vmem>>, vector<128x128xf32>
      %20 = arith.truncf %19 : vector<128x128xf32> to vector<128x128xbf16>
      %c0_20 = arith.constant 0 : index
      %c0_21 = arith.constant 0 : index
      %21 = vector.load %arg7[%c0_20, %c0_21] : memref<128x128xbf16, #tpu.memory_space<vmem>>, vector<128x128xbf16>
      %cst_22 = arith.constant dense<0.000000e+00> : vector<128x128xf32>
      %22 = tpu.matmul %20, %21, %cst_22 {dimension_numbers = #tpu.dot_dimension_numbers<[1], [0], [0], [1], [0, 0, 1, 1], [], []>} : vector<128x128xbf16>, vector<128x128xbf16>, vector<128x128xf32> -> vector<128x128xf32>
      %cst_23 = arith.constant 5.000000e-01 : f32
      %23 = vector.broadcast %cst_23 : f32 to vector<128x128xf32>
      %24 = arith.mulf %23, %22 : vector<128x128xf32>
      %c0_24 = arith.constant 0 : index
      %c0_25 = arith.constant 0 : index
      %25 = vector.load %arg6[%c0_24, %c0_25] : memref<128x128xbf16, #tpu.memory_space<vmem>>, vector<128x128xbf16>
      %cst_26 = arith.constant dense<0.000000e+00> : vector<128x128xf32>
      %26 = tpu.matmul %18, %25, %cst_26 {dimension_numbers = #tpu.dot_dimension_numbers<[1], [0], [0], [1], [0, 0, 1, 1], [], []>} : vector<128x128xbf16>, vector<128x128xbf16>, vector<128x128xf32> -> vector<128x128xf32>
      %cst_27 = arith.constant 5.000000e-01 : f32
      %27 = vector.broadcast %cst_27 : f32 to vector<128x128xf32>
      %28 = arith.mulf %27, %26 : vector<128x128xf32>
      %29 = arith.addf %24, %28 : vector<128x128xf32>
      %c0_28 = arith.constant 0 : index
      %c0_29 = arith.constant 0 : index
      %30 = vector.load %arg5[%c0_28, %c0_29] : memref<128x128xbf16, #tpu.memory_space<vmem>>, vector<128x128xbf16>
      %c0_30 = arith.constant 0 : index
      %c0_31 = arith.constant 0 : index
      %31 = vector.load %arg8[%c0_30, %c0_31] : memref<128x128xbf16, #tpu.memory_space<vmem>>, vector<128x128xbf16>
      %cst_32 = arith.constant dense<0.000000e+00> : vector<128x128xf32>
      %32 = tpu.matmul %30, %31, %cst_32 {dimension_numbers = #tpu.dot_dimension_numbers<[1], [0], [0], [1], [0, 0, 1, 1], [], []>} : vector<128x128xbf16>, vector<128x128xbf16>, vector<128x128xf32> -> vector<128x128xf32>
      %33 = arith.addf %29, %32 : vector<128x128xf32>
      %c0_33 = arith.constant 0 : index
      %c0_34 = arith.constant 0 : index
      %34 = vector.load %arg9[%c0_33, %c0_34] : memref<1x128xf32, #tpu.memory_space<vmem>>, vector<1x128xf32>
      %35 = vector.broadcast %34 : vector<1x128xf32> to vector<128x128xf32>
      %36 = arith.addf %33, %35 : vector<128x128xf32>
      %37 = arith.truncf %36 : vector<128x128xf32> to vector<128x128xbf16>
      %c0_35 = arith.constant 0 : index
      %c0_36 = arith.constant 0 : index
      %38 = vector.load %arg10[%c0_35, %c0_36] : memref<128x128xbf16, #tpu.memory_space<vmem>>, vector<128x128xbf16>
      %cst_37 = arith.constant dense<0.000000e+00> : vector<128x128xf32>
      %39 = tpu.matmul %37, %38, %cst_37 {dimension_numbers = #tpu.dot_dimension_numbers<[1], [0], [0], [1], [0, 0, 1, 1], [], []>} : vector<128x128xbf16>, vector<128x128xbf16>, vector<128x128xf32> -> vector<128x128xf32>
      %c0_38 = arith.constant 0 : index
      %c0_39 = arith.constant 0 : index
      %40 = vector.load %arg11[%c0_38, %c0_39] : memref<1x128xf32, #tpu.memory_space<vmem>>, vector<1x128xf32>
      %41 = vector.broadcast %40 : vector<1x128xf32> to vector<128x128xf32>
      %42 = arith.addf %39, %41 : vector<128x128xf32>
      %43 = arith.truncf %42 : vector<128x128xf32> to vector<128x128xbf16>
      %c0_40 = arith.constant 0 : index
      %c0_41 = arith.constant 0 : index
      %44 = vector.load %arg12[%c0_40, %c0_41] : memref<128x128xbf16, #tpu.memory_space<vmem>>, vector<128x128xbf16>
      tpu.vector_store %arg12[%c0_40, %c0_41], %43 {strides = array<i32>} : memref<128x128xbf16, #tpu.memory_space<vmem>>, vector<128x128xbf16>,
    } else {
    }
    return
  }
  func.func @transform_0(%arg0: i32, %arg1: i32) -> (i32, i32) {
    %c0_i32 = arith.constant 0 : i32
    return %arg0, %arg1 : i32, i32
  }
  func.func @transform_1(%arg0: i32, %arg1: i32) -> (i32, i32) {
    %c0_i32 = arith.constant 0 : i32
    return %arg0, %arg1 : i32, i32
  }
  func.func @transform_2(%arg0: i32, %arg1: i32) -> (i32, i32) {
    %c0_i32 = arith.constant 0 : i32
    %c0_i32_0 = arith.constant 0 : i32
    return %arg1, %c0_i32 : i32, i32
  }
  func.func @transform_3(%arg0: i32, %arg1: i32) -> (i32, i32) {
    %c0_i32 = arith.constant 0 : i32
    %c0_i32_0 = arith.constant 0 : i32
    return %arg0, %c0_i32 : i32, i32
  }
  func.func @transform_4(%arg0: i32, %arg1: i32) -> (i32, i32) {
    %c0_i32 = arith.constant 0 : i32
    %c0_i32_0 = arith.constant 0 : i32
    %c0_i32_1 = arith.constant 0 : i32
    return %c0_i32, %c0_i32_0 : i32, i32
  }
  func.func @transform_5(%arg0: i32, %arg1: i32) -> (i32, i32) {
    %c0_i32 = arith.constant 0 : i32
    %c0_i32_0 = arith.constant 0 : i32
    %c0_i32_1 = arith.constant 0 : i32
    return %c0_i32, %c0_i32_0 : i32, i32
  }
  func.func @transform_6(%arg0: i32, %arg1: i32) -> (i32, i32) {
    %c0_i32 = arith.constant 0 : i32
    %c0_i32_0 = arith.constant 0 : i32
    %c0_i32_1 = arith.constant 0 : i32
    return %c0_i32, %c0_i32_0 : i32, i32
  }
  func.func @transform_7(%arg0: i32, %arg1: i32) -> (i32, i32) {
    %c0_i32 = arith.constant 0 : i32
    %c0_i32_0 = arith.constant 0 : i32
    %c0_i32_1 = arith.constant 0 : i32
    return %c0_i32, %c0_i32_0 : i32, i32
  }
  func.func @transform_8(%arg0: i32, %arg1: i32) -> (i32, i32) {
    %c0_i32 = arith.constant 0 : i32
    %c0_i32_0 = arith.constant 0 : i32
    %c0_i32_1 = arith.constant 0 : i32
    return %c0_i32, %c0_i32_0 : i32, i32
  }
  func.func @transform_9(%arg0: i32, %arg1: i32) -> (i32, i32) {
    %c0_i32 = arith.constant 0 : i32
    %c0_i32_0 = arith.constant 0 : i32
    %c0_i32_1 = arith.constant 0 : i32
    return %c0_i32, %c0_i32_0 : i32, i32
  }
  func.func @transform_10(%arg0: i32, %arg1: i32) -> (i32, i32) {
    %c0_i32 = arith.constant 0 : i32
    %c0_i32_0 = arith.constant 0 : i32
    return %arg0, %c0_i32 : i32, i32
  }
}

</mosaic_0001>

<llo_original>
// kernel: dirgnn_forward.3
$region0: #{dirgnn_forward.3}
  #allocation0 [shape = 'u32[]', space=smem, size = 0x4, offset = 0x4, fixed_abs, tag = 'smem constant byte address 0x4 - core index']
  #allocation1 [shape = 'u32[72,128]{1,0:T(1,128)}', space=vmem, size = 0x9000, scoped, tag = 'internal scratch']
  %s0 = inlined_call_operand.hbm [shape: bf16[256,128], index: 0, kind: input, shape index: {}]
  %s1 = inlined_call_operand.hbm [shape: bf16[128,128], index: 1, kind: input, shape index: {}]
  %s2 = inlined_call_operand.hbm [shape: f32[1,128], index: 2, kind: input, shape index: {}]
  %s3 = inlined_call_operand.vmem [shape: bf16[256,128], index: 3, kind: output, shape index: {}]
  %s4 = sld [smem:[#allocation0]]
  $region57: #{dirgnn_forward.3} parent=0
    _
  %s6 = ssub.s32 1, %s4
  %s7 = scalar_select 0, %s6, %s4
  $region1: #{dirgnn_forward.3} parent=0
    #allocation2 [shape = 'u8[65536]{0}', space=vmem, size = 0x10000, scoped, tag = 'input window, operand 0']
    #allocation3 [shape = 's32[2]{0}', space=sflag, size = 0x8, scoped, tag = 'scoped memory for dirgnn_forward.3']
    #allocation4 [shape = 'u8[32768]{0}', space=vmem, size = 0x8000, scoped, tag = 'input window, operand 1, single buffered']
    #allocation5 [shape = 's32[1]{0}', space=sflag, size = 0x4, scoped, tag = 'scoped memory for dirgnn_forward.3']
    #allocation6 [shape = 'u8[512]{0}', space=vmem, size = 0x400, scoped, tag = 'input window, operand 2, single buffered']
    %8 = vsyncpa [#allocation3], 0
    %s9 = scalar_lea.sflag [#allocation3], 1
    %10 = vsyncpa %s9, 0
    %11 = vsyncpa [#allocation5], 0
    loop: start=0, step=1, limit=4
    $region2: #{dirgnn_forward.3} parent=1 // loop_pre_header
      _
    $region3: #{dirgnn_forward.3} parent=1 // loop_header
      %s13 = sphi 0, %s17
      %p14 = scmp.ge.s32.totalorder %s13, 4
      %s23 = sphi 0, %s25
      %s26 = sphi 0, %s23
      %s27 = sphi 0, %s26
      %s43 = sphi 0, %s27
      %s47 = sphi 0, %s47
      %s49 = sphi 0, %s47
      %s50 = sphi 0, %s49
      %s64 = sphi 0, %s50
      %s68 = sphi 0, %s68
      %s70 = sphi 0, %s68
      %s71 = sphi 0, %s70
      %s85 = sphi 0, %s71
      %s91 = sphi 0, %s93
      %s94 = sphi 0, %s91
      %s95 = sphi 0, %s94
      %s111 = sphi 0, %s95
    $region4: #{dirgnn_forward.3} parent=1 // loop_header_branch
      %16 = sbr.rel (%p14) target = $region8
    $region5: #{dirgnn_forward.3} parent=1 // loop_body
      %s18 = ssub.s32 %s13, 1
      %s19 = ssub.s32 %s13, 2
      %s20 = sadd.s32 %s13, 1
      %s21 = ssub.s32 %s13, %s20
      %p22 = scmp.eq.s32.totalorder %s21, 0
      %s24 = sadd.s32 %s23, 1
      %s25 = scalar_select %p22, %s23, %s24
      %p28 = pneg %p22
      %p29 = scmp.eq.s32.totalorder %s13, 1
      %p30 = por %p28, %p29
      %p31 = scmp.ne.s32.totalorder %s23, %s26
      %p32 = scmp.eq.s32.totalorder %s13, 0
      %p33 = por %p31, %p32
      %p34 = scmp.ne.s32.totalorder %s23, %s26
      %p35 = scmp.eq.s32.totalorder %s18, 1
      %p36 = por %p34, %p35
      %p37 = scmp.ne.s32.totalorder %s26, %s27
      %p38 = scmp.eq.s32.totalorder %s18, 0
      %p39 = por %p37, %p38
      %p40 = scmp.ne.s32.totalorder %s26, %s27
      %p41 = scmp.eq.s32.totalorder %s19, 1
      %p42 = por %p40, %p41
      %p44 = scmp.ne.s32.totalorder %s27, %s43
      %p45 = scmp.eq.s32.totalorder %s19, 0
      %p46 = por %p44, %p45
      %s48 = sadd.s32 %s47, 1
      %p51 = scmp.eq.s32.totalorder %s13, 1
      %p52 = scmp.ne.s32.totalorder %s47, %s49
      %p53 = scmp.eq.s32.totalorder %s13, 0
      %p54 = por %p52, %p53
      %p55 = scmp.ne.s32.totalorder %s47, %s49
      %p56 = scmp.eq.s32.totalorder %s18, 1
      %p57 = por %p55, %p56
      %p58 = scmp.ne.s32.totalorder %s49, %s50
      %p59 = scmp.eq.s32.totalorder %s18, 0
      %p60 = por %p58, %p59
      %p61 = scmp.ne.s32.totalorder %s49, %s50
      %p62 = scmp.eq.s32.totalorder %s19, 1
      %p63 = por %p61, %p62
      %p65 = scmp.ne.s32.totalorder %s50, %s64
      %p66 = scmp.eq.s32.totalorder %s19, 0
      %p67 = por %p65, %p66
      %s69 = sadd.s32 %s68, 1
      %p72 = scmp.eq.s32.totalorder %s13, 1
      %p73 = scmp.ne.s32.totalorder %s68, %s70
      %p74 = scmp.eq.s32.totalorder %s13, 0
      %p75 = por %p73, %p74
      %p76 = scmp.ne.s32.totalorder %s68, %s70
      %p77 = scmp.eq.s32.totalorder %s18, 1
      %p78 = por %p76, %p77
      %p79 = scmp.ne.s32.totalorder %s70, %s71
      %p80 = scmp.eq.s32.totalorder %s18, 0
      %p81 = por %p79, %p80
      %p82 = scmp.ne.s32.totalorder %s70, %s71
      %p83 = scmp.eq.s32.totalorder %s19, 1
      %p84 = por %p82, %p83
      %p86 = scmp.ne.s32.totalorder %s71, %s85
      %p87 = scmp.eq.s32.totalorder %s19, 0
      %p88 = por %p86, %p87
      %s89 = ssub.s32 %s13, %s20
      %p90 = scmp.eq.s32.totalorder %s89, 0
      %s92 = sadd.s32 %s91, 1
      %s93 = scalar_select %p90, %s91, %s92
      %p96 = pneg %p90
      %p97 = scmp.eq.s32.totalorder %s13, 1
      %p98 = por %p96, %p97
      %p99 = scmp.ne.s32.totalorder %s91, %s94
      %p100 = scmp.eq.s32.totalorder %s13, 0
      %p101 = por %p99, %p100
      %p102 = scmp.ne.s32.totalorder %s91, %s94
      %p103 = scmp.eq.s32.totalorder %s18, 1
      %p104 = por %p102, %p103
      %p105 = scmp.ne.s32.totalorder %s94, %s95
      %p106 = scmp.eq.s32.totalorder %s18, 0
      %p107 = por %p105, %p106
      %p108 = scmp.ne.s32.totalorder %s94, %s95
      %p109 = scmp.eq.s32.totalorder %s19, 1
      %p110 = por %p108, %p109
      %p112 = scmp.ne.s32.totalorder %s95, %s111
      %p113 = scmp.eq.s32.totalorder %s19, 0
      %p114 = por %p112, %p113
      %p115 = scmp.le.s32.totalorder 1, %s13
      %p116 = scmp.lt.s32.totalorder %s13, 3
      %p117 = pnand %p115, %p116
      %p118 = pneg %p117
      // Predicated region
      $region9: #{dirgnn_forward.3} parent=5 // pred_check
        _
      $region10: #{dirgnn_forward.3} parent=5 // pred_check_branch
        %120 = sbr.rel (%p117) target = $region12
      $region11: #{dirgnn_forward.3} parent=5 // pred_region
        %s121 = ssub.s32 %s13, 1
        // Predicated region
        $region13: #{dirgnn_forward.3} parent=11 // pred_check
          %p122 = pneg %p60
        $region14: #{dirgnn_forward.3} parent=11 // pred_check_branch
          %124 = sbr.rel (%p122) target = $region16
        $region15: #{dirgnn_forward.3} parent=11 // pred_region
          %126 = vsyncadd [#allocation5], 0
          %s127 = sshll.u32 %s1, 4
          %s128 = int_to_ptr.hbm [resolvable:$true] %s127
          %s129 = sshll.u32 [#allocation4], 4
          %s130 = int_to_ptr.vmem [resolvable:$true] %s129
          %135 = dma.hbm_to_vmem [thread:$0]  %s128, 1024, %s130, [#allocation5], 64, 64, 4
        $region16: #{dirgnn_forward.3} parent=11 // pred_fallthru
          _
        // Predicated region
        $region17: #{dirgnn_forward.3} parent=11 // pred_check
          %p136 = pneg %p81
        $region18: #{dirgnn_forward.3} parent=11 // pred_check_branch
          %138 = sbr.rel (%p136) target = $region20
        $region19: #{dirgnn_forward.3} parent=11 // pred_region
          %140 = vsyncadd [#allocation5], 0
          %s142 = sshll.u32 %s2, 4
          %s143 = int_to_ptr.hbm [resolvable:$true] %s142
          %s144 = sshll.u32 [#allocation6], 4
          %s145 = int_to_ptr.vmem [resolvable:$true] %s144
          %147 = dma.hbm_to_vmem [thread:$0]  %s143, 16, %s145, [#allocation5]
        $region20: #{dirgnn_forward.3} parent=11 // pred_fallthru
          _
      $region12: #{dirgnn_forward.3} parent=5 // pred_fallthru
        _
      %p148 = scmp.lt.s32.totalorder %s13, 2
      // Predicated region
      $region21: #{dirgnn_forward.3} parent=5 // pred_check
        %p149 = pneg %p148
      $region22: #{dirgnn_forward.3} parent=5 // pred_check_branch
        %151 = sbr.rel (%p149) target = $region24
      $region23: #{dirgnn_forward.3} parent=5 // pred_region
        // Predicated region
        $region25: #{dirgnn_forward.3} parent=23 // pred_check
          %p152 = pneg %p33
        $region26: #{dirgnn_forward.3} parent=23 // pred_check_branch
          %154 = sbr.rel (%p152) target = $region28
        $region27: #{dirgnn_forward.3} parent=23 // pred_region
          %s155 = sand.u32 %s23, 1
          %s156 = scalar_lea.sflag [#allocation3], %s155
          %s157 = sand.u32 %s23, 1
          %s158 = smul.addr %s157, 64
          %s159 = scalar_lea.vmem [#allocation2], %s158
          %s160 = smul.u32 16, %s13
          %162 = vsyncadd %s156, 0
          %s163 = smul.addr %s160, 4
          %s164 = scalar_lea.hbm %s0, %s163
          %s165 = sshll.u32 %s164, 4
          %s166 = int_to_ptr.hbm [resolvable:$true] %s165
          %s167 = sshll.u32 %s159, 4
          %s168 = int_to_ptr.vmem [resolvable:$true] %s167
          %173 = dma.hbm_to_vmem [thread:$0]  %s166, 1024, %s168, %s156, 64, 64, 4
        $region28: #{dirgnn_forward.3} parent=23 // pred_fallthru
          _
      $region24: #{dirgnn_forward.3} parent=5 // pred_fallthru
        _
      %p174 = scmp.le.s32.totalorder 1, %s13
      %p175 = scmp.lt.s32.totalorder %s13, 3
      %p176 = pnand %p174, %p175
      %p177 = pneg %p176
      // Predicated region
      $region29: #{dirgnn_forward.3} parent=5 // pred_check
        _
      $region30: #{dirgnn_forward.3} parent=5 // pred_check_branch
        %179 = sbr.rel (%p176) target = $region32
      $region31: #{dirgnn_forward.3} parent=5 // pred_region
        %s180 = ssub.s32 %s13, 1
        %s181 = sand.u32 %s26, 1
        %s182 = scalar_lea.sflag [#allocation3], %s181
        %s183 = sand.u32 %s26, 1
        %s184 = smul.addr %s183, 64
        %s185 = scalar_lea.vmem [#allocation2], %s184
        // Predicated region
        $region33: #{dirgnn_forward.3} parent=31 // pred_check
          %p186 = pneg %p39
        $region34: #{dirgnn_forward.3} parent=31 // pred_check_branch
          %188 = sbr.rel (%p186) target = $region36
        $region35: #{dirgnn_forward.3} parent=31 // pred_region
          %190 = dma.done %s182, 1024
        $region36: #{dirgnn_forward.3} parent=31 // pred_fallthru
          _
        // Predicated region
        $region37: #{dirgnn_forward.3} parent=31 // pred_check
          %p191 = pneg %p60
        $region38: #{dirgnn_forward.3} parent=31 // pred_check_branch
          %193 = sbr.rel (%p191) target = $region40
        $region39: #{dirgnn_forward.3} parent=31 // pred_region
          %195 = dma.done [#allocation5], 1024
        $region40: #{dirgnn_forward.3} parent=31 // pred_fallthru
          _
        // Predicated region
        $region41: #{dirgnn_forward.3} parent=31 // pred_check
          %p196 = pneg %p81
        $region42: #{dirgnn_forward.3} parent=31 // pred_check_branch
          %198 = sbr.rel (%p196) target = $region44
        $region43: #{dirgnn_forward.3} parent=31 // pred_region
          %200 = dma.done [#allocation5], 16
        $region44: #{dirgnn_forward.3} parent=31 // pred_fallthru
          _
        %s201 = sand.u32 %s26, 1
        %s202 = scalar_lea.sflag [#allocation3], %s201
        %s203 = sand.u32 %s26, 1
        %s204 = smul.addr %s203, 64
        %s205 = scalar_lea.vmem [#allocation2], %s204
        %p206 = pneg %p39
        %p207 = pneg %p36
        %p208 = pneg %p60
        %p209 = pneg %p57
        %p210 = pneg %p81
        %p211 = pneg %p78
        %p212 = pneg %p107
        %p213 = pneg %p104
        %s214 = smul.u32 16, %s18
        %p215 = scmp.lt.s32.totalorder %s214, 31
        %s216 = scalar_select %p215, %s214, 31
        %s217 = smul.addr %s216, 4
        %s218 = scalar_lea.vmem %s3, %s217
        %s219 = smul.u32 16, %s18
        %s220 = smul.u32 16, %s18
        %p221 = scmp.lt.s32.totalorder %s220, 31
        %s222 = scalar_select %p221, %s220, 31
        %s223 = smul.addr %s222, 4
        %s224 = scalar_lea.vmem %s3, %s223
        %s225 = smul.u32 16, %s18
        %v226 = vld [vmem:[%s185] sm:$0xf]
        %v227 = vld [vmem:[%s185 + $0x4] sm:$0xf]
        %v228 = vld [vmem:[%s185 + $0x8] sm:$0xf]
        %v229 = vld [vmem:[%s185 + $0xc] sm:$0xf]
        %v230 = vld [vmem:[%s185 + $0x10] sm:$0xf]
        %v231 = vld [vmem:[%s185 + $0x14] sm:$0xf]
        %v232 = vld [vmem:[%s185 + $0x18] sm:$0xf]
        %v233 = vld [vmem:[%s185 + $0x1c] sm:$0xf]
        %v234 = vld [vmem:[%s185 + $0x20] sm:$0xf]
        %v235 = vld [vmem:[%s185 + $0x24] sm:$0xf]
        %v236 = vld [vmem:[%s185 + $0x28] sm:$0xf]
        %v237 = vld [vmem:[%s185 + $0x2c] sm:$0xf]
        %v238 = vld [vmem:[%s185 + $0x30] sm:$0xf]
        %v239 = vld [vmem:[%s185 + $0x34] sm:$0xf]
        %v240 = vld [vmem:[%s185 + $0x38] sm:$0xf]
        %v241 = vld [vmem:[%s185 + $0x3c] sm:$0xf]
        %v242 = vld [vmem:[#allocation4] sm:$0xf]
        %v243 = vld [vmem:[#allocation4 + $0x4] sm:$0xf]
        %v244 = vld [vmem:[#allocation4 + $0x8] sm:$0xf]
        %v245 = vld [vmem:[#allocation4 + $0xc] sm:$0xf]
        %v246 = vld [vmem:[#allocation4 + $0x10] sm:$0xf]
        %v247 = vld [vmem:[#allocation4 + $0x14] sm:$0xf]
        %v248 = vld [vmem:[#allocation4 + $0x18] sm:$0xf]
        %v249 = vld [vmem:[#allocation4 + $0x1c] sm:$0xf]
        %v250 = vld [vmem:[#allocation4 + $0x20] sm:$0xf]
        %v251 = vld [vmem:[#allocation4 + $0x24] sm:$0xf]
        %v252 = vld [vmem:[#allocation4 + $0x28] sm:$0xf]
        %v253 = vld [vmem:[#allocation4 + $0x2c] sm:$0xf]
        %v254 = vld [vmem:[#allocation4 + $0x30] sm:$0xf]
        %v255 = vld [vmem:[#allocation4 + $0x34] sm:$0xf]
        %v256 = vld [vmem:[#allocation4 + $0x38] sm:$0xf]
        %v257 = vld [vmem:[#allocation4 + $0x3c] sm:$0xf]
        %v258 = vld [vmem:[#allocation6] sm:$0x1]
        %v260 = vperm.slane %v258, 0
        %v278 = vunpack.c.l.b16 %v226
        %v279 = vunpack.c.l.b16 %v227
        %v280 = vunpack.c.l.b16 %v228
        %v281 = vunpack.c.l.b16 %v229
        %v282 = vunpack.c.l.b16 %v230
        %v283 = vunpack.c.l.b16 %v231
        %v284 = vunpack.c.l.b16 %v232
        %v285 = vunpack.c.l.b16 %v233
        %v286 = vunpack.c.l.b16 %v234
        %v287 = vunpack.c.l.b16 %v235
        %v288 = vunpack.c.l.b16 %v236
        %v289 = vunpack.c.l.b16 %v237
        %v290 = vunpack.c.l.b16 %v238
        %v291 = vunpack.c.l.b16 %v239
        %v292 = vunpack.c.l.b16 %v240
        %v293 = vunpack.c.l.b16 %v241
        %v294 = vpack.c.b16 %v279, %v278
        %v295 = vpack.c.b16 %v281, %v280
        %v296 = vpack.c.b16 %v283, %v282
        %v297 = vpack.c.b16 %v285, %v284
        %v298 = vpack.c.b16 %v287, %v286
        %v299 = vpack.c.b16 %v289, %v288
        %v300 = vpack.c.b16 %v291, %v290
        %v301 = vpack.c.b16 %v293, %v292
        %v326 = vunpack.c.l.b16 %v242
        %v327 = vunpack.c.l.b16 %v243
        %v328 = vunpack.c.l.b16 %v244
        %v329 = vunpack.c.l.b16 %v245
        %v330 = vunpack.c.l.b16 %v246
        %v331 = vunpack.c.l.b16 %v247
        %v332 = vunpack.c.l.b16 %v248
        %v333 = vunpack.c.l.b16 %v249
        %v334 = vunpack.c.l.b16 %v250
        %v335 = vunpack.c.l.b16 %v251
        %v336 = vunpack.c.l.b16 %v252
        %v337 = vunpack.c.l.b16 %v253
        %v338 = vunpack.c.l.b16 %v254
        %v339 = vunpack.c.l.b16 %v255
        %v340 = vunpack.c.l.b16 %v256
        %v341 = vunpack.c.l.b16 %v257
        %v342 = vpack.c.b16 %v327, %v326
        %v343 = vpack.c.b16 %v329, %v328
        %v344 = vpack.c.b16 %v331, %v330
        %v345 = vpack.c.b16 %v333, %v332
        %v346 = vpack.c.b16 %v335, %v334
        %v347 = vpack.c.b16 %v337, %v336
        %v348 = vpack.c.b16 %v339, %v338
        %v349 = vpack.c.b16 %v341, %v340
        %358 = vmatpush.bf16.msra.mxu0 %v349
        %359 = vmatpush.bf16.msra.mxu0 %v348
        %360 = vmatpush.bf16.msra.mxu0 %v347
        %361 = vmatpush.bf16.msra.mxu0 %v346
        %362 = vmatpush.bf16.msra.mxu0 %v345
        %363 = vmatpush.bf16.msra.mxu0 %v344
        %364 = vmatpush.bf16.msra.mxu0 %v343
        %365 = vmatpush.bf16.msra.mxu0 %v342
        %366 = vmatmul.bf16.gmra.mxu0 %v294
        %v367 = vpop.f32.mrf.mxu0
        %v368 = vadd.f32 %v260, %v367
        %v369 = vpop.f32.mrf.mxu0
        %v370 = vadd.f32 %v260, %v369
        %371 = vmatmul.bf16.gmra.mxu0 %v295
        %v372 = vpop.f32.mrf.mxu0
        %v373 = vadd.f32 %v260, %v372
        %v374 = vpop.f32.mrf.mxu0
        %v375 = vadd.f32 %v260, %v374
        %376 = vmatmul.bf16.gmra.mxu0 %v296
        %v377 = vpop.f32.mrf.mxu0
        %v378 = vadd.f32 %v260, %v377
        %v379 = vpop.f32.mrf.mxu0
        %v380 = vadd.f32 %v260, %v379
        %381 = vmatmul.bf16.gmra.mxu0 %v297
        %v382 = vpop.f32.mrf.mxu0
        %v383 = vadd.f32 %v260, %v382
        %v384 = vpop.f32.mrf.mxu0
        %v385 = vadd.f32 %v260, %v384
        %386 = vmatmul.bf16.gmra.mxu0 %v298
        %v387 = vpop.f32.mrf.mxu0
        %v388 = vadd.f32 %v260, %v387
        %v389 = vpop.f32.mrf.mxu0
        %v390 = vadd.f32 %v260, %v389
        %391 = vmatmul.bf16.gmra.mxu0 %v299
        %v392 = vpop.f32.mrf.mxu0
        %v393 = vadd.f32 %v260, %v392
        %v394 = vpop.f32.mrf.mxu0
        %v395 = vadd.f32 %v260, %v394
        %396 = vmatmul.bf16.gmra.mxu0 %v300
        %v397 = vpop.f32.mrf.mxu0
        %v398 = vadd.f32 %v260, %v397
        %v399 = vpop.f32.mrf.mxu0
        %v400 = vadd.f32 %v260, %v399
        %401 = vmatmul.bf16.gmra.mxu0 %v301
        %v402 = vpop.f32.mrf.mxu0
        %v403 = vadd.f32 %v260, %v402
        %v404 = vpop.f32.mrf.mxu0
        %v405 = vadd.f32 %v260, %v404
        %406 = vdwg.mxu0
        %v407 = vmax.f32 %v368, 0.0
        %v408 = vmax.f32 %v370, 0.0
        %v409 = vmax.f32 %v373, 0.0
        %v410 = vmax.f32 %v375, 0.0
        %v411 = vmax.f32 %v378, 0.0
        %v412 = vmax.f32 %v380, 0.0
        %v413 = vmax.f32 %v383, 0.0
        %v414 = vmax.f32 %v385, 0.0
        %v415 = vmax.f32 %v388, 0.0
        %v416 = vmax.f32 %v390, 0.0
        %v417 = vmax.f32 %v393, 0.0
        %v418 = vmax.f32 %v395, 0.0
        %v419 = vmax.f32 %v398, 0.0
        %v420 = vmax.f32 %v400, 0.0
        %v421 = vmax.f32 %v403, 0.0
        %v422 = vmax.f32 %v405, 0.0
        %v423 = vpack.c.bf16 %v407, %v407
        %v424 = vpack.c.bf16 %v408, %v408
        %v425 = vpack.c.bf16 %v409, %v409
        %v426 = vpack.c.bf16 %v410, %v410
        %v427 = vpack.c.bf16 %v411, %v411
        %v428 = vpack.c.bf16 %v412, %v412
        %v429 = vpack.c.bf16 %v413, %v413
        %v430 = vpack.c.bf16 %v414, %v414
        %v431 = vpack.c.bf16 %v415, %v415
        %v432 = vpack.c.bf16 %v416, %v416
        %v433 = vpack.c.bf16 %v417, %v417
        %v434 = vpack.c.bf16 %v418, %v418
        %v435 = vpack.c.bf16 %v419, %v419
        %v436 = vpack.c.bf16 %v420, %v420
        %v437 = vpack.c.bf16 %v421, %v421
        %v438 = vpack.c.bf16 %v422, %v422
        %439 = vst [vmem:[%s224] sm:$0xf] %v423
        %440 = vst [vmem:[%s224 + $0x4] sm:$0xf] %v424
        %441 = vst [vmem:[%s224 + $0x8] sm:$0xf] %v425
        %442 = vst [vmem:[%s224 + $0xc] sm:$0xf] %v426
        %443 = vst [vmem:[%s224 + $0x10] sm:$0xf] %v427
        %444 = vst [vmem:[%s224 + $0x14] sm:$0xf] %v428
        %445 = vst [vmem:[%s224 + $0x18] sm:$0xf] %v429
        %446 = vst [vmem:[%s224 + $0x1c] sm:$0xf] %v430
        %447 = vst [vmem:[%s224 + $0x20] sm:$0xf] %v431
        %448 = vst [vmem:[%s224 + $0x24] sm:$0xf] %v432
        %449 = vst [vmem:[%s224 + $0x28] sm:$0xf] %v433
        %450 = vst [vmem:[%s224 + $0x2c] sm:$0xf] %v434
        %451 = vst [vmem:[%s224 + $0x30] sm:$0xf] %v435
        %452 = vst [vmem:[%s224 + $0x34] sm:$0xf] %v436
        %453 = vst [vmem:[%s224 + $0x38] sm:$0xf] %v437
        %454 = vst [vmem:[%s224 + $0x3c] sm:$0xf] %v438
        %s455 = smul.u32 16, %s18
        %p456 = scmp.lt.s32.totalorder %s455, 31
        %s457 = scalar_select %p456, %s455, 31
        %s458 = smul.addr %s457, 4
        %s459 = scalar_lea.vmem %s3, %s458
        // Predicated region
        $region45: #{dirgnn_forward.3} parent=31 // pred_check
          %p460 = pneg %p104
        $region46: #{dirgnn_forward.3} parent=31 // pred_check_branch
          %462 = sbr.rel (%p460) target = $region48
        $region47: #{dirgnn_forward.3} parent=31 // pred_region
          %s463 = smul.u32 16, %s18
        $region48: #{dirgnn_forward.3} parent=31 // pred_fallthru
          _
      $region32: #{dirgnn_forward.3} parent=5 // pred_fallthru
        _
      %p464 = scmp.le.s32.totalorder 2, %s13
      // Predicated region
      $region49: #{dirgnn_forward.3} parent=5 // pred_check
        %p465 = pneg %p464
      $region50: #{dirgnn_forward.3} parent=5 // pred_check_branch
        %467 = sbr.rel (%p465) target = $region52
      $region51: #{dirgnn_forward.3} parent=5 // pred_region
        %s468 = ssub.s32 %s13, 2
        // Predicated region
        $region53: #{dirgnn_forward.3} parent=51 // pred_check
          %p469 = pneg %p110
        $region54: #{dirgnn_forward.3} parent=51 // pred_check_branch
          %471 = sbr.rel (%p469) target = $region56
        $region55: #{dirgnn_forward.3} parent=51 // pred_region
          %s472 = smul.u32 16, %s19
          %p473 = scmp.lt.s32.totalorder %s472, 31
          %s474 = scalar_select %p473, %s472, 31
          %s475 = smul.addr %s474, 4
          %s476 = scalar_lea.vmem %s3, %s475
        $region56: #{dirgnn_forward.3} parent=51 // pred_fallthru
          _
      $region52: #{dirgnn_forward.3} parent=5 // pred_fallthru
        _
    $region6: #{dirgnn_forward.3} parent=1 // loop_footer
      %s17 = sadd.s32 1, %s13
    $region7: #{dirgnn_forward.3} parent=1 // loop_footer_branch
      %12 = sbr.rel target = $region3
    $region8: #{dirgnn_forward.3} parent=1 // loop_exit
      _
    %477 = vsyncpa [#allocation3], 1
    %s478 = scalar_lea.sflag [#allocation3], 1
    %479 = vsyncpa %s478, 1
    %480 = vsyncpa [#allocation5], 1

// kernel: dirgnn_forward.4
$region0: #{dirgnn_forward.4}
  #allocation0 [shape = 'u32[]', space=smem, size = 0x4, offset = 0x4, fixed_abs, tag = 'smem constant byte address 0x4 - core index']
  #allocation1 [shape = 'u32[72,128]{1,0:T(1,128)}', space=vmem, size = 0x9000, scoped, tag = 'internal scratch']
  #allocation2 [shape = 'f32[128,128]{1,0:T(8,128)}', space=vmem, size = 0x10000, scoped, tag = 'scratch operand']
  #allocation3 [shape = 'f32[128,128]{1,0:T(8,128)}', space=vmem, size = 0x10000, scoped, tag = 'scratch operand']
  %s0 = inlined_call_operand.hbm [shape: bf16[256,256], index: 0, kind: input, shape index: {}]
  %s1 = inlined_call_operand.hbm [shape: bf16[256,256], index: 1, kind: input, shape index: {}]
  %s2 = inlined_call_operand.vmem [shape: bf16[256,128], index: 2, kind: input, shape index: {}, may-alias: {2,3}]
  %s3 = inlined_call_operand.vmem [shape: bf16[256,128], index: 3, kind: input, shape index: {}, may-alias: {2,3}]
  %s4 = inlined_call_operand.hbm [shape: bf16[128,128], index: 4, kind: input, shape index: {}]
  %s5 = inlined_call_operand.hbm [shape: bf16[128,128], index: 5, kind: input, shape index: {}]
  %s6 = inlined_call_operand.hbm [shape: bf16[128,128], index: 6, kind: input, shape index: {}]
  %s7 = inlined_call_operand.vmem [shape: f32[1,128], index: 7, kind: input, shape index: {}]
  %s8 = inlined_call_operand.hbm [shape: bf16[128,128], index: 8, kind: input, shape index: {}]
  %s9 = inlined_call_operand.hbm [shape: f32[1,128], index: 9, kind: input, shape index: {}]
  %s10 = inlined_call_operand.vmem [shape: bf16[256,128], index: 10, kind: output, shape index: {}]
  %s11 = sld [smem:[#allocation0]]
  $region109: #{dirgnn_forward.4} parent=0
    _
  %s13 = ssub.s32 1, %s11
  %s14 = scalar_select 0, %s13, %s11
  $region1: #{dirgnn_forward.4} parent=0
    #allocation4 [shape = 'u8[65536]{0}', space=vmem, size = 0x10000, scoped, tag = 'input window, operand 0']
    #allocation5 [shape = 's32[2]{0}', space=sflag, size = 0x8, scoped, tag = 'scoped memory for dirgnn_forward.4']
    #allocation6 [shape = 'u8[65536]{0}', space=vmem, size = 0x10000, scoped, tag = 'input window, operand 1']
    #allocation7 [shape = 's32[2]{0}', space=sflag, size = 0x8, scoped, tag = 'scoped memory for dirgnn_forward.4']
    #allocation8 [shape = 'u8[32768]{0}', space=vmem, size = 0x8000, scoped, tag = 'input window, operand 4, single buffered']
    #allocation9 [shape = 'u8[32768]{0}', space=vmem, size = 0x8000, scoped, tag = 'input window, operand 5, single buffered']
    #allocation10 [shape = 's32[1]{0}', space=sflag, size = 0x4, scoped, tag = 'scoped memory for dirgnn_forward.4']
    #allocation11 [shape = 'u8[32768]{0}', space=vmem, size = 0x8000, scoped, tag = 'input window, operand 6, single buffered']
    #allocation12 [shape = 'u8[32768]{0}', space=vmem, size = 0x8000, scoped, tag = 'input window, operand 8, single buffered']
    #allocation13 [shape = 's32[1]{0}', space=sflag, size = 0x4, scoped, tag = 'scoped memory for dirgnn_forward.4']
    #allocation14 [shape = 'u8[512]{0}', space=vmem, size = 0x400, scoped, tag = 'input window, operand 9, single buffered']
    %15 = vsyncpa [#allocation5], 0
    %s16 = scalar_lea.sflag [#allocation5], 1
    %17 = vsyncpa %s16, 0
    %18 = vsyncpa [#allocation7], 0
    %s19 = scalar_lea.sflag [#allocation7], 1
    %20 = vsyncpa %s19, 0
    %21 = vsyncpa [#allocation10], 0
    %22 = vsyncpa [#allocation13], 0
    loop: start=0, step=1, limit=6
    $region2: #{dirgnn_forward.4} parent=1 // loop_pre_header
      _
    $region3: #{dirgnn_forward.4} parent=1 // loop_header
      %s24 = sphi 0, %s28
      %p25 = scmp.ge.s32.totalorder %s24, 6
      %s31 = sphi 0, %s43
      %s32 = sphi 0, %s39
      %s33 = sphi 0, %s31
      %s34 = sphi 0, %s32
      %s35 = sphi 0, %s33
      %s36 = sphi 0, %s34
      %s48 = sphi 0, %s50
      %s51 = sphi 0, %s48
      %s52 = sphi 0, %s51
      %s68 = sphi 0, %s52
      %s76 = sphi 0, %s78
      %s79 = sphi 0, %s76
      %s80 = sphi 0, %s79
      %s96 = sphi 0, %s80
      %s102 = sphi 0, %s104
      %s105 = sphi 0, %s102
      %s106 = sphi 0, %s105
      %s122 = sphi 0, %s106
      %s128 = sphi 0, %s130
      %s131 = sphi 0, %s128
      %s132 = sphi 0, %s131
      %s148 = sphi 0, %s132
      %s152 = sphi 0, %s152
      %s154 = sphi 0, %s152
      %s155 = sphi 0, %s154
      %s169 = sphi 0, %s155
      %s173 = sphi 0, %s173
      %s175 = sphi 0, %s173
      %s176 = sphi 0, %s175
      %s190 = sphi 0, %s176
      %s194 = sphi 0, %s194
      %s196 = sphi 0, %s194
      %s197 = sphi 0, %s196
      %s211 = sphi 0, %s197
      %s215 = sphi 0, %s215
      %s217 = sphi 0, %s215
      %s218 = sphi 0, %s217
      %s232 = sphi 0, %s218
      %s236 = sphi 0, %s236
      %s238 = sphi 0, %s236
      %s239 = sphi 0, %s238
      %s253 = sphi 0, %s239
      %s257 = sphi 0, %s257
      %s259 = sphi 0, %s257
      %s260 = sphi 0, %s259
      %s274 = sphi 0, %s260
      %s280 = sphi 0, %s282
      %s283 = sphi 0, %s280
      %s284 = sphi 0, %s283
      %s300 = sphi 0, %s284
    $region4: #{dirgnn_forward.4} parent=1 // loop_header_branch
      %27 = sbr.rel (%p25) target = $region8
    $region5: #{dirgnn_forward.4} parent=1 // loop_body
      %s29 = ssub.s32 %s24, 1
      %s30 = ssub.s32 %s24, 2
      %s37 = sadd.s32 1, %s32
      %p38 = scmp.ge.s32.totalorder %s37, 2
      %s39 = scalar_select %p38, 0, %s37
      %s40 = sadd.s32 1, %s31
      %s41 = scalar_select %p38, %s40, %s31
      %p42 = scmp.ge.s32.totalorder %s41, 2
      %s43 = scalar_select %p42, 0, %s41
      %s44 = ssub.s32 %s31, %s43
      %s45 = ssub.s32 %s32, %s39
      %s46 = sor.u32 %s44, %s45
      %p47 = scmp.eq.s32.totalorder %s46, 0
      %s49 = sadd.s32 %s48, 1
      %s50 = scalar_select %p47, %s48, %s49
      %p53 = pneg %p47
      %p54 = scmp.eq.s32.totalorder %s24, 3
      %p55 = por %p53, %p54
      %p56 = scmp.ne.s32.totalorder %s48, %s51
      %p57 = scmp.eq.s32.totalorder %s24, 0
      %p58 = por %p56, %p57
      %p59 = scmp.ne.s32.totalorder %s48, %s51
      %p60 = scmp.eq.s32.totalorder %s29, 3
      %p61 = por %p59, %p60
      %p62 = scmp.ne.s32.totalorder %s51, %s52
      %p63 = scmp.eq.s32.totalorder %s29, 0
      %p64 = por %p62, %p63
      %p65 = scmp.ne.s32.totalorder %s51, %s52
      %p66 = scmp.eq.s32.totalorder %s30, 3
      %p67 = por %p65, %p66
      %p69 = scmp.ne.s32.totalorder %s52, %s68
      %p70 = scmp.eq.s32.totalorder %s30, 0
      %p71 = por %p69, %p70
      %s72 = ssub.s32 %s31, %s43
      %s73 = ssub.s32 %s32, %s39
      %s74 = sor.u32 %s72, %s73
      %p75 = scmp.eq.s32.totalorder %s74, 0
      %s77 = sadd.s32 %s76, 1
      %s78 = scalar_select %p75, %s76, %s77
      %p81 = pneg %p75
      %p82 = scmp.eq.s32.totalorder %s24, 3
      %p83 = por %p81, %p82
      %p84 = scmp.ne.s32.totalorder %s76, %s79
      %p85 = scmp.eq.s32.totalorder %s24, 0
      %p86 = por %p84, %p85
      %p87 = scmp.ne.s32.totalorder %s76, %s79
      %p88 = scmp.eq.s32.totalorder %s29, 3
      %p89 = por %p87, %p88
      %p90 = scmp.ne.s32.totalorder %s79, %s80
      %p91 = scmp.eq.s32.totalorder %s29, 0
      %p92 = por %p90, %p91
      %p93 = scmp.ne.s32.totalorder %s79, %s80
      %p94 = scmp.eq.s32.totalorder %s30, 3
      %p95 = por %p93, %p94
      %p97 = scmp.ne.s32.totalorder %s80, %s96
      %p98 = scmp.eq.s32.totalorder %s30, 0
      %p99 = por %p97, %p98
      %s100 = ssub.s32 %s32, %s39
      %p101 = scmp.eq.s32.totalorder %s100, 0
      %s103 = sadd.s32 %s102, 1
      %s104 = scalar_select %p101, %s102, %s103
      %p107 = pneg %p101
      %p108 = scmp.eq.s32.totalorder %s24, 3
      %p109 = por %p107, %p108
      %p110 = scmp.ne.s32.totalorder %s102, %s105
      %p111 = scmp.eq.s32.totalorder %s24, 0
      %p112 = por %p110, %p111
      %p113 = scmp.ne.s32.totalorder %s102, %s105
      %p114 = scmp.eq.s32.totalorder %s29, 3
      %p115 = por %p113, %p114
      %p116 = scmp.ne.s32.totalorder %s105, %s106
      %p117 = scmp.eq.s32.totalorder %s29, 0
      %p118 = por %p116, %p117
      %p119 = scmp.ne.s32.totalorder %s105, %s106
      %p120 = scmp.eq.s32.totalorder %s30, 3
      %p121 = por %p119, %p120
      %p123 = scmp.ne.s32.totalorder %s106, %s122
      %p124 = scmp.eq.s32.totalorder %s30, 0
      %p125 = por %p123, %p124
      %s126 = ssub.s32 %s31, %s43
      %p127 = scmp.eq.s32.totalorder %s126, 0
      %s129 = sadd.s32 %s128, 1
      %s130 = scalar_select %p127, %s128, %s129
      %p133 = pneg %p127
      %p134 = scmp.eq.s32.totalorder %s24, 3
      %p135 = por %p133, %p134
      %p136 = scmp.ne.s32.totalorder %s128, %s131
      %p137 = scmp.eq.s32.totalorder %s24, 0
      %p138 = por %p136, %p137
      %p139 = scmp.ne.s32.totalorder %s128, %s131
      %p140 = scmp.eq.s32.totalorder %s29, 3
      %p141 = por %p139, %p140
      %p142 = scmp.ne.s32.totalorder %s131, %s132
      %p143 = scmp.eq.s32.totalorder %s29, 0
      %p144 = por %p142, %p143
      %p145 = scmp.ne.s32.totalorder %s131, %s132
      %p146 = scmp.eq.s32.totalorder %s30, 3
      %p147 = por %p145, %p146
      %p149 = scmp.ne.s32.totalorder %s132, %s148
      %p150 = scmp.eq.s32.totalorder %s30, 0
      %p151 = por %p149, %p150
      %s153 = sadd.s32 %s152, 1
      %p156 = scmp.eq.s32.totalorder %s24, 3
      %p157 = scmp.ne.s32.totalorder %s152, %s154
      %p158 = scmp.eq.s32.totalorder %s24, 0
      %p159 = por %p157, %p158
      %p160 = scmp.ne.s32.totalorder %s152, %s154
      %p161 = scmp.eq.s32.totalorder %s29, 3
      %p162 = por %p160, %p161
      %p163 = scmp.ne.s32.totalorder %s154, %s155
      %p164 = scmp.eq.s32.totalorder %s29, 0
      %p165 = por %p163, %p164
      %p166 = scmp.ne.s32.totalorder %s154, %s155
      %p167 = scmp.eq.s32.totalorder %s30, 3
      %p168 = por %p166, %p167
      %p170 = scmp.ne.s32.totalorder %s155, %s169
      %p171 = scmp.eq.s32.totalorder %s30, 0
      %p172 = por %p170, %p171
      %s174 = sadd.s32 %s173, 1
      %p177 = scmp.eq.s32.totalorder %s24, 3
      %p178 = scmp.ne.s32.totalorder %s173, %s175
      %p179 = scmp.eq.s32.totalorder %s24, 0
      %p180 = por %p178, %p179
      %p181 = scmp.ne.s32.totalorder %s173, %s175
      %p182 = scmp.eq.s32.totalorder %s29, 3
      %p183 = por %p181, %p182
      %p184 = scmp.ne.s32.totalorder %s175, %s176
      %p185 = scmp.eq.s32.totalorder %s29, 0
      %p186 = por %p184, %p185
      %p187 = scmp.ne.s32.totalorder %s175, %s176
      %p188 = scmp.eq.s32.totalorder %s30, 3
      %p189 = por %p187, %p188
      %p191 = scmp.ne.s32.totalorder %s176, %s190
      %p192 = scmp.eq.s32.totalorder %s30, 0
      %p193 = por %p191, %p192
      %s195 = sadd.s32 %s194, 1
      %p198 = scmp.eq.s32.totalorder %s24, 3
      %p199 = scmp.ne.s32.totalorder %s194, %s196
      %p200 = scmp.eq.s32.totalorder %s24, 0
      %p201 = por %p199, %p200
      %p202 = scmp.ne.s32.totalorder %s194, %s196
      %p203 = scmp.eq.s32.totalorder %s29, 3
      %p204 = por %p202, %p203
      %p205 = scmp.ne.s32.totalorder %s196, %s197
      %p206 = scmp.eq.s32.totalorder %s29, 0
      %p207 = por %p205, %p206
      %p208 = scmp.ne.s32.totalorder %s196, %s197
      %p209 = scmp.eq.s32.totalorder %s30, 3
      %p210 = por %p208, %p209
      %p212 = scmp.ne.s32.totalorder %s197, %s211
      %p213 = scmp.eq.s32.totalorder %s30, 0
      %p214 = por %p212, %p213
      %s216 = sadd.s32 %s215, 1
      %p219 = scmp.eq.s32.totalorder %s24, 3
      %p220 = scmp.ne.s32.totalorder %s215, %s217
      %p221 = scmp.eq.s32.totalorder %s24, 0
      %p222 = por %p220, %p221
      %p223 = scmp.ne.s32.totalorder %s215, %s217
      %p224 = scmp.eq.s32.totalorder %s29, 3
      %p225 = por %p223, %p224
      %p226 = scmp.ne.s32.totalorder %s217, %s218
      %p227 = scmp.eq.s32.totalorder %s29, 0
      %p228 = por %p226, %p227
      %p229 = scmp.ne.s32.totalorder %s217, %s218
      %p230 = scmp.eq.s32.totalorder %s30, 3
      %p231 = por %p229, %p230
      %p233 = scmp.ne.s32.totalorder %s218, %s232
      %p234 = scmp.eq.s32.totalorder %s30, 0
      %p235 = por %p233, %p234
      %s237 = sadd.s32 %s236, 1
      %p240 = scmp.eq.s32.totalorder %s24, 3
      %p241 = scmp.ne.s32.totalorder %s236, %s238
      %p242 = scmp.eq.s32.totalorder %s24, 0
      %p243 = por %p241, %p242
      %p244 = scmp.ne.s32.totalorder %s236, %s238
      %p245 = scmp.eq.s32.totalorder %s29, 3
      %p246 = por %p244, %p245
      %p247 = scmp.ne.s32.totalorder %s238, %s239
      %p248 = scmp.eq.s32.totalorder %s29, 0
      %p249 = por %p247, %p248
      %p250 = scmp.ne.s32.totalorder %s238, %s239
      %p251 = scmp.eq.s32.totalorder %s30, 3
      %p252 = por %p250, %p251
      %p254 = scmp.ne.s32.totalorder %s239, %s253
      %p255 = scmp.eq.s32.totalorder %s30, 0
      %p256 = por %p254, %p255
      %s258 = sadd.s32 %s257, 1
      %p261 = scmp.eq.s32.totalorder %s24, 3
      %p262 = scmp.ne.s32.totalorder %s257, %s259
      %p263 = scmp.eq.s32.totalorder %s24, 0
      %p264 = por %p262, %p263
      %p265 = scmp.ne.s32.totalorder %s257, %s259
      %p266 = scmp.eq.s32.totalorder %s29, 3
      %p267 = por %p265, %p266
      %p268 = scmp.ne.s32.totalorder %s259, %s260
      %p269 = scmp.eq.s32.totalorder %s29, 0
      %p270 = por %p268, %p269
      %p271 = scmp.ne.s32.totalorder %s259, %s260
      %p272 = scmp.eq.s32.totalorder %s30, 3
      %p273 = por %p271, %p272
      %p275 = scmp.ne.s32.totalorder %s260, %s274
      %p276 = scmp.eq.s32.totalorder %s30, 0
      %p277 = por %p275, %p276
      %s278 = ssub.s32 %s31, %s43
      %p279 = scmp.eq.s32.totalorder %s278, 0
      %s281 = sadd.s32 %s280, 1
      %s282 = scalar_select %p279, %s280, %s281
      %p285 = pneg %p279
      %p286 = scmp.eq.s32.totalorder %s24, 3
      %p287 = por %p285, %p286
      %p288 = scmp.ne.s32.totalorder %s280, %s283
      %p289 = scmp.eq.s32.totalorder %s24, 0
      %p290 = por %p288, %p289
      %p291 = scmp.ne.s32.totalorder %s280, %s283
      %p292 = scmp.eq.s32.totalorder %s29, 3
      %p293 = por %p291, %p292
      %p294 = scmp.ne.s32.totalorder %s283, %s284
      %p295 = scmp.eq.s32.totalorder %s29, 0
      %p296 = por %p294, %p295
      %p297 = scmp.ne.s32.totalorder %s283, %s284
      %p298 = scmp.eq.s32.totalorder %s30, 3
      %p299 = por %p297, %p298
      %p301 = scmp.ne.s32.totalorder %s284, %s300
      %p302 = scmp.eq.s32.totalorder %s30, 0
      %p303 = por %p301, %p302
      %p304 = scmp.le.s32.totalorder 1, %s24
      %p305 = scmp.lt.s32.totalorder %s24, 5
      %p306 = pnand %p304, %p305
      %p307 = pneg %p306
      // Predicated region
      $region9: #{dirgnn_forward.4} parent=5 // pred_check
        _
      $region10: #{dirgnn_forward.4} parent=5 // pred_check_branch
        %309 = sbr.rel (%p306) target = $region12
      $region11: #{dirgnn_forward.4} parent=5 // pred_region
        %s310 = ssub.s32 %s24, 1
        // Predicated region
        $region13: #{dirgnn_forward.4} parent=11 // pred_check
          %p311 = pneg %p165
        $region14: #{dirgnn_forward.4} parent=11 // pred_check_branch
          %313 = sbr.rel (%p311) target = $region16
        $region15: #{dirgnn_forward.4} parent=11 // pred_region
          %315 = vsyncadd [#allocation7], 0
          %s316 = sshll.u32 %s4, 4
          %s317 = int_to_ptr.hbm [resolvable:$true] %s316
          %s318 = sshll.u32 [#allocation8], 4
          %s319 = int_to_ptr.vmem [resolvable:$true] %s318
          %324 = dma.hbm_to_vmem [thread:$0]  %s317, 1024, %s319, [#allocation7], 64, 64, 4
        $region16: #{dirgnn_forward.4} parent=11 // pred_fallthru
          _
        // Predicated region
        $region17: #{dirgnn_forward.4} parent=11 // pred_check
          %p325 = pneg %p186
        $region18: #{dirgnn_forward.4} parent=11 // pred_check_branch
          %327 = sbr.rel (%p325) target = $region20
        $region19: #{dirgnn_forward.4} parent=11 // pred_region
          %329 = vsyncadd [#allocation10], 0
          %s330 = sshll.u32 %s5, 4
          %s331 = int_to_ptr.hbm [resolvable:$true] %s330
          %s332 = sshll.u32 [#allocation9], 4
          %s333 = int_to_ptr.vmem [resolvable:$true] %s332
          %338 = dma.hbm_to_vmem [thread:$0]  %s331, 1024, %s333, [#allocation10], 64, 64, 4
        $region20: #{dirgnn_forward.4} parent=11 // pred_fallthru
          _
        // Predicated region
        $region21: #{dirgnn_forward.4} parent=11 // pred_check
          %p339 = pneg %p207
        $region22: #{dirgnn_forward.4} parent=11 // pred_check_branch
          %341 = sbr.rel (%p339) target = $region24
        $region23: #{dirgnn_forward.4} parent=11 // pred_region
          %343 = vsyncadd [#allocation10], 0
          %s344 = sshll.u32 %s6, 4
          %s345 = int_to_ptr.hbm [resolvable:$true] %s344
          %s346 = sshll.u32 [#allocation11], 4
          %s347 = int_to_ptr.vmem [resolvable:$true] %s346
          %352 = dma.hbm_to_vmem [thread:$0]  %s345, 1024, %s347, [#allocation10], 64, 64, 4
        $region24: #{dirgnn_forward.4} parent=11 // pred_fallthru
          _
        // Predicated region
        $region25: #{dirgnn_forward.4} parent=11 // pred_check
          %p353 = pneg %p228
        $region26: #{dirgnn_forward.4} parent=11 // pred_check_branch
          %355 = sbr.rel (%p353) target = $region28
        $region27: #{dirgnn_forward.4} parent=11 // pred_region
          _
        $region28: #{dirgnn_forward.4} parent=11 // pred_fallthru
          _
        // Predicated region
        $region29: #{dirgnn_forward.4} parent=11 // pred_check
          %p356 = pneg %p249
        $region30: #{dirgnn_forward.4} parent=11 // pred_check_branch
          %358 = sbr.rel (%p356) target = $region32
        $region31: #{dirgnn_forward.4} parent=11 // pred_region
          %360 = vsyncadd [#allocation13], 0
          %s361 = sshll.u32 %s8, 4
          %s362 = int_to_ptr.hbm [resolvable:$true] %s361
          %s363 = sshll.u32 [#allocation12], 4
          %s364 = int_to_ptr.vmem [resolvable:$true] %s363
          %369 = dma.hbm_to_vmem [thread:$0]  %s362, 1024, %s364, [#allocation13], 64, 64, 4
        $region32: #{dirgnn_forward.4} parent=11 // pred_fallthru
          _
        // Predicated region
        $region33: #{dirgnn_forward.4} parent=11 // pred_check
          %p370 = pneg %p270
        $region34: #{dirgnn_forward.4} parent=11 // pred_check_branch
          %372 = sbr.rel (%p370) target = $region36
        $region35: #{dirgnn_forward.4} parent=11 // pred_region
          %374 = vsyncadd [#allocation13], 0
          %s376 = sshll.u32 %s9, 4
          %s377 = int_to_ptr.hbm [resolvable:$true] %s376
          %s378 = sshll.u32 [#allocation14], 4
          %s379 = int_to_ptr.vmem [resolvable:$true] %s378
          %381 = dma.hbm_to_vmem [thread:$0]  %s377, 16, %s379, [#allocation13]
        $region36: #{dirgnn_forward.4} parent=11 // pred_fallthru
          _
      $region12: #{dirgnn_forward.4} parent=5 // pred_fallthru
        _
      %p382 = scmp.lt.s32.totalorder %s24, 4
      // Predicated region
      $region37: #{dirgnn_forward.4} parent=5 // pred_check
        %p383 = pneg %p382
      $region38: #{dirgnn_forward.4} parent=5 // pred_check_branch
        %385 = sbr.rel (%p383) target = $region40
      $region39: #{dirgnn_forward.4} parent=5 // pred_region
        // Predicated region
        $region41: #{dirgnn_forward.4} parent=39 // pred_check
          %p386 = pneg %p58
        $region42: #{dirgnn_forward.4} parent=39 // pred_check_branch
          %388 = sbr.rel (%p386) target = $region44
        $region43: #{dirgnn_forward.4} parent=39 // pred_region
          %s389 = sand.u32 %s48, 1
          %s390 = scalar_lea.sflag [#allocation5], %s389
          %s391 = sand.u32 %s48, 1
          %s392 = smul.addr %s391, 64
          %s393 = scalar_lea.vmem [#allocation4], %s392
          %s394 = smul.u32 16, %s31
          %396 = vsyncadd %s390, 0
          %s397 = smul.addr %s394, 2
          %s398 = sadd.s32 %s32, %s397
          %s399 = smul.addr %s398, 4
          %s400 = scalar_lea.hbm %s0, %s399
          %s401 = sshll.u32 %s400, 4
          %s402 = int_to_ptr.hbm [resolvable:$true] %s401
          %s403 = sshll.u32 %s393, 4
          %s404 = int_to_ptr.vmem [resolvable:$true] %s403
          %409 = dma.hbm_to_vmem [thread:$0]  %s402, 1024, %s404, %s390, 128, 64, 4
        $region44: #{dirgnn_forward.4} parent=39 // pred_fallthru
          _
        // Predicated region
        $region45: #{dirgnn_forward.4} parent=39 // pred_check
          %p410 = pneg %p86
        $region46: #{dirgnn_forward.4} parent=39 // pred_check_branch
          %412 = sbr.rel (%p410) target = $region48
        $region47: #{dirgnn_forward.4} parent=39 // pred_region
          %s413 = sand.u32 %s24, 1
          %s414 = scalar_lea.sflag [#allocation7], %s413
          %s415 = sand.u32 %s76, 1
          %s416 = smul.addr %s415, 64
          %s417 = scalar_lea.vmem [#allocation6], %s416
          %s418 = smul.u32 16, %s31
          %420 = vsyncadd %s414, 0
          %s421 = smul.addr %s418, 2
          %s422 = sadd.s32 %s32, %s421
          %s423 = smul.addr %s422, 4
          %s424 = scalar_lea.hbm %s1, %s423
          %s425 = sshll.u32 %s424, 4
          %s426 = int_to_ptr.hbm [resolvable:$true] %s425
          %s427 = sshll.u32 %s417, 4
          %s428 = int_to_ptr.vmem [resolvable:$true] %s427
          %433 = dma.hbm_to_vmem [thread:$0]  %s426, 1024, %s428, %s414, 128, 64, 4
        $region48: #{dirgnn_forward.4} parent=39 // pred_fallthru
          _
        // Predicated region
        $region49: #{dirgnn_forward.4} parent=39 // pred_check
          %p434 = pneg %p112
        $region50: #{dirgnn_forward.4} parent=39 // pred_check_branch
          %436 = sbr.rel (%p434) target = $region52
        $region51: #{dirgnn_forward.4} parent=39 // pred_region
          %s437 = smul.u32 16, %s32
          %p438 = scmp.lt.s32.totalorder %s437, 31
          %s439 = scalar_select %p438, %s437, 31
          %s440 = smul.addr %s439, 4
          %s441 = scalar_lea.vmem %s2, %s440
          %s442 = smul.u32 16, %s32
        $region52: #{dirgnn_forward.4} parent=39 // pred_fallthru
          _
        // Predicated region
        $region53: #{dirgnn_forward.4} parent=39 // pred_check
          %p443 = pneg %p138
        $region54: #{dirgnn_forward.4} parent=39 // pred_check_branch
          %445 = sbr.rel (%p443) target = $region56
        $region55: #{dirgnn_forward.4} parent=39 // pred_region
          %s446 = smul.u32 16, %s31
          %p447 = scmp.lt.s32.totalorder %s446, 31
          %s448 = scalar_select %p447, %s446, 31
          %s449 = smul.addr %s448, 4
          %s450 = scalar_lea.vmem %s3, %s449
          %s451 = smul.u32 16, %s31
        $region56: #{dirgnn_forward.4} parent=39 // pred_fallthru
          _
      $region40: #{dirgnn_forward.4} parent=5 // pred_fallthru
        _
      %p452 = scmp.le.s32.totalorder 1, %s24
      %p453 = scmp.lt.s32.totalorder %s24, 5
      %p454 = pnand %p452, %p453
      %p455 = pneg %p454
      // Predicated region
      $region57: #{dirgnn_forward.4} parent=5 // pred_check
        _
      $region58: #{dirgnn_forward.4} parent=5 // pred_check_branch
        %457 = sbr.rel (%p454) target = $region60
      $region59: #{dirgnn_forward.4} parent=5 // pred_region
        %s458 = ssub.s32 %s24, 1
        %s459 = sand.u32 %s51, 1
        %s460 = scalar_lea.sflag [#allocation5], %s459
        %s461 = sand.u32 %s51, 1
        %s462 = smul.addr %s461, 64
        %s463 = scalar_lea.vmem [#allocation4], %s462
        // Predicated region
        $region61: #{dirgnn_forward.4} parent=59 // pred_check
          %p464 = pneg %p64
        $region62: #{dirgnn_forward.4} parent=59 // pred_check_branch
          %466 = sbr.rel (%p464) target = $region64
        $region63: #{dirgnn_forward.4} parent=59 // pred_region
          %468 = dma.done %s460, 1024
        $region64: #{dirgnn_forward.4} parent=59 // pred_fallthru
          _
        %s469 = sand.u32 %s29, 1
        %s470 = scalar_lea.sflag [#allocation7], %s469
        %s471 = sand.u32 %s79, 1
        %s472 = smul.addr %s471, 64
        %s473 = scalar_lea.vmem [#allocation6], %s472
        // Predicated region
        $region65: #{dirgnn_forward.4} parent=59 // pred_check
          %p474 = pneg %p92
        $region66: #{dirgnn_forward.4} parent=59 // pred_check_branch
          %476 = sbr.rel (%p474) target = $region68
        $region67: #{dirgnn_forward.4} parent=59 // pred_region
          %478 = dma.done %s470, 1024
        $region68: #{dirgnn_forward.4} parent=59 // pred_fallthru
          _
        // Predicated region
        $region69: #{dirgnn_forward.4} parent=59 // pred_check
          %p479 = pneg %p165
        $region70: #{dirgnn_forward.4} parent=59 // pred_check_branch
          %481 = sbr.rel (%p479) target = $region72
        $region71: #{dirgnn_forward.4} parent=59 // pred_region
          %483 = dma.done [#allocation7], 1024
        $region72: #{dirgnn_forward.4} parent=59 // pred_fallthru
          _
        // Predicated region
        $region73: #{dirgnn_forward.4} parent=59 // pred_check
          %p484 = pneg %p186
        $region74: #{dirgnn_forward.4} parent=59 // pred_check_branch
          %486 = sbr.rel (%p484) target = $region76
        $region75: #{dirgnn_forward.4} parent=59 // pred_region
          %488 = dma.done [#allocation10], 1024
        $region76: #{dirgnn_forward.4} parent=59 // pred_fallthru
          _
        // Predicated region
        $region77: #{dirgnn_forward.4} parent=59 // pred_check
          %p489 = pneg %p207
        $region78: #{dirgnn_forward.4} parent=59 // pred_check_branch
          %491 = sbr.rel (%p489) target = $region80
        $region79: #{dirgnn_forward.4} parent=59 // pred_region
          %493 = dma.done [#allocation10], 1024
        $region80: #{dirgnn_forward.4} parent=59 // pred_fallthru
          _
        // Predicated region
        $region81: #{dirgnn_forward.4} parent=59 // pred_check
          %p494 = pneg %p249
        $region82: #{dirgnn_forward.4} parent=59 // pred_check_branch
          %496 = sbr.rel (%p494) target = $region84
        $region83: #{dirgnn_forward.4} parent=59 // pred_region
          %498 = dma.done [#allocation13], 1024
        $region84: #{dirgnn_forward.4} parent=59 // pred_fallthru
          _
        // Predicated region
        $region85: #{dirgnn_forward.4} parent=59 // pred_check
          %p499 = pneg %p270
        $region86: #{dirgnn_forward.4} parent=59 // pred_check_branch
          %501 = sbr.rel (%p499) target = $region88
        $region87: #{dirgnn_forward.4} parent=59 // pred_region
          %503 = dma.done [#allocation13], 16
        $region88: #{dirgnn_forward.4} parent=59 // pred_fallthru
          _
        %s504 = sand.u32 %s51, 1
        %s505 = scalar_lea.sflag [#allocation5], %s504
        %s506 = sand.u32 %s51, 1
        %s507 = smul.addr %s506, 64
        %s508 = scalar_lea.vmem [#allocation4], %s507
        %p509 = pneg %p64
        %p510 = pneg %p61
        %s511 = sand.u32 %s29, 1
        %s512 = scalar_lea.sflag [#allocation7], %s511
        %s513 = sand.u32 %s79, 1
        %s514 = smul.addr %s513, 64
        %s515 = scalar_lea.vmem [#allocation6], %s514
        %p516 = pneg %p92
        %p517 = pneg %p89
        %s518 = smul.u32 16, %s34
        %p519 = scmp.lt.s32.totalorder %s518, 31
        %s520 = scalar_select %p519, %s518, 31
        %s521 = smul.addr %s520, 4
        %s522 = scalar_lea.vmem %s2, %s521
        %p523 = pneg %p118
        %p524 = pneg %p115
        %s525 = smul.u32 16, %s33
        %p526 = scmp.lt.s32.totalorder %s525, 31
        %s527 = scalar_select %p526, %s525, 31
        %s528 = smul.addr %s527, 4
        %s529 = scalar_lea.vmem %s3, %s528
        %p530 = pneg %p144
        %p531 = pneg %p141
        %p532 = pneg %p165
        %p533 = pneg %p162
        %p534 = pneg %p186
        %p535 = pneg %p183
        %p536 = pneg %p207
        %p537 = pneg %p204
        %p538 = pneg %p228
        %p539 = pneg %p225
        %p540 = pneg %p249
        %p541 = pneg %p246
        %p542 = pneg %p270
        %p543 = pneg %p267
        %p544 = pneg %p296
        %p545 = pneg %p293
        %s546 = smul.u32 16, %s33
        %p547 = scmp.lt.s32.totalorder %s546, 31
        %s548 = scalar_select %p547, %s546, 31
        %s549 = smul.addr %s548, 4
        %s550 = scalar_lea.vmem %s10, %s549
        %s551 = smul.u32 16, %s33
        %s552 = smul.u32 16, %s33
        %s553 = smul.u32 16, %s34
        %p554 = scmp.lt.s32.totalorder %s553, 31
        %s555 = scalar_select %p554, %s553, 31
        %s556 = smul.addr %s555, 4
        %s557 = scalar_lea.vmem %s2, %s556
        %s558 = smul.u32 16, %s34
        %s559 = smul.u32 16, %s33
        %p560 = scmp.lt.s32.totalorder %s559, 31
        %s561 = scalar_select %p560, %s559, 31
        %s562 = smul.addr %s561, 4
        %s563 = scalar_lea.vmem %s3, %s562
        %s564 = smul.u32 16, %s33
        %s565 = smul.u32 16, %s33
        %p566 = scmp.lt.s32.totalorder %s565, 31
        %s567 = scalar_select %p566, %s565, 31
        %s568 = smul.addr %s567, 4
        %s569 = scalar_lea.vmem %s10, %s568
        %s570 = smul.u32 16, %s33
        %p571 = scmp.eq.s32.totalorder %s34, 0
        // Predicated region
        $region89: #{dirgnn_forward.4} parent=59 // pred_check
          %p572 = pneg %p571
        $region90: #{dirgnn_forward.4} parent=59 // pred_check_branch
          %574 = sbr.rel (%p572) target = $region92
        $region91: #{dirgnn_forward.4} parent=59 // pred_region
          %575 = vst [vmem:[#allocation2] sm:$0xff] 0.0
          %576 = vst [vmem:[#allocation2 + $0x8] sm:$0xff] 0.0
          %577 = vst [vmem:[#allocation2 + $0x10] sm:$0xff] 0.0
          %578 = vst [vmem:[#allocation2 + $0x18] sm:$0xff] 0.0
          %579 = vst [vmem:[#allocation2 + $0x20] sm:$0xff] 0.0
          %580 = vst [vmem:[#allocation2 + $0x28] sm:$0xff] 0.0
          %581 = vst [vmem:[#allocation2 + $0x30] sm:$0xff] 0.0
          %582 = vst [vmem:[#allocation2 + $0x38] sm:$0xff] 0.0
          %583 = vst [vmem:[#allocation2 + $0x40] sm:$0xff] 0.0
          %584 = vst [vmem:[#allocation2 + $0x48] sm:$0xff] 0.0
          %585 = vst [vmem:[#allocation2 + $0x50] sm:$0xff] 0.0
          %586 = vst [vmem:[#allocation2 + $0x58] sm:$0xff] 0.0
          %587 = vst [vmem:[#allocation2 + $0x60] sm:$0xff] 0.0
          %588 = vst [vmem:[#allocation2 + $0x68] sm:$0xff] 0.0
          %589 = vst [vmem:[#allocation2 + $0x70] sm:$0xff] 0.0
          %590 = vst [vmem:[#allocation2 + $0x78] sm:$0xff] 0.0
          %591 = vst [vmem:[#allocation3] sm:$0xff] 0.0
          %592 = vst [vmem:[#allocation3 + $0x8] sm:$0xff] 0.0
          %593 = vst [vmem:[#allocation3 + $0x10] sm:$0xff] 0.0
          %594 = vst [vmem:[#allocation3 + $0x18] sm:$0xff] 0.0
          %595 = vst [vmem:[#allocation3 + $0x20] sm:$0xff] 0.0
          %596 = vst [vmem:[#allocation3 + $0x28] sm:$0xff] 0.0
          %597 = vst [vmem:[#allocation3 + $0x30] sm:$0xff] 0.0
          %598 = vst [vmem:[#allocation3 + $0x38] sm:$0xff] 0.0
          %599 = vst [vmem:[#allocation3 + $0x40] sm:$0xff] 0.0
          %600 = vst [vmem:[#allocation3 + $0x48] sm:$0xff] 0.0
          %601 = vst [vmem:[#allocation3 + $0x50] sm:$0xff] 0.0
          %602 = vst [vmem:[#allocation3 + $0x58] sm:$0xff] 0.0
          %603 = vst [vmem:[#allocation3 + $0x60] sm:$0xff] 0.0
          %604 = vst [vmem:[#allocation3 + $0x68] sm:$0xff] 0.0
          %605 = vst [vmem:[#allocation3 + $0x70] sm:$0xff] 0.0
          %606 = vst [vmem:[#allocation3 + $0x78] sm:$0xff] 0.0
        $region92: #{dirgnn_forward.4} parent=59 // pred_fallthru
          _
        %v607 = vld [vmem:[%s557] sm:$0xf]
        %v608 = vld [vmem:[%s557 + $0x4] sm:$0xf]
        %v609 = vld [vmem:[%s557 + $0x8] sm:$0xf]
        %v610 = vld [vmem:[%s557 + $0xc] sm:$0xf]
        %v611 = vld [vmem:[%s557 + $0x10] sm:$0xf]
        %v612 = vld [vmem:[%s557 + $0x14] sm:$0xf]
        %v613 = vld [vmem:[%s557 + $0x18] sm:$0xf]
        %v614 = vld [vmem:[%s557 + $0x1c] sm:$0xf]
        %v615 = vld [vmem:[%s557 + $0x20] sm:$0xf]
        %v616 = vld [vmem:[%s557 + $0x24] sm:$0xf]
        %v617 = vld [vmem:[%s557 + $0x28] sm:$0xf]
        %v618 = vld [vmem:[%s557 + $0x2c] sm:$0xf]
        %v619 = vld [vmem:[%s557 + $0x30] sm:$0xf]
        %v620 = vld [vmem:[%s557 + $0x34] sm:$0xf]
        %v621 = vld [vmem:[%s557 + $0x38] sm:$0xf]
        %v622 = vld [vmem:[%s557 + $0x3c] sm:$0xf]
        %v623 = vld [vmem:[#allocation2] sm:$0xff]
        %v624 = vld [vmem:[#allocation2 + $0x8] sm:$0xff]
        %v625 = vld [vmem:[#allocation2 + $0x10] sm:$0xff]
        %v626 = vld [vmem:[#allocation2 + $0x18] sm:$0xff]
        %v627 = vld [vmem:[#allocation2 + $0x20] sm:$0xff]
        %v628 = vld [vmem:[#allocation2 + $0x28] sm:$0xff]
        %v629 = vld [vmem:[#allocation2 + $0x30] sm:$0xff]
        %v630 = vld [vmem:[#allocation2 + $0x38] sm:$0xff]
        %v631 = vld [vmem:[#allocation2 + $0x40] sm:$0xff]
        %v632 = vld [vmem:[#allocation2 + $0x48] sm:$0xff]
        %v633 = vld [vmem:[#allocation2 + $0x50] sm:$0xff]
        %v634 = vld [vmem:[#allocation2 + $0x58] sm:$0xff]
        %v635 = vld [vmem:[#allocation2 + $0x60] sm:$0xff]
        %v636 = vld [vmem:[#allocation2 + $0x68] sm:$0xff]
        %v637 = vld [vmem:[#allocation2 + $0x70] sm:$0xff]
        %v638 = vld [vmem:[#allocation2 + $0x78] sm:$0xff]
        %v639 = vld [vmem:[%s463] sm:$0xf]
        %v640 = vld [vmem:[%s463 + $0x4] sm:$0xf]
        %v641 = vld [vmem:[%s463 + $0x8] sm:$0xf]
        %v642 = vld [vmem:[%s463 + $0xc] sm:$0xf]
        %v643 = vld [vmem:[%s463 + $0x10] sm:$0xf]
        %v644 = vld [vmem:[%s463 + $0x14] sm:$0xf]
        %v645 = vld [vmem:[%s463 + $0x18] sm:$0xf]
        %v646 = vld [vmem:[%s463 + $0x1c] sm:$0xf]
        %v647 = vld [vmem:[%s463 + $0x20] sm:$0xf]
        %v648 = vld [vmem:[%s463 + $0x24] sm:$0xf]
        %v649 = vld [vmem:[%s463 + $0x28] sm:$0xf]
        %v650 = vld [vmem:[%s463 + $0x2c] sm:$0xf]
        %v651 = vld [vmem:[%s463 + $0x30] sm:$0xf]
        %v652 = vld [vmem:[%s463 + $0x34] sm:$0xf]
        %v653 = vld [vmem:[%s463 + $0x38] sm:$0xf]
        %v654 = vld [vmem:[%s463 + $0x3c] sm:$0xf]
        %v671 = vunpack.c.l.b16 %v639
        %v672 = vunpack.c.l.b16 %v640
        %v673 = vunpack.c.l.b16 %v641
        %v674 = vunpack.c.l.b16 %v642
        %v675 = vunpack.c.l.b16 %v643
        %v676 = vunpack.c.l.b16 %v644
        %v677 = vunpack.c.l.b16 %v645
        %v678 = vunpack.c.l.b16 %v646
        %v679 = vunpack.c.l.b16 %v647
        %v680 = vunpack.c.l.b16 %v648
        %v681 = vunpack.c.l.b16 %v649
        %v682 = vunpack.c.l.b16 %v650
        %v683 = vunpack.c.l.b16 %v651
        %v684 = vunpack.c.l.b16 %v652
        %v685 = vunpack.c.l.b16 %v653
        %v686 = vunpack.c.l.b16 %v654
        %v687 = vpack.c.b16 %v672, %v671
        %v688 = vpack.c.b16 %v674, %v673
        %v689 = vpack.c.b16 %v676, %v675
        %v690 = vpack.c.b16 %v678, %v677
        %v691 = vpack.c.b16 %v680, %v679
        %v692 = vpack.c.b16 %v682, %v681
        %v693 = vpack.c.b16 %v684, %v683
        %v694 = vpack.c.b16 %v686, %v685
        %v719 = vunpack.c.l.b16 %v607
        %v720 = vunpack.c.l.b16 %v608
        %v721 = vunpack.c.l.b16 %v609
        %v722 = vunpack.c.l.b16 %v610
        %v723 = vunpack.c.l.b16 %v611
        %v724 = vunpack.c.l.b16 %v612
        %v725 = vunpack.c.l.b16 %v613
        %v726 = vunpack.c.l.b16 %v614
        %v727 = vunpack.c.l.b16 %v615
        %v728 = vunpack.c.l.b16 %v616
        %v729 = vunpack.c.l.b16 %v617
        %v730 = vunpack.c.l.b16 %v618
        %v731 = vunpack.c.l.b16 %v619
        %v732 = vunpack.c.l.b16 %v620
        %v733 = vunpack.c.l.b16 %v621
        %v734 = vunpack.c.l.b16 %v622
        %v735 = vpack.c.b16 %v720, %v719
        %v736 = vpack.c.b16 %v722, %v721
        %v737 = vpack.c.b16 %v724, %v723
        %v738 = vpack.c.b16 %v726, %v725
        %v739 = vpack.c.b16 %v728, %v727
        %v740 = vpack.c.b16 %v730, %v729
        %v741 = vpack.c.b16 %v732, %v731
        %v742 = vpack.c.b16 %v734, %v733
        %751 = vmatpush.bf16.msra.mxu0 %v742
        %752 = vmatpush.bf16.msra.mxu0 %v741
        %753 = vmatpush.bf16.msra.mxu0 %v740
        %754 = vmatpush.bf16.msra.mxu0 %v739
        %755 = vmatpush.bf16.msra.mxu0 %v738
        %756 = vmatpush.bf16.msra.mxu0 %v737
        %757 = vmatpush.bf16.msra.mxu0 %v736
        %758 = vmatpush.bf16.msra.mxu0 %v735
        %759 = vmatmul.bf16.gmra.mxu0 %v687
        %v760 = vpop.f32.mrf.mxu0
        %v761 = vadd.f32 0.0, %v760
        %v762 = vpop.f32.mrf.mxu0
        %v763 = vadd.f32 0.0, %v762
        %764 = vmatmul.bf16.gmra.mxu0 %v688
        %v765 = vpop.f32.mrf.mxu0
        %v766 = vadd.f32 0.0, %v765
        %v767 = vpop.f32.mrf.mxu0
        %v768 = vadd.f32 0.0, %v767
        %769 = vmatmul.bf16.gmra.mxu0 %v689
        %v770 = vpop.f32.mrf.mxu0
        %v771 = vadd.f32 0.0, %v770
        %v772 = vpop.f32.mrf.mxu0
        %v773 = vadd.f32 0.0, %v772
        %774 = vmatmul.bf16.gmra.mxu0 %v690
        %v775 = vpop.f32.mrf.mxu0
        %v776 = vadd.f32 0.0, %v775
        %v777 = vpop.f32.mrf.mxu0
        %v778 = vadd.f32 0.0, %v777
        %779 = vmatmul.bf16.gmra.mxu0 %v691
        %v780 = vpop.f32.mrf.mxu0
        %v781 = vadd.f32 0.0, %v780
        %v782 = vpop.f32.mrf.mxu0
        %v783 = vadd.f32 0.0, %v782
        %784 = vmatmul.bf16.gmra.mxu0 %v692
        %v785 = vpop.f32.mrf.mxu0
        %v786 = vadd.f32 0.0, %v785
        %v787 = vpop.f32.mrf.mxu0
        %v788 = vadd.f32 0.0, %v787
        %789 = vmatmul.bf16.gmra.mxu0 %v693
        %v790 = vpop.f32.mrf.mxu0
        %v791 = vadd.f32 0.0, %v790
        %v792 = vpop.f32.mrf.mxu0
        %v793 = vadd.f32 0.0, %v792
        %794 = vmatmul.bf16.gmra.mxu0 %v694
        %v795 = vpop.f32.mrf.mxu0
        %v796 = vadd.f32 0.0, %v795
        %v797 = vpop.f32.mrf.mxu0
        %v798 = vadd.f32 0.0, %v797
        %799 = vdwg.mxu0
        %v800 = vadd.f32 %v623, %v761
        %v801 = vadd.f32 %v624, %v763
        %v802 = vadd.f32 %v625, %v766
        %v803 = vadd.f32 %v626, %v768
        %v804 = vadd.f32 %v627, %v771
        %v805 = vadd.f32 %v628, %v773
        %v806 = vadd.f32 %v629, %v776
        %v807 = vadd.f32 %v630, %v778
        %v808 = vadd.f32 %v631, %v781
        %v809 = vadd.f32 %v632, %v783
        %v810 = vadd.f32 %v633, %v786
        %v811 = vadd.f32 %v634, %v788
        %v812 = vadd.f32 %v635, %v791
        %v813 = vadd.f32 %v636, %v793
        %v814 = vadd.f32 %v637, %v796
        %v815 = vadd.f32 %v638, %v798
        %816 = vst [vmem:[#allocation2] sm:$0xff] %v800
        %817 = vst [vmem:[#allocation2 + $0x8] sm:$0xff] %v801
        %818 = vst [vmem:[#allocation2 + $0x10] sm:$0xff] %v802
        %819 = vst [vmem:[#allocation2 + $0x18] sm:$0xff] %v803
        %820 = vst [vmem:[#allocation2 + $0x20] sm:$0xff] %v804
        %821 = vst [vmem:[#allocation2 + $0x28] sm:$0xff] %v805
        %822 = vst [vmem:[#allocation2 + $0x30] sm:$0xff] %v806
        %823 = vst [vmem:[#allocation2 + $0x38] sm:$0xff] %v807
        %824 = vst [vmem:[#allocation2 + $0x40] sm:$0xff] %v808
        %825 = vst [vmem:[#allocation2 + $0x48] sm:$0xff] %v809
        %826 = vst [vmem:[#allocation2 + $0x50] sm:$0xff] %v810
        %827 = vst [vmem:[#allocation2 + $0x58] sm:$0xff] %v811
        %828 = vst [vmem:[#allocation2 + $0x60] sm:$0xff] %v812
        %829 = vst [vmem:[#allocation2 + $0x68] sm:$0xff] %v813
        %830 = vst [vmem:[#allocation2 + $0x70] sm:$0xff] %v814
        %831 = vst [vmem:[#allocation2 + $0x78] sm:$0xff] %v815
        %v832 = vld [vmem:[#allocation3] sm:$0xff]
        %v833 = vld [vmem:[#allocation3 + $0x8] sm:$0xff]
        %v834 = vld [vmem:[#allocation3 + $0x10] sm:$0xff]
        %v835 = vld [vmem:[#allocation3 + $0x18] sm:$0xff]
        %v836 = vld [vmem:[#allocation3 + $0x20] sm:$0xff]
        %v837 = vld [vmem:[#allocation3 + $0x28] sm:$0xff]
        %v838 = vld [vmem:[#allocation3 + $0x30] sm:$0xff]
        %v839 = vld [vmem:[#allocation3 + $0x38] sm:$0xff]
        %v840 = vld [vmem:[#allocation3 + $0x40] sm:$0xff]
        %v841 = vld [vmem:[#allocation3 + $0x48] sm:$0xff]
        %v842 = vld [vmem:[#allocation3 + $0x50] sm:$0xff]
        %v843 = vld [vmem:[#allocation3 + $0x58] sm:$0xff]
        %v844 = vld [vmem:[#allocation3 + $0x60] sm:$0xff]
        %v845 = vld [vmem:[#allocation3 + $0x68] sm:$0xff]
        %v846 = vld [vmem:[#allocation3 + $0x70] sm:$0xff]
        %v847 = vld [vmem:[#allocation3 + $0x78] sm:$0xff]
        %v848 = vld [vmem:[%s473] sm:$0xf]
        %v849 = vld [vmem:[%s473 + $0x4] sm:$0xf]
        %v850 = vld [vmem:[%s473 + $0x8] sm:$0xf]
        %v851 = vld [vmem:[%s473 + $0xc] sm:$0xf]
        %v852 = vld [vmem:[%s473 + $0x10] sm:$0xf]
        %v853 = vld [vmem:[%s473 + $0x14] sm:$0xf]
        %v854 = vld [vmem:[%s473 + $0x18] sm:$0xf]
        %v855 = vld [vmem:[%s473 + $0x1c] sm:$0xf]
        %v856 = vld [vmem:[%s473 + $0x20] sm:$0xf]
        %v857 = vld [vmem:[%s473 + $0x24] sm:$0xf]
        %v858 = vld [vmem:[%s473 + $0x28] sm:$0xf]
        %v859 = vld [vmem:[%s473 + $0x2c] sm:$0xf]
        %v860 = vld [vmem:[%s473 + $0x30] sm:$0xf]
        %v861 = vld [vmem:[%s473 + $0x34] sm:$0xf]
        %v862 = vld [vmem:[%s473 + $0x38] sm:$0xf]
        %v863 = vld [vmem:[%s473 + $0x3c] sm:$0xf]
        %v880 = vunpack.c.l.b16 %v848
        %v881 = vunpack.c.l.b16 %v849
        %v882 = vunpack.c.l.b16 %v850
        %v883 = vunpack.c.l.b16 %v851
        %v884 = vunpack.c.l.b16 %v852
        %v885 = vunpack.c.l.b16 %v853
        %v886 = vunpack.c.l.b16 %v854
        %v887 = vunpack.c.l.b16 %v855
        %v888 = vunpack.c.l.b16 %v856
        %v889 = vunpack.c.l.b16 %v857
        %v890 = vunpack.c.l.b16 %v858
        %v891 = vunpack.c.l.b16 %v859
        %v892 = vunpack.c.l.b16 %v860
        %v893 = vunpack.c.l.b16 %v861
        %v894 = vunpack.c.l.b16 %v862
        %v895 = vunpack.c.l.b16 %v863
        %v896 = vpack.c.b16 %v881, %v880
        %v897 = vpack.c.b16 %v883, %v882
        %v898 = vpack.c.b16 %v885, %v884
        %v899 = vpack.c.b16 %v887, %v886
        %v900 = vpack.c.b16 %v889, %v888
        %v901 = vpack.c.b16 %v891, %v890
        %v902 = vpack.c.b16 %v893, %v892
        %v903 = vpack.c.b16 %v895, %v894
        %912 = vmatpush.bf16.msra.mxu0 %v742
        %913 = vmatpush.bf16.msra.mxu0 %v741
        %914 = vmatpush.bf16.msra.mxu0 %v740
        %915 = vmatpush.bf16.msra.mxu0 %v739
        %916 = vmatpush.bf16.msra.mxu0 %v738
        %917 = vmatpush.bf16.msra.mxu0 %v737
        %918 = vmatpush.bf16.msra.mxu0 %v736
        %919 = vmatpush.bf16.msra.mxu0 %v735
        %920 = vmatmul.bf16.gmra.mxu0 %v896
        %v921 = vpop.f32.mrf.mxu0
        %v922 = vadd.f32 0.0, %v921
        %v923 = vpop.f32.mrf.mxu0
        %v924 = vadd.f32 0.0, %v923
        %925 = vmatmul.bf16.gmra.mxu0 %v897
        %v926 = vpop.f32.mrf.mxu0
        %v927 = vadd.f32 0.0, %v926
        %v928 = vpop.f32.mrf.mxu0
        %v929 = vadd.f32 0.0, %v928
        %930 = vmatmul.bf16.gmra.mxu0 %v898
        %v931 = vpop.f32.mrf.mxu0
        %v932 = vadd.f32 0.0, %v931
        %v933 = vpop.f32.mrf.mxu0
        %v934 = vadd.f32 0.0, %v933
        %935 = vmatmul.bf16.gmra.mxu0 %v899
        %v936 = vpop.f32.mrf.mxu0
        %v937 = vadd.f32 0.0, %v936
        %v938 = vpop.f32.mrf.mxu0
        %v939 = vadd.f32 0.0, %v938
        %940 = vmatmul.bf16.gmra.mxu0 %v900
        %v941 = vpop.f32.mrf.mxu0
        %v942 = vadd.f32 0.0, %v941
        %v943 = vpop.f32.mrf.mxu0
        %v944 = vadd.f32 0.0, %v943
        %945 = vmatmul.bf16.gmra.mxu0 %v901
        %v946 = vpop.f32.mrf.mxu0
        %v947 = vadd.f32 0.0, %v946
        %v948 = vpop.f32.mrf.mxu0
        %v949 = vadd.f32 0.0, %v948
        %950 = vmatmul.bf16.gmra.mxu0 %v902
        %v951 = vpop.f32.mrf.mxu0
        %v952 = vadd.f32 0.0, %v951
        %v953 = vpop.f32.mrf.mxu0
        %v954 = vadd.f32 0.0, %v953
        %955 = vmatmul.bf16.gmra.mxu0 %v903
        %v956 = vpop.f32.mrf.mxu0
        %v957 = vadd.f32 0.0, %v956
        %v958 = vpop.f32.mrf.mxu0
        %v959 = vadd.f32 0.0, %v958
        %960 = vdwg.mxu0
        %v961 = vadd.f32 %v832, %v922
        %v962 = vadd.f32 %v833, %v924
        %v963 = vadd.f32 %v834, %v927
        %v964 = vadd.f32 %v835, %v929
        %v965 = vadd.f32 %v836, %v932
        %v966 = vadd.f32 %v837, %v934
        %v967 = vadd.f32 %v838, %v937
        %v968 = vadd.f32 %v839, %v939
        %v969 = vadd.f32 %v840, %v942
        %v970 = vadd.f32 %v841, %v944
        %v971 = vadd.f32 %v842, %v947
        %v972 = vadd.f32 %v843, %v949
        %v973 = vadd.f32 %v844, %v952
        %v974 = vadd.f32 %v845, %v954
        %v975 = vadd.f32 %v846, %v957
        %v976 = vadd.f32 %v847, %v959
        %977 = vst [vmem:[#allocation3] sm:$0xff] %v961
        %978 = vst [vmem:[#allocation3 + $0x8] sm:$0xff] %v962
        %979 = vst [vmem:[#allocation3 + $0x10] sm:$0xff] %v963
        %980 = vst [vmem:[#allocation3 + $0x18] sm:$0xff] %v964
        %981 = vst [vmem:[#allocation3 + $0x20] sm:$0xff] %v965
        %982 = vst [vmem:[#allocation3 + $0x28] sm:$0xff] %v966
        %983 = vst [vmem:[#allocation3 + $0x30] sm:$0xff] %v967
        %984 = vst [vmem:[#allocation3 + $0x38] sm:$0xff] %v968
        %985 = vst [vmem:[#allocation3 + $0x40] sm:$0xff] %v969
        %986 = vst [vmem:[#allocation3 + $0x48] sm:$0xff] %v970
        %987 = vst [vmem:[#allocation3 + $0x50] sm:$0xff] %v971
        %988 = vst [vmem:[#allocation3 + $0x58] sm:$0xff] %v972
        %989 = vst [vmem:[#allocation3 + $0x60] sm:$0xff] %v973
        %990 = vst [vmem:[#allocation3 + $0x68] sm:$0xff] %v974
        %991 = vst [vmem:[#allocation3 + $0x70] sm:$0xff] %v975
        %992 = vst [vmem:[#allocation3 + $0x78] sm:$0xff] %v976
        %p993 = scmp.eq.s32.totalorder %s34, 1
        // Predicated region
        $region93: #{dirgnn_forward.4} parent=59 // pred_check
          %p994 = pneg %p993
        $region94: #{dirgnn_forward.4} parent=59 // pred_check_branch
          %996 = sbr.rel (%p994) target = $region96
        $region95: #{dirgnn_forward.4} parent=59 // pred_region
          %v997 = vld [vmem:[#allocation2] sm:$0xff]
          %v998 = vld [vmem:[#allocation2 + $0x8] sm:$0xff]
          %v999 = vld [vmem:[#allocation2 + $0x10] sm:$0xff]
          %v1000 = vld [vmem:[#allocation2 + $0x18] sm:$0xff]
          %v1001 = vld [vmem:[#allocation2 + $0x20] sm:$0xff]
          %v1002 = vld [vmem:[#allocation2 + $0x28] sm:$0xff]
          %v1003 = vld [vmem:[#allocation2 + $0x30] sm:$0xff]
          %v1004 = vld [vmem:[#allocation2 + $0x38] sm:$0xff]
          %v1005 = vld [vmem:[#allocation2 + $0x40] sm:$0xff]
          %v1006 = vld [vmem:[#allocation2 + $0x48] sm:$0xff]
          %v1007 = vld [vmem:[#allocation2 + $0x50] sm:$0xff]
          %v1008 = vld [vmem:[#allocation2 + $0x58] sm:$0xff]
          %v1009 = vld [vmem:[#allocation2 + $0x60] sm:$0xff]
          %v1010 = vld [vmem:[#allocation2 + $0x68] sm:$0xff]
          %v1011 = vld [vmem:[#allocation2 + $0x70] sm:$0xff]
          %v1012 = vld [vmem:[#allocation2 + $0x78] sm:$0xff]
          %v1013 = vpack.c.bf16 %v998, %v997
          %v1014 = vpack.c.bf16 %v1000, %v999
          %v1015 = vpack.c.bf16 %v1002, %v1001
          %v1016 = vpack.c.bf16 %v1004, %v1003
          %v1017 = vpack.c.bf16 %v1006, %v1005
          %v1018 = vpack.c.bf16 %v1008, %v1007
          %v1019 = vpack.c.bf16 %v1010, %v1009
          %v1020 = vpack.c.bf16 %v1012, %v1011
          %v1021 = vld [vmem:[#allocation3] sm:$0xff]
          %v1022 = vld [vmem:[#allocation3 + $0x8] sm:$0xff]
          %v1023 = vld [vmem:[#allocation3 + $0x10] sm:$0xff]
          %v1024 = vld [vmem:[#allocation3 + $0x18] sm:$0xff]
          %v1025 = vld [vmem:[#allocation3 + $0x20] sm:$0xff]
          %v1026 = vld [vmem:[#allocation3 + $0x28] sm:$0xff]
          %v1027 = vld [vmem:[#allocation3 + $0x30] sm:$0xff]
          %v1028 = vld [vmem:[#allocation3 + $0x38] sm:$0xff]
          %v1029 = vld [vmem:[#allocation3 + $0x40] sm:$0xff]
          %v1030 = vld [vmem:[#allocation3 + $0x48] sm:$0xff]
          %v1031 = vld [vmem:[#allocation3 + $0x50] sm:$0xff]
          %v1032 = vld [vmem:[#allocation3 + $0x58] sm:$0xff]
          %v1033 = vld [vmem:[#allocation3 + $0x60] sm:$0xff]
          %v1034 = vld [vmem:[#allocation3 + $0x68] sm:$0xff]
          %v1035 = vld [vmem:[#allocation3 + $0x70] sm:$0xff]
          %v1036 = vld [vmem:[#allocation3 + $0x78] sm:$0xff]
          %v1037 = vpack.c.bf16 %v1022, %v1021
          %v1038 = vpack.c.bf16 %v1024, %v1023
          %v1039 = vpack.c.bf16 %v1026, %v1025
          %v1040 = vpack.c.bf16 %v1028, %v1027
          %v1041 = vpack.c.bf16 %v1030, %v1029
          %v1042 = vpack.c.bf16 %v1032, %v1031
          %v1043 = vpack.c.bf16 %v1034, %v1033
          %v1044 = vpack.c.bf16 %v1036, %v1035
          %v1045 = vld [vmem:[#allocation9] sm:$0xf]
          %v1046 = vld [vmem:[#allocation9 + $0x4] sm:$0xf]
          %v1047 = vld [vmem:[#allocation9 + $0x8] sm:$0xf]
          %v1048 = vld [vmem:[#allocation9 + $0xc] sm:$0xf]
          %v1049 = vld [vmem:[#allocation9 + $0x10] sm:$0xf]
          %v1050 = vld [vmem:[#allocation9 + $0x14] sm:$0xf]
          %v1051 = vld [vmem:[#allocation9 + $0x18] sm:$0xf]
          %v1052 = vld [vmem:[#allocation9 + $0x1c] sm:$0xf]
          %v1053 = vld [vmem:[#allocation9 + $0x20] sm:$0xf]
          %v1054 = vld [vmem:[#allocation9 + $0x24] sm:$0xf]
          %v1055 = vld [vmem:[#allocation9 + $0x28] sm:$0xf]
          %v1056 = vld [vmem:[#allocation9 + $0x2c] sm:$0xf]
          %v1057 = vld [vmem:[#allocation9 + $0x30] sm:$0xf]
          %v1058 = vld [vmem:[#allocation9 + $0x34] sm:$0xf]
          %v1059 = vld [vmem:[#allocation9 + $0x38] sm:$0xf]
          %v1060 = vld [vmem:[#allocation9 + $0x3c] sm:$0xf]
          %v1077 = vunpack.c.l.b16 %v1045
          %v1078 = vunpack.c.l.b16 %v1046
          %v1079 = vunpack.c.l.b16 %v1047
          %v1080 = vunpack.c.l.b16 %v1048
          %v1081 = vunpack.c.l.b16 %v1049
          %v1082 = vunpack.c.l.b16 %v1050
          %v1083 = vunpack.c.l.b16 %v1051
          %v1084 = vunpack.c.l.b16 %v1052
          %v1085 = vunpack.c.l.b16 %v1053
          %v1086 = vunpack.c.l.b16 %v1054
          %v1087 = vunpack.c.l.b16 %v1055
          %v1088 = vunpack.c.l.b16 %v1056
          %v1089 = vunpack.c.l.b16 %v1057
          %v1090 = vunpack.c.l.b16 %v1058
          %v1091 = vunpack.c.l.b16 %v1059
          %v1092 = vunpack.c.l.b16 %v1060
          %v1093 = vpack.c.b16 %v1078, %v1077
          %v1094 = vpack.c.b16 %v1080, %v1079
          %v1095 = vpack.c.b16 %v1082, %v1081
          %v1096 = vpack.c.b16 %v1084, %v1083
          %v1097 = vpack.c.b16 %v1086, %v1085
          %v1098 = vpack.c.b16 %v1088, %v1087
          %v1099 = vpack.c.b16 %v1090, %v1089
          %v1100 = vpack.c.b16 %v1092, %v1091
          %1109 = vmatpush.bf16.msra.mxu0 %v1100
          %1110 = vmatpush.bf16.msra.mxu0 %v1099
          %1111 = vmatpush.bf16.msra.mxu0 %v1098
          %1112 = vmatpush.bf16.msra.mxu0 %v1097
          %1113 = vmatpush.bf16.msra.mxu0 %v1096
          %1114 = vmatpush.bf16.msra.mxu0 %v1095
          %1115 = vmatpush.bf16.msra.mxu0 %v1094
          %1116 = vmatpush.bf16.msra.mxu0 %v1093
          %1117 = vmatmul.bf16.gmra.mxu0 %v1037
          %v1118 = vpop.f32.mrf.mxu0
          %v1119 = vadd.f32 0.0, %v1118
          %v1120 = vpop.f32.mrf.mxu0
          %v1121 = vadd.f32 0.0, %v1120
          %1122 = vmatmul.bf16.gmra.mxu0 %v1038
          %v1123 = vpop.f32.mrf.mxu0
          %v1124 = vadd.f32 0.0, %v1123
          %v1125 = vpop.f32.mrf.mxu0
          %v1126 = vadd.f32 0.0, %v1125
          %1127 = vmatmul.bf16.gmra.mxu0 %v1039
          %v1128 = vpop.f32.mrf.mxu0
          %v1129 = vadd.f32 0.0, %v1128
          %v1130 = vpop.f32.mrf.mxu0
          %v1131 = vadd.f32 0.0, %v1130
          %1132 = vmatmul.bf16.gmra.mxu0 %v1040
          %v1133 = vpop.f32.mrf.mxu0
          %v1134 = vadd.f32 0.0, %v1133
          %v1135 = vpop.f32.mrf.mxu0
          %v1136 = vadd.f32 0.0, %v1135
          %1137 = vmatmul.bf16.gmra.mxu0 %v1041
          %v1138 = vpop.f32.mrf.mxu0
          %v1139 = vadd.f32 0.0, %v1138
          %v1140 = vpop.f32.mrf.mxu0
          %v1141 = vadd.f32 0.0, %v1140
          %1142 = vmatmul.bf16.gmra.mxu0 %v1042
          %v1143 = vpop.f32.mrf.mxu0
          %v1144 = vadd.f32 0.0, %v1143
          %v1145 = vpop.f32.mrf.mxu0
          %v1146 = vadd.f32 0.0, %v1145
          %1147 = vmatmul.bf16.gmra.mxu0 %v1043
          %v1148 = vpop.f32.mrf.mxu0
          %v1149 = vadd.f32 0.0, %v1148
          %v1150 = vpop.f32.mrf.mxu0
          %v1151 = vadd.f32 0.0, %v1150
          %1152 = vmatmul.bf16.gmra.mxu0 %v1044
          %v1153 = vpop.f32.mrf.mxu0
          %v1154 = vadd.f32 0.0, %v1153
          %v1155 = vpop.f32.mrf.mxu0
          %v1156 = vadd.f32 0.0, %v1155
          %1157 = vdwg.mxu0
          %v1158 = vmul.f32 %v1119, 0.5
          %v1159 = vmul.f32 %v1121, 0.5
          %v1160 = vmul.f32 %v1124, 0.5
          %v1161 = vmul.f32 %v1126, 0.5
          %v1162 = vmul.f32 %v1129, 0.5
          %v1163 = vmul.f32 %v1131, 0.5
          %v1164 = vmul.f32 %v1134, 0.5
          %v1165 = vmul.f32 %v1136, 0.5
          %v1166 = vmul.f32 %v1139, 0.5
          %v1167 = vmul.f32 %v1141, 0.5
          %v1168 = vmul.f32 %v1144, 0.5
          %v1169 = vmul.f32 %v1146, 0.5
          %v1170 = vmul.f32 %v1149, 0.5
          %v1171 = vmul.f32 %v1151, 0.5
          %v1172 = vmul.f32 %v1154, 0.5
          %v1173 = vmul.f32 %v1156, 0.5
          %v1174 = vld [vmem:[#allocation8] sm:$0xf]
          %v1175 = vld [vmem:[#allocation8 + $0x4] sm:$0xf]
          %v1176 = vld [vmem:[#allocation8 + $0x8] sm:$0xf]
          %v1177 = vld [vmem:[#allocation8 + $0xc] sm:$0xf]
          %v1178 = vld [vmem:[#allocation8 + $0x10] sm:$0xf]
          %v1179 = vld [vmem:[#allocation8 + $0x14] sm:$0xf]
          %v1180 = vld [vmem:[#allocation8 + $0x18] sm:$0xf]
          %v1181 = vld [vmem:[#allocation8 + $0x1c] sm:$0xf]
          %v1182 = vld [vmem:[#allocation8 + $0x20] sm:$0xf]
          %v1183 = vld [vmem:[#allocation8 + $0x24] sm:$0xf]
          %v1184 = vld [vmem:[#allocation8 + $0x28] sm:$0xf]
          %v1185 = vld [vmem:[#allocation8 + $0x2c] sm:$0xf]
          %v1186 = vld [vmem:[#allocation8 + $0x30] sm:$0xf]
          %v1187 = vld [vmem:[#allocation8 + $0x34] sm:$0xf]
          %v1188 = vld [vmem:[#allocation8 + $0x38] sm:$0xf]
          %v1189 = vld [vmem:[#allocation8 + $0x3c] sm:$0xf]
          %v1206 = vunpack.c.l.b16 %v1174
          %v1207 = vunpack.c.l.b16 %v1175
          %v1208 = vunpack.c.l.b16 %v1176
          %v1209 = vunpack.c.l.b16 %v1177
          %v1210 = vunpack.c.l.b16 %v1178
          %v1211 = vunpack.c.l.b16 %v1179
          %v1212 = vunpack.c.l.b16 %v1180
          %v1213 = vunpack.c.l.b16 %v1181
          %v1214 = vunpack.c.l.b16 %v1182
          %v1215 = vunpack.c.l.b16 %v1183
          %v1216 = vunpack.c.l.b16 %v1184
          %v1217 = vunpack.c.l.b16 %v1185
          %v1218 = vunpack.c.l.b16 %v1186
          %v1219 = vunpack.c.l.b16 %v1187
          %v1220 = vunpack.c.l.b16 %v1188
          %v1221 = vunpack.c.l.b16 %v1189
          %v1222 = vpack.c.b16 %v1207, %v1206
          %v1223 = vpack.c.b16 %v1209, %v1208
          %v1224 = vpack.c.b16 %v1211, %v1210
          %v1225 = vpack.c.b16 %v1213, %v1212
          %v1226 = vpack.c.b16 %v1215, %v1214
          %v1227 = vpack.c.b16 %v1217, %v1216
          %v1228 = vpack.c.b16 %v1219, %v1218
          %v1229 = vpack.c.b16 %v1221, %v1220
          %1238 = vmatpush.bf16.msra.mxu0 %v1229
          %1239 = vmatpush.bf16.msra.mxu0 %v1228
          %1240 = vmatpush.bf16.msra.mxu0 %v1227
          %1241 = vmatpush.bf16.msra.mxu0 %v1226
          %1242 = vmatpush.bf16.msra.mxu0 %v1225
          %1243 = vmatpush.bf16.msra.mxu0 %v1224
          %1244 = vmatpush.bf16.msra.mxu0 %v1223
          %1245 = vmatpush.bf16.msra.mxu0 %v1222
          %1246 = vmatmul.bf16.gmra.mxu0 %v1013
          %v1247 = vpop.f32.mrf.mxu0
          %v1248 = vadd.f32 0.0, %v1247
          %v1249 = vpop.f32.mrf.mxu0
          %v1250 = vadd.f32 0.0, %v1249
          %1251 = vmatmul.bf16.gmra.mxu0 %v1014
          %v1252 = vpop.f32.mrf.mxu0
          %v1253 = vadd.f32 0.0, %v1252
          %v1254 = vpop.f32.mrf.mxu0
          %v1255 = vadd.f32 0.0, %v1254
          %1256 = vmatmul.bf16.gmra.mxu0 %v1015
          %v1257 = vpop.f32.mrf.mxu0
          %v1258 = vadd.f32 0.0, %v1257
          %v1259 = vpop.f32.mrf.mxu0
          %v1260 = vadd.f32 0.0, %v1259
          %1261 = vmatmul.bf16.gmra.mxu0 %v1016
          %v1262 = vpop.f32.mrf.mxu0
          %v1263 = vadd.f32 0.0, %v1262
          %v1264 = vpop.f32.mrf.mxu0
          %v1265 = vadd.f32 0.0, %v1264
          %1266 = vmatmul.bf16.gmra.mxu0 %v1017
          %v1267 = vpop.f32.mrf.mxu0
          %v1268 = vadd.f32 0.0, %v1267
          %v1269 = vpop.f32.mrf.mxu0
          %v1270 = vadd.f32 0.0, %v1269
          %1271 = vmatmul.bf16.gmra.mxu0 %v1018
          %v1272 = vpop.f32.mrf.mxu0
          %v1273 = vadd.f32 0.0, %v1272
          %v1274 = vpop.f32.mrf.mxu0
          %v1275 = vadd.f32 0.0, %v1274
          %1276 = vmatmul.bf16.gmra.mxu0 %v1019
          %v1277 = vpop.f32.mrf.mxu0
          %v1278 = vadd.f32 0.0, %v1277
          %v1279 = vpop.f32.mrf.mxu0
          %v1280 = vadd.f32 0.0, %v1279
          %1281 = vmatmul.bf16.gmra.mxu0 %v1020
          %v1282 = vpop.f32.mrf.mxu0
          %v1283 = vadd.f32 0.0, %v1282
          %v1284 = vpop.f32.mrf.mxu0
          %v1285 = vadd.f32 0.0, %v1284
          %1286 = vdwg.mxu0
          %v1287 = vmul.f32 %v1248, 0.5
          %v1288 = vmul.f32 %v1250, 0.5
          %v1289 = vmul.f32 %v1253, 0.5
          %v1290 = vmul.f32 %v1255, 0.5
          %v1291 = vmul.f32 %v1258, 0.5
          %v1292 = vmul.f32 %v1260, 0.5
          %v1293 = vmul.f32 %v1263, 0.5
          %v1294 = vmul.f32 %v1265, 0.5
          %v1295 = vmul.f32 %v1268, 0.5
          %v1296 = vmul.f32 %v1270, 0.5
          %v1297 = vmul.f32 %v1273, 0.5
          %v1298 = vmul.f32 %v1275, 0.5
          %v1299 = vmul.f32 %v1278, 0.5
          %v1300 = vmul.f32 %v1280, 0.5
          %v1301 = vmul.f32 %v1283, 0.5
          %v1302 = vmul.f32 %v1285, 0.5
          %v1303 = vadd.f32 %v1158, %v1287
          %v1304 = vadd.f32 %v1159, %v1288
          %v1305 = vadd.f32 %v1160, %v1289
          %v1306 = vadd.f32 %v1161, %v1290
          %v1307 = vadd.f32 %v1162, %v1291
          %v1308 = vadd.f32 %v1163, %v1292
          %v1309 = vadd.f32 %v1164, %v1293
          %v1310 = vadd.f32 %v1165, %v1294
          %v1311 = vadd.f32 %v1166, %v1295
          %v1312 = vadd.f32 %v1167, %v1296
          %v1313 = vadd.f32 %v1168, %v1297
          %v1314 = vadd.f32 %v1169, %v1298
          %v1315 = vadd.f32 %v1170, %v1299
          %v1316 = vadd.f32 %v1171, %v1300
          %v1317 = vadd.f32 %v1172, %v1301
          %v1318 = vadd.f32 %v1173, %v1302
          %v1319 = vld [vmem:[%s563] sm:$0xf]
          %v1320 = vld [vmem:[%s563 + $0x4] sm:$0xf]
          %v1321 = vld [vmem:[%s563 + $0x8] sm:$0xf]
          %v1322 = vld [vmem:[%s563 + $0xc] sm:$0xf]
          %v1323 = vld [vmem:[%s563 + $0x10] sm:$0xf]
          %v1324 = vld [vmem:[%s563 + $0x14] sm:$0xf]
          %v1325 = vld [vmem:[%s563 + $0x18] sm:$0xf]
          %v1326 = vld [vmem:[%s563 + $0x1c] sm:$0xf]
          %v1327 = vld [vmem:[%s563 + $0x20] sm:$0xf]
          %v1328 = vld [vmem:[%s563 + $0x24] sm:$0xf]
          %v1329 = vld [vmem:[%s563 + $0x28] sm:$0xf]
          %v1330 = vld [vmem:[%s563 + $0x2c] sm:$0xf]
          %v1331 = vld [vmem:[%s563 + $0x30] sm:$0xf]
          %v1332 = vld [vmem:[%s563 + $0x34] sm:$0xf]
          %v1333 = vld [vmem:[%s563 + $0x38] sm:$0xf]
          %v1334 = vld [vmem:[%s563 + $0x3c] sm:$0xf]
          %v1335 = vld [vmem:[#allocation11] sm:$0xf]
          %v1336 = vld [vmem:[#allocation11 + $0x4] sm:$0xf]
          %v1337 = vld [vmem:[#allocation11 + $0x8] sm:$0xf]
          %v1338 = vld [vmem:[#allocation11 + $0xc] sm:$0xf]
          %v1339 = vld [vmem:[#allocation11 + $0x10] sm:$0xf]
          %v1340 = vld [vmem:[#allocation11 + $0x14] sm:$0xf]
          %v1341 = vld [vmem:[#allocation11 + $0x18] sm:$0xf]
          %v1342 = vld [vmem:[#allocation11 + $0x1c] sm:$0xf]
          %v1343 = vld [vmem:[#allocation11 + $0x20] sm:$0xf]
          %v1344 = vld [vmem:[#allocation11 + $0x24] sm:$0xf]
          %v1345 = vld [vmem:[#allocation11 + $0x28] sm:$0xf]
          %v1346 = vld [vmem:[#allocation11 + $0x2c] sm:$0xf]
          %v1347 = vld [vmem:[#allocation11 + $0x30] sm:$0xf]
          %v1348 = vld [vmem:[#allocation11 + $0x34] sm:$0xf]
          %v1349 = vld [vmem:[#allocation11 + $0x38] sm:$0xf]
          %v1350 = vld [vmem:[#allocation11 + $0x3c] sm:$0xf]
          %v1367 = vunpack.c.l.b16 %v1319
          %v1368 = vunpack.c.l.b16 %v1320
          %v1369 = vunpack.c.l.b16 %v1321
          %v1370 = vunpack.c.l.b16 %v1322
          %v1371 = vunpack.c.l.b16 %v1323
          %v1372 = vunpack.c.l.b16 %v1324
          %v1373 = vunpack.c.l.b16 %v1325
          %v1374 = vunpack.c.l.b16 %v1326
          %v1375 = vunpack.c.l.b16 %v1327
          %v1376 = vunpack.c.l.b16 %v1328
          %v1377 = vunpack.c.l.b16 %v1329
          %v1378 = vunpack.c.l.b16 %v1330
          %v1379 = vunpack.c.l.b16 %v1331
          %v1380 = vunpack.c.l.b16 %v1332
          %v1381 = vunpack.c.l.b16 %v1333
          %v1382 = vunpack.c.l.b16 %v1334
          %v1383 = vpack.c.b16 %v1368, %v1367
          %v1384 = vpack.c.b16 %v1370, %v1369
          %v1385 = vpack.c.b16 %v1372, %v1371
          %v1386 = vpack.c.b16 %v1374, %v1373
          %v1387 = vpack.c.b16 %v1376, %v1375
          %v1388 = vpack.c.b16 %v1378, %v1377
          %v1389 = vpack.c.b16 %v1380, %v1379
          %v1390 = vpack.c.b16 %v1382, %v1381
          %v1415 = vunpack.c.l.b16 %v1335
          %v1416 = vunpack.c.l.b16 %v1336
          %v1417 = vunpack.c.l.b16 %v1337
          %v1418 = vunpack.c.l.b16 %v1338
          %v1419 = vunpack.c.l.b16 %v1339
          %v1420 = vunpack.c.l.b16 %v1340
          %v1421 = vunpack.c.l.b16 %v1341
          %v1422 = vunpack.c.l.b16 %v1342
          %v1423 = vunpack.c.l.b16 %v1343
          %v1424 = vunpack.c.l.b16 %v1344
          %v1425 = vunpack.c.l.b16 %v1345
          %v1426 = vunpack.c.l.b16 %v1346
          %v1427 = vunpack.c.l.b16 %v1347
          %v1428 = vunpack.c.l.b16 %v1348
          %v1429 = vunpack.c.l.b16 %v1349
          %v1430 = vunpack.c.l.b16 %v1350
          %v1431 = vpack.c.b16 %v1416, %v1415
          %v1432 = vpack.c.b16 %v1418, %v1417
          %v1433 = vpack.c.b16 %v1420, %v1419
          %v1434 = vpack.c.b16 %v1422, %v1421
          %v1435 = vpack.c.b16 %v1424, %v1423
          %v1436 = vpack.c.b16 %v1426, %v1425
          %v1437 = vpack.c.b16 %v1428, %v1427
          %v1438 = vpack.c.b16 %v1430, %v1429
          %1447 = vmatpush.bf16.msra.mxu0 %v1438
          %1448 = vmatpush.bf16.msra.mxu0 %v1437
          %1449 = vmatpush.bf16.msra.mxu0 %v1436
          %1450 = vmatpush.bf16.msra.mxu0 %v1435
          %1451 = vmatpush.bf16.msra.mxu0 %v1434
          %1452 = vmatpush.bf16.msra.mxu0 %v1433
          %1453 = vmatpush.bf16.msra.mxu0 %v1432
          %1454 = vmatpush.bf16.msra.mxu0 %v1431
          %1455 = vmatmul.bf16.gmra.mxu0 %v1383
          %v1456 = vpop.f32.mrf.mxu0
          %v1457 = vadd.f32 0.0, %v1456
          %v1458 = vpop.f32.mrf.mxu0
          %v1459 = vadd.f32 0.0, %v1458
          %1460 = vmatmul.bf16.gmra.mxu0 %v1384
          %v1461 = vpop.f32.mrf.mxu0
          %v1462 = vadd.f32 0.0, %v1461
          %v1463 = vpop.f32.mrf.mxu0
          %v1464 = vadd.f32 0.0, %v1463
          %1465 = vmatmul.bf16.gmra.mxu0 %v1385
          %v1466 = vpop.f32.mrf.mxu0
          %v1467 = vadd.f32 0.0, %v1466
          %v1468 = vpop.f32.mrf.mxu0
          %v1469 = vadd.f32 0.0, %v1468
          %1470 = vmatmul.bf16.gmra.mxu0 %v1386
          %v1471 = vpop.f32.mrf.mxu0
          %v1472 = vadd.f32 0.0, %v1471
          %v1473 = vpop.f32.mrf.mxu0
          %v1474 = vadd.f32 0.0, %v1473
          %1475 = vmatmul.bf16.gmra.mxu0 %v1387
          %v1476 = vpop.f32.mrf.mxu0
          %v1477 = vadd.f32 0.0, %v1476
          %v1478 = vpop.f32.mrf.mxu0
          %v1479 = vadd.f32 0.0, %v1478
          %1480 = vmatmul.bf16.gmra.mxu0 %v1388
          %v1481 = vpop.f32.mrf.mxu0
          %v1482 = vadd.f32 0.0, %v1481
          %v1483 = vpop.f32.mrf.mxu0
          %v1484 = vadd.f32 0.0, %v1483
          %1485 = vmatmul.bf16.gmra.mxu0 %v1389
          %v1486 = vpop.f32.mrf.mxu0
          %v1487 = vadd.f32 0.0, %v1486
          %v1488 = vpop.f32.mrf.mxu0
          %v1489 = vadd.f32 0.0, %v1488
          %1490 = vmatmul.bf16.gmra.mxu0 %v1390
          %v1491 = vpop.f32.mrf.mxu0
          %v1492 = vadd.f32 0.0, %v1491
          %v1493 = vpop.f32.mrf.mxu0
          %v1494 = vadd.f32 0.0, %v1493
          %1495 = vdwg.mxu0
          %v1496 = vadd.f32 %v1303, %v1457
          %v1497 = vadd.f32 %v1304, %v1459
          %v1498 = vadd.f32 %v1305, %v1462
          %v1499 = vadd.f32 %v1306, %v1464
          %v1500 = vadd.f32 %v1307, %v1467
          %v1501 = vadd.f32 %v1308, %v1469
          %v1502 = vadd.f32 %v1309, %v1472
          %v1503 = vadd.f32 %v1310, %v1474
          %v1504 = vadd.f32 %v1311, %v1477
          %v1505 = vadd.f32 %v1312, %v1479
          %v1506 = vadd.f32 %v1313, %v1482
          %v1507 = vadd.f32 %v1314, %v1484
          %v1508 = vadd.f32 %v1315, %v1487
          %v1509 = vadd.f32 %v1316, %v1489
          %v1510 = vadd.f32 %v1317, %v1492
          %v1511 = vadd.f32 %v1318, %v1494
          %v1512 = vld [vmem:[%s7] sm:$0x1]
          %v1514 = vperm.slane %v1512, 0
          %v1516 = vadd.f32 %v1496, %v1514
          %v1517 = vadd.f32 %v1497, %v1514
          %v1518 = vadd.f32 %v1498, %v1514
          %v1519 = vadd.f32 %v1499, %v1514
          %v1520 = vadd.f32 %v1500, %v1514
          %v1521 = vadd.f32 %v1501, %v1514
          %v1522 = vadd.f32 %v1502, %v1514
          %v1523 = vadd.f32 %v1503, %v1514
          %v1524 = vadd.f32 %v1504, %v1514
          %v1525 = vadd.f32 %v1505, %v1514
          %v1526 = vadd.f32 %v1506, %v1514
          %v1527 = vadd.f32 %v1507, %v1514
          %v1528 = vadd.f32 %v1508, %v1514
          %v1529 = vadd.f32 %v1509, %v1514
          %v1530 = vadd.f32 %v1510, %v1514
          %v1531 = vadd.f32 %v1511, %v1514
          %v1532 = vpack.c.bf16 %v1517, %v1516
          %v1533 = vpack.c.bf16 %v1519, %v1518
          %v1534 = vpack.c.bf16 %v1521, %v1520
          %v1535 = vpack.c.bf16 %v1523, %v1522
          %v1536 = vpack.c.bf16 %v1525, %v1524
          %v1537 = vpack.c.bf16 %v1527, %v1526
          %v1538 = vpack.c.bf16 %v1529, %v1528
          %v1539 = vpack.c.bf16 %v1531, %v1530
          %v1540 = vld [vmem:[#allocation12] sm:$0xf]
          %v1541 = vld [vmem:[#allocation12 + $0x4] sm:$0xf]
          %v1542 = vld [vmem:[#allocation12 + $0x8] sm:$0xf]
          %v1543 = vld [vmem:[#allocation12 + $0xc] sm:$0xf]
          %v1544 = vld [vmem:[#allocation12 + $0x10] sm:$0xf]
          %v1545 = vld [vmem:[#allocation12 + $0x14] sm:$0xf]
          %v1546 = vld [vmem:[#allocation12 + $0x18] sm:$0xf]
          %v1547 = vld [vmem:[#allocation12 + $0x1c] sm:$0xf]
          %v1548 = vld [vmem:[#allocation12 + $0x20] sm:$0xf]
          %v1549 = vld [vmem:[#allocation12 + $0x24] sm:$0xf]
          %v1550 = vld [vmem:[#allocation12 + $0x28] sm:$0xf]
          %v1551 = vld [vmem:[#allocation12 + $0x2c] sm:$0xf]
          %v1552 = vld [vmem:[#allocation12 + $0x30] sm:$0xf]
          %v1553 = vld [vmem:[#allocation12 + $0x34] sm:$0xf]
          %v1554 = vld [vmem:[#allocation12 + $0x38] sm:$0xf]
          %v1555 = vld [vmem:[#allocation12 + $0x3c] sm:$0xf]
          %v1556 = vld [vmem:[#allocation14] sm:$0x1]
          %v1558 = vperm.slane %v1556, 0
          %v1576 = vunpack.c.l.b16 %v1540
          %v1577 = vunpack.c.l.b16 %v1541
          %v1578 = vunpack.c.l.b16 %v1542
          %v1579 = vunpack.c.l.b16 %v1543
          %v1580 = vunpack.c.l.b16 %v1544
          %v1581 = vunpack.c.l.b16 %v1545
          %v1582 = vunpack.c.l.b16 %v1546
          %v1583 = vunpack.c.l.b16 %v1547
          %v1584 = vunpack.c.l.b16 %v1548
          %v1585 = vunpack.c.l.b16 %v1549
          %v1586 = vunpack.c.l.b16 %v1550
          %v1587 = vunpack.c.l.b16 %v1551
          %v1588 = vunpack.c.l.b16 %v1552
          %v1589 = vunpack.c.l.b16 %v1553
          %v1590 = vunpack.c.l.b16 %v1554
          %v1591 = vunpack.c.l.b16 %v1555
          %v1592 = vpack.c.b16 %v1577, %v1576
          %v1593 = vpack.c.b16 %v1579, %v1578
          %v1594 = vpack.c.b16 %v1581, %v1580
          %v1595 = vpack.c.b16 %v1583, %v1582
          %v1596 = vpack.c.b16 %v1585, %v1584
          %v1597 = vpack.c.b16 %v1587, %v1586
          %v1598 = vpack.c.b16 %v1589, %v1588
          %v1599 = vpack.c.b16 %v1591, %v1590
          %1608 = vmatpush.bf16.msra.mxu0 %v1599
          %1609 = vmatpush.bf16.msra.mxu0 %v1598
          %1610 = vmatpush.bf16.msra.mxu0 %v1597
          %1611 = vmatpush.bf16.msra.mxu0 %v1596
          %1612 = vmatpush.bf16.msra.mxu0 %v1595
          %1613 = vmatpush.bf16.msra.mxu0 %v1594
          %1614 = vmatpush.bf16.msra.mxu0 %v1593
          %1615 = vmatpush.bf16.msra.mxu0 %v1592
          %1616 = vmatmul.bf16.gmra.mxu0 %v1532
          %v1617 = vpop.f32.mrf.mxu0
          %v1618 = vadd.f32 %v1558, %v1617
          %v1619 = vpop.f32.mrf.mxu0
          %v1620 = vadd.f32 %v1558, %v1619
          %1621 = vmatmul.bf16.gmra.mxu0 %v1533
          %v1622 = vpop.f32.mrf.mxu0
          %v1623 = vadd.f32 %v1558, %v1622
          %v1624 = vpop.f32.mrf.mxu0
          %v1625 = vadd.f32 %v1558, %v1624
          %1626 = vmatmul.bf16.gmra.mxu0 %v1534
          %v1627 = vpop.f32.mrf.mxu0
          %v1628 = vadd.f32 %v1558, %v1627
          %v1629 = vpop.f32.mrf.mxu0
          %v1630 = vadd.f32 %v1558, %v1629
          %1631 = vmatmul.bf16.gmra.mxu0 %v1535
          %v1632 = vpop.f32.mrf.mxu0
          %v1633 = vadd.f32 %v1558, %v1632
          %v1634 = vpop.f32.mrf.mxu0
          %v1635 = vadd.f32 %v1558, %v1634
          %1636 = vmatmul.bf16.gmra.mxu0 %v1536
          %v1637 = vpop.f32.mrf.mxu0
          %v1638 = vadd.f32 %v1558, %v1637
          %v1639 = vpop.f32.mrf.mxu0
          %v1640 = vadd.f32 %v1558, %v1639
          %1641 = vmatmul.bf16.gmra.mxu0 %v1537
          %v1642 = vpop.f32.mrf.mxu0
          %v1643 = vadd.f32 %v1558, %v1642
          %v1644 = vpop.f32.mrf.mxu0
          %v1645 = vadd.f32 %v1558, %v1644
          %1646 = vmatmul.bf16.gmra.mxu0 %v1538
          %v1647 = vpop.f32.mrf.mxu0
          %v1648 = vadd.f32 %v1558, %v1647
          %v1649 = vpop.f32.mrf.mxu0
          %v1650 = vadd.f32 %v1558, %v1649
          %1651 = vmatmul.bf16.gmra.mxu0 %v1539
          %v1652 = vpop.f32.mrf.mxu0
          %v1653 = vadd.f32 %v1558, %v1652
          %v1654 = vpop.f32.mrf.mxu0
          %v1655 = vadd.f32 %v1558, %v1654
          %1656 = vdwg.mxu0
          %v1657 = vpack.c.bf16 %v1618, %v1618
          %v1658 = vpack.c.bf16 %v1620, %v1620
          %v1659 = vpack.c.bf16 %v1623, %v1623
          %v1660 = vpack.c.bf16 %v1625, %v1625
          %v1661 = vpack.c.bf16 %v1628, %v1628
          %v1662 = vpack.c.bf16 %v1630, %v1630
          %v1663 = vpack.c.bf16 %v1633, %v1633
          %v1664 = vpack.c.bf16 %v1635, %v1635
          %v1665 = vpack.c.bf16 %v1638, %v1638
          %v1666 = vpack.c.bf16 %v1640, %v1640
          %v1667 = vpack.c.bf16 %v1643, %v1643
          %v1668 = vpack.c.bf16 %v1645, %v1645
          %v1669 = vpack.c.bf16 %v1648, %v1648
          %v1670 = vpack.c.bf16 %v1650, %v1650
          %v1671 = vpack.c.bf16 %v1653, %v1653
          %v1672 = vpack.c.bf16 %v1655, %v1655
          %1673 = vst [vmem:[%s569] sm:$0xf] %v1657
          %1674 = vst [vmem:[%s569 + $0x4] sm:$0xf] %v1658
          %1675 = vst [vmem:[%s569 + $0x8] sm:$0xf] %v1659
          %1676 = vst [vmem:[%s569 + $0xc] sm:$0xf] %v1660
          %1677 = vst [vmem:[%s569 + $0x10] sm:$0xf] %v1661
          %1678 = vst [vmem:[%s569 + $0x14] sm:$0xf] %v1662
          %1679 = vst [vmem:[%s569 + $0x18] sm:$0xf] %v1663
          %1680 = vst [vmem:[%s569 + $0x1c] sm:$0xf] %v1664
          %1681 = vst [vmem:[%s569 + $0x20] sm:$0xf] %v1665
          %1682 = vst [vmem:[%s569 + $0x24] sm:$0xf] %v1666
          %1683 = vst [vmem:[%s569 + $0x28] sm:$0xf] %v1667
          %1684 = vst [vmem:[%s569 + $0x2c] sm:$0xf] %v1668
          %1685 = vst [vmem:[%s569 + $0x30] sm:$0xf] %v1669
          %1686 = vst [vmem:[%s569 + $0x34] sm:$0xf] %v1670
          %1687 = vst [vmem:[%s569 + $0x38] sm:$0xf] %v1671
          %1688 = vst [vmem:[%s569 + $0x3c] sm:$0xf] %v1672
        $region96: #{dirgnn_forward.4} parent=59 // pred_fallthru
          _
        %s1689 = smul.u32 16, %s33
        %p1690 = scmp.lt.s32.totalorder %s1689, 31
        %s1691 = scalar_select %p1690, %s1689, 31
        %s1692 = smul.addr %s1691, 4
        %s1693 = scalar_lea.vmem %s10, %s1692
        // Predicated region
        $region97: #{dirgnn_forward.4} parent=59 // pred_check
          %p1694 = pneg %p293
        $region98: #{dirgnn_forward.4} parent=59 // pred_check_branch
          %1696 = sbr.rel (%p1694) target = $region100
        $region99: #{dirgnn_forward.4} parent=59 // pred_region
          %s1697 = smul.u32 16, %s33
        $region100: #{dirgnn_forward.4} parent=59 // pred_fallthru
          _
      $region60: #{dirgnn_forward.4} parent=5 // pred_fallthru
        _
      %p1698 = scmp.le.s32.totalorder 2, %s24
      // Predicated region
      $region101: #{dirgnn_forward.4} parent=5 // pred_check
        %p1699 = pneg %p1698
      $region102: #{dirgnn_forward.4} parent=5 // pred_check_branch
        %1701 = sbr.rel (%p1699) target = $region104
      $region103: #{dirgnn_forward.4} parent=5 // pred_region
        %s1702 = ssub.s32 %s24, 2
        // Predicated region
        $region105: #{dirgnn_forward.4} parent=103 // pred_check
          %p1703 = pneg %p299
        $region106: #{dirgnn_forward.4} parent=103 // pred_check_branch
          %1705 = sbr.rel (%p1703) target = $region108
        $region107: #{dirgnn_forward.4} parent=103 // pred_region
          %s1706 = smul.u32 16, %s35
          %p1707 = scmp.lt.s32.totalorder %s1706, 31
          %s1708 = scalar_select %p1707, %s1706, 31
          %s1709 = smul.addr %s1708, 4
          %s1710 = scalar_lea.vmem %s10, %s1709
        $region108: #{dirgnn_forward.4} parent=103 // pred_fallthru
          _
      $region104: #{dirgnn_forward.4} parent=5 // pred_fallthru
        _
    $region6: #{dirgnn_forward.4} parent=1 // loop_footer
      %s28 = sadd.s32 1, %s24
    $region7: #{dirgnn_forward.4} parent=1 // loop_footer_branch
      %23 = sbr.rel target = $region3
    $region8: #{dirgnn_forward.4} parent=1 // loop_exit
      _
    %1711 = vsyncpa [#allocation5], 1
    %s1712 = scalar_lea.sflag [#allocation5], 1
    %1713 = vsyncpa %s1712, 1
    %1714 = vsyncpa [#allocation7], 1
    %s1715 = scalar_lea.sflag [#allocation7], 1
    %1716 = vsyncpa %s1715, 1
    %1717 = vsyncpa [#allocation10], 1
    %1718 = vsyncpa [#allocation13], 1

// kernel: dirgnn_forward.5
$region0: #{dirgnn_forward.5}
  #allocation0 [shape = 'u32[]', space=smem, size = 0x4, offset = 0x4, fixed_abs, tag = 'smem constant byte address 0x4 - core index']
  #allocation1 [shape = 'u32[72,128]{1,0:T(1,128)}', space=vmem, size = 0x9000, scoped, tag = 'internal scratch']
  #allocation2 [shape = 'f32[128,128]{1,0:T(8,128)}', space=vmem, size = 0x10000, scoped, tag = 'scratch operand']
  #allocation3 [shape = 'f32[128,128]{1,0:T(8,128)}', space=vmem, size = 0x10000, scoped, tag = 'scratch operand']
  %s0 = inlined_call_operand.hbm [shape: bf16[256,256], index: 0, kind: input, shape index: {}]
  %s1 = inlined_call_operand.hbm [shape: bf16[256,256], index: 1, kind: input, shape index: {}]
  %s2 = inlined_call_operand.vmem [shape: bf16[256,128], index: 2, kind: input, shape index: {}, may-alias: {2,3}]
  %s3 = inlined_call_operand.vmem [shape: bf16[256,128], index: 3, kind: input, shape index: {}, may-alias: {2,3}]
  %s4 = inlined_call_operand.hbm [shape: bf16[128,128], index: 4, kind: input, shape index: {}]
  %s5 = inlined_call_operand.hbm [shape: bf16[128,128], index: 5, kind: input, shape index: {}]
  %s6 = inlined_call_operand.hbm [shape: bf16[128,128], index: 6, kind: input, shape index: {}]
  %s7 = inlined_call_operand.vmem [shape: f32[1,128], index: 7, kind: input, shape index: {}]
  %s8 = inlined_call_operand.hbm [shape: f32[256,128], index: 8, kind: output, shape index: {}]
  %s9 = sld [smem:[#allocation0]]
  $region93: #{dirgnn_forward.5} parent=0
    _
  %s11 = ssub.s32 1, %s9
  %s12 = scalar_select 0, %s11, %s9
  $region1: #{dirgnn_forward.5} parent=0
    #allocation4 [shape = 'u8[65536]{0}', space=vmem, size = 0x10000, scoped, tag = 'input window, operand 0']
    #allocation5 [shape = 's32[2]{0}', space=sflag, size = 0x8, scoped, tag = 'scoped memory for dirgnn_forward.5']
    #allocation6 [shape = 's32[2]{0}', space=sflag, size = 0x8, scoped, tag = 'scoped memory for dirgnn_forward.5']
    #allocation7 [shape = 'u8[65536]{0}', space=vmem, size = 0x10000, scoped, tag = 'input window, operand 1']
    #allocation8 [shape = 's32[2]{0}', space=sflag, size = 0x8, scoped, tag = 'scoped memory for dirgnn_forward.5']
    #allocation9 [shape = 'u8[32768]{0}', space=vmem, size = 0x8000, scoped, tag = 'input window, operand 4, single buffered']
    #allocation10 [shape = 'u8[32768]{0}', space=vmem, size = 0x8000, scoped, tag = 'input window, operand 5, single buffered']
    #allocation11 [shape = 's32[1]{0}', space=sflag, size = 0x4, scoped, tag = 'scoped memory for dirgnn_forward.5']
    #allocation12 [shape = 'u8[32768]{0}', space=vmem, size = 0x8000, scoped, tag = 'input window, operand 6, single buffered']
    #allocation13 [shape = 'u8[131072]{0}', space=vmem, size = 0x20000, scoped, tag = 'output window, operand 0']
    %13 = vsyncpa [#allocation5], 0
    %s14 = scalar_lea.sflag [#allocation5], 1
    %15 = vsyncpa %s14, 0
    %16 = vsyncpa [#allocation8], 0
    %s17 = scalar_lea.sflag [#allocation8], 1
    %18 = vsyncpa %s17, 0
    %19 = vsyncpa [#allocation11], 0
    %20 = vsyncpa [#allocation6], 0
    %s21 = scalar_lea.sflag [#allocation6], 1
    %22 = vsyncpa %s21, 0
    loop: start=0, step=1, limit=6
    $region2: #{dirgnn_forward.5} parent=1 // loop_pre_header
      _
    $region3: #{dirgnn_forward.5} parent=1 // loop_header
      %s24 = sphi 0, %s28
      %p25 = scmp.ge.s32.totalorder %s24, 6
      %s31 = sphi 0, %s43
      %s32 = sphi 0, %s39
      %s33 = sphi 0, %s31
      %s34 = sphi 0, %s32
      %s35 = sphi 0, %s33
      %s36 = sphi 0, %s34
      %s48 = sphi 0, %s50
      %s51 = sphi 0, %s48
      %s52 = sphi 0, %s51
      %s68 = sphi 0, %s52
      %s76 = sphi 0, %s78
      %s79 = sphi 0, %s76
      %s80 = sphi 0, %s79
      %s96 = sphi 0, %s80
      %s102 = sphi 0, %s104
      %s105 = sphi 0, %s102
      %s106 = sphi 0, %s105
      %s122 = sphi 0, %s106
      %s128 = sphi 0, %s130
      %s131 = sphi 0, %s128
      %s132 = sphi 0, %s131
      %s148 = sphi 0, %s132
      %s152 = sphi 0, %s152
      %s154 = sphi 0, %s152
      %s155 = sphi 0, %s154
      %s169 = sphi 0, %s155
      %s173 = sphi 0, %s173
      %s175 = sphi 0, %s173
      %s176 = sphi 0, %s175
      %s190 = sphi 0, %s176
      %s194 = sphi 0, %s194
      %s196 = sphi 0, %s194
      %s197 = sphi 0, %s196
      %s211 = sphi 0, %s197
      %s215 = sphi 0, %s215
      %s217 = sphi 0, %s215
      %s218 = sphi 0, %s217
      %s232 = sphi 0, %s218
      %s238 = sphi 0, %s240
      %s241 = sphi 0, %s238
      %s242 = sphi 0, %s241
      %s258 = sphi 0, %s242
    $region4: #{dirgnn_forward.5} parent=1 // loop_header_branch
      %27 = sbr.rel (%p25) target = $region8
    $region5: #{dirgnn_forward.5} parent=1 // loop_body
      %s29 = ssub.s32 %s24, 1
      %s30 = ssub.s32 %s24, 2
      %s37 = sadd.s32 1, %s32
      %p38 = scmp.ge.s32.totalorder %s37, 2
      %s39 = scalar_select %p38, 0, %s37
      %s40 = sadd.s32 1, %s31
      %s41 = scalar_select %p38, %s40, %s31
      %p42 = scmp.ge.s32.totalorder %s41, 2
      %s43 = scalar_select %p42, 0, %s41
      %s44 = ssub.s32 %s31, %s43
      %s45 = ssub.s32 %s32, %s39
      %s46 = sor.u32 %s44, %s45
      %p47 = scmp.eq.s32.totalorder %s46, 0
      %s49 = sadd.s32 %s48, 1
      %s50 = scalar_select %p47, %s48, %s49
      %p53 = pneg %p47
      %p54 = scmp.eq.s32.totalorder %s24, 3
      %p55 = por %p53, %p54
      %p56 = scmp.ne.s32.totalorder %s48, %s51
      %p57 = scmp.eq.s32.totalorder %s24, 0
      %p58 = por %p56, %p57
      %p59 = scmp.ne.s32.totalorder %s48, %s51
      %p60 = scmp.eq.s32.totalorder %s29, 3
      %p61 = por %p59, %p60
      %p62 = scmp.ne.s32.totalorder %s51, %s52
      %p63 = scmp.eq.s32.totalorder %s29, 0
      %p64 = por %p62, %p63
      %p65 = scmp.ne.s32.totalorder %s51, %s52
      %p66 = scmp.eq.s32.totalorder %s30, 3
      %p67 = por %p65, %p66
      %p69 = scmp.ne.s32.totalorder %s52, %s68
      %p70 = scmp.eq.s32.totalorder %s30, 0
      %p71 = por %p69, %p70
      %s72 = ssub.s32 %s31, %s43
      %s73 = ssub.s32 %s32, %s39
      %s74 = sor.u32 %s72, %s73
      %p75 = scmp.eq.s32.totalorder %s74, 0
      %s77 = sadd.s32 %s76, 1
      %s78 = scalar_select %p75, %s76, %s77
      %p81 = pneg %p75
      %p82 = scmp.eq.s32.totalorder %s24, 3
      %p83 = por %p81, %p82
      %p84 = scmp.ne.s32.totalorder %s76, %s79
      %p85 = scmp.eq.s32.totalorder %s24, 0
      %p86 = por %p84, %p85
      %p87 = scmp.ne.s32.totalorder %s76, %s79
      %p88 = scmp.eq.s32.totalorder %s29, 3
      %p89 = por %p87, %p88
      %p90 = scmp.ne.s32.totalorder %s79, %s80
      %p91 = scmp.eq.s32.totalorder %s29, 0
      %p92 = por %p90, %p91
      %p93 = scmp.ne.s32.totalorder %s79, %s80
      %p94 = scmp.eq.s32.totalorder %s30, 3
      %p95 = por %p93, %p94
      %p97 = scmp.ne.s32.totalorder %s80, %s96
      %p98 = scmp.eq.s32.totalorder %s30, 0
      %p99 = por %p97, %p98
      %s100 = ssub.s32 %s32, %s39
      %p101 = scmp.eq.s32.totalorder %s100, 0
      %s103 = sadd.s32 %s102, 1
      %s104 = scalar_select %p101, %s102, %s103
      %p107 = pneg %p101
      %p108 = scmp.eq.s32.totalorder %s24, 3
      %p109 = por %p107, %p108
      %p110 = scmp.ne.s32.totalorder %s102, %s105
      %p111 = scmp.eq.s32.totalorder %s24, 0
      %p112 = por %p110, %p111
      %p113 = scmp.ne.s32.totalorder %s102, %s105
      %p114 = scmp.eq.s32.totalorder %s29, 3
      %p115 = por %p113, %p114
      %p116 = scmp.ne.s32.totalorder %s105, %s106
      %p117 = scmp.eq.s32.totalorder %s29, 0
      %p118 = por %p116, %p117
      %p119 = scmp.ne.s32.totalorder %s105, %s106
      %p120 = scmp.eq.s32.totalorder %s30, 3
      %p121 = por %p119, %p120
      %p123 = scmp.ne.s32.totalorder %s106, %s122
      %p124 = scmp.eq.s32.totalorder %s30, 0
      %p125 = por %p123, %p124
      %s126 = ssub.s32 %s31, %s43
      %p127 = scmp.eq.s32.totalorder %s126, 0
      %s129 = sadd.s32 %s128, 1
      %s130 = scalar_select %p127, %s128, %s129
      %p133 = pneg %p127
      %p134 = scmp.eq.s32.totalorder %s24, 3
      %p135 = por %p133, %p134
      %p136 = scmp.ne.s32.totalorder %s128, %s131
      %p137 = scmp.eq.s32.totalorder %s24, 0
      %p138 = por %p136, %p137
      %p139 = scmp.ne.s32.totalorder %s128, %s131
      %p140 = scmp.eq.s32.totalorder %s29, 3
      %p141 = por %p139, %p140
      %p142 = scmp.ne.s32.totalorder %s131, %s132
      %p143 = scmp.eq.s32.totalorder %s29, 0
      %p144 = por %p142, %p143
      %p145 = scmp.ne.s32.totalorder %s131, %s132
      %p146 = scmp.eq.s32.totalorder %s30, 3
      %p147 = por %p145, %p146
      %p149 = scmp.ne.s32.totalorder %s132, %s148
      %p150 = scmp.eq.s32.totalorder %s30, 0
      %p151 = por %p149, %p150
      %s153 = sadd.s32 %s152, 1
      %p156 = scmp.eq.s32.totalorder %s24, 3
      %p157 = scmp.ne.s32.totalorder %s152, %s154
      %p158 = scmp.eq.s32.totalorder %s24, 0
      %p159 = por %p157, %p158
      %p160 = scmp.ne.s32.totalorder %s152, %s154
      %p161 = scmp.eq.s32.totalorder %s29, 3
      %p162 = por %p160, %p161
      %p163 = scmp.ne.s32.totalorder %s154, %s155
      %p164 = scmp.eq.s32.totalorder %s29, 0
      %p165 = por %p163, %p164
      %p166 = scmp.ne.s32.totalorder %s154, %s155
      %p167 = scmp.eq.s32.totalorder %s30, 3
      %p168 = por %p166, %p167
      %p170 = scmp.ne.s32.totalorder %s155, %s169
      %p171 = scmp.eq.s32.totalorder %s30, 0
      %p172 = por %p170, %p171
      %s174 = sadd.s32 %s173, 1
      %p177 = scmp.eq.s32.totalorder %s24, 3
      %p178 = scmp.ne.s32.totalorder %s173, %s175
      %p179 = scmp.eq.s32.totalorder %s24, 0
      %p180 = por %p178, %p179
      %p181 = scmp.ne.s32.totalorder %s173, %s175
      %p182 = scmp.eq.s32.totalorder %s29, 3
      %p183 = por %p181, %p182
      %p184 = scmp.ne.s32.totalorder %s175, %s176
      %p185 = scmp.eq.s32.totalorder %s29, 0
      %p186 = por %p184, %p185
      %p187 = scmp.ne.s32.totalorder %s175, %s176
      %p188 = scmp.eq.s32.totalorder %s30, 3
      %p189 = por %p187, %p188
      %p191 = scmp.ne.s32.totalorder %s176, %s190
      %p192 = scmp.eq.s32.totalorder %s30, 0
      %p193 = por %p191, %p192
      %s195 = sadd.s32 %s194, 1
      %p198 = scmp.eq.s32.totalorder %s24, 3
      %p199 = scmp.ne.s32.totalorder %s194, %s196
      %p200 = scmp.eq.s32.totalorder %s24, 0
      %p201 = por %p199, %p200
      %p202 = scmp.ne.s32.totalorder %s194, %s196
      %p203 = scmp.eq.s32.totalorder %s29, 3
      %p204 = por %p202, %p203
      %p205 = scmp.ne.s32.totalorder %s196, %s197
      %p206 = scmp.eq.s32.totalorder %s29, 0
      %p207 = por %p205, %p206
      %p208 = scmp.ne.s32.totalorder %s196, %s197
      %p209 = scmp.eq.s32.totalorder %s30, 3
      %p210 = por %p208, %p209
      %p212 = scmp.ne.s32.totalorder %s197, %s211
      %p213 = scmp.eq.s32.totalorder %s30, 0
      %p214 = por %p212, %p213
      %s216 = sadd.s32 %s215, 1
      %p219 = scmp.eq.s32.totalorder %s24, 3
      %p220 = scmp.ne.s32.totalorder %s215, %s217
      %p221 = scmp.eq.s32.totalorder %s24, 0
      %p222 = por %p220, %p221
      %p223 = scmp.ne.s32.totalorder %s215, %s217
      %p224 = scmp.eq.s32.totalorder %s29, 3
      %p225 = por %p223, %p224
      %p226 = scmp.ne.s32.totalorder %s217, %s218
      %p227 = scmp.eq.s32.totalorder %s29, 0
      %p228 = por %p226, %p227
      %p229 = scmp.ne.s32.totalorder %s217, %s218
      %p230 = scmp.eq.s32.totalorder %s30, 3
      %p231 = por %p229, %p230
      %p233 = scmp.ne.s32.totalorder %s218, %s232
      %p234 = scmp.eq.s32.totalorder %s30, 0
      %p235 = por %p233, %p234
      %s236 = ssub.s32 %s31, %s43
      %p237 = scmp.eq.s32.totalorder %s236, 0
      %s239 = sadd.s32 %s238, 1
      %s240 = scalar_select %p237, %s238, %s239
      %p243 = pneg %p237
      %p244 = scmp.eq.s32.totalorder %s24, 3
      %p245 = por %p243, %p244
      %p246 = scmp.ne.s32.totalorder %s238, %s241
      %p247 = scmp.eq.s32.totalorder %s24, 0
      %p248 = por %p246, %p247
      %p249 = scmp.ne.s32.totalorder %s238, %s241
      %p250 = scmp.eq.s32.totalorder %s29, 3
      %p251 = por %p249, %p250
      %p252 = scmp.ne.s32.totalorder %s241, %s242
      %p253 = scmp.eq.s32.totalorder %s29, 0
      %p254 = por %p252, %p253
      %p255 = scmp.ne.s32.totalorder %s241, %s242
      %p256 = scmp.eq.s32.totalorder %s30, 3
      %p257 = por %p255, %p256
      %p259 = scmp.ne.s32.totalorder %s242, %s258
      %p260 = scmp.eq.s32.totalorder %s30, 0
      %p261 = por %p259, %p260
      %p262 = scmp.le.s32.totalorder 1, %s24
      %p263 = scmp.lt.s32.totalorder %s24, 5
      %p264 = pnand %p262, %p263
      %p265 = pneg %p264
      // Predicated region
      $region9: #{dirgnn_forward.5} parent=5 // pred_check
        _
      $region10: #{dirgnn_forward.5} parent=5 // pred_check_branch
        %267 = sbr.rel (%p264) target = $region12
      $region11: #{dirgnn_forward.5} parent=5 // pred_region
        %s268 = ssub.s32 %s24, 1
        // Predicated region
        $region13: #{dirgnn_forward.5} parent=11 // pred_check
          %p269 = pneg %p165
        $region14: #{dirgnn_forward.5} parent=11 // pred_check_branch
          %271 = sbr.rel (%p269) target = $region16
        $region15: #{dirgnn_forward.5} parent=11 // pred_region
          %273 = vsyncadd [#allocation8], 0
          %s274 = sshll.u32 %s4, 4
          %s275 = int_to_ptr.hbm [resolvable:$true] %s274
          %s276 = sshll.u32 [#allocation9], 4
          %s277 = int_to_ptr.vmem [resolvable:$true] %s276
          %282 = dma.hbm_to_vmem [thread:$0]  %s275, 1024, %s277, [#allocation8], 64, 64, 4
        $region16: #{dirgnn_forward.5} parent=11 // pred_fallthru
          _
        // Predicated region
        $region17: #{dirgnn_forward.5} parent=11 // pred_check
          %p283 = pneg %p186
        $region18: #{dirgnn_forward.5} parent=11 // pred_check_branch
          %285 = sbr.rel (%p283) target = $region20
        $region19: #{dirgnn_forward.5} parent=11 // pred_region
          %287 = vsyncadd [#allocation11], 0
          %s288 = sshll.u32 %s5, 4
          %s289 = int_to_ptr.hbm [resolvable:$true] %s288
          %s290 = sshll.u32 [#allocation10], 4
          %s291 = int_to_ptr.vmem [resolvable:$true] %s290
          %296 = dma.hbm_to_vmem [thread:$0]  %s289, 1024, %s291, [#allocation11], 64, 64, 4
        $region20: #{dirgnn_forward.5} parent=11 // pred_fallthru
          _
        // Predicated region
        $region21: #{dirgnn_forward.5} parent=11 // pred_check
          %p297 = pneg %p207
        $region22: #{dirgnn_forward.5} parent=11 // pred_check_branch
          %299 = sbr.rel (%p297) target = $region24
        $region23: #{dirgnn_forward.5} parent=11 // pred_region
          %301 = vsyncadd [#allocation11], 0
          %s302 = sshll.u32 %s6, 4
          %s303 = int_to_ptr.hbm [resolvable:$true] %s302
          %s304 = sshll.u32 [#allocation12], 4
          %s305 = int_to_ptr.vmem [resolvable:$true] %s304
          %310 = dma.hbm_to_vmem [thread:$0]  %s303, 1024, %s305, [#allocation11], 64, 64, 4
        $region24: #{dirgnn_forward.5} parent=11 // pred_fallthru
          _
        // Predicated region
        $region25: #{dirgnn_forward.5} parent=11 // pred_check
          %p311 = pneg %p228
        $region26: #{dirgnn_forward.5} parent=11 // pred_check_branch
          %313 = sbr.rel (%p311) target = $region28
        $region27: #{dirgnn_forward.5} parent=11 // pred_region
          _
        $region28: #{dirgnn_forward.5} parent=11 // pred_fallthru
          _
      $region12: #{dirgnn_forward.5} parent=5 // pred_fallthru
        _
      %p314 = scmp.lt.s32.totalorder %s24, 4
      // Predicated region
      $region29: #{dirgnn_forward.5} parent=5 // pred_check
        %p315 = pneg %p314
      $region30: #{dirgnn_forward.5} parent=5 // pred_check_branch
        %317 = sbr.rel (%p315) target = $region32
      $region31: #{dirgnn_forward.5} parent=5 // pred_region
        // Predicated region
        $region33: #{dirgnn_forward.5} parent=31 // pred_check
          %p318 = pneg %p58
        $region34: #{dirgnn_forward.5} parent=31 // pred_check_branch
          %320 = sbr.rel (%p318) target = $region36
        $region35: #{dirgnn_forward.5} parent=31 // pred_region
          %s321 = sand.u32 %s48, 1
          %s322 = scalar_lea.sflag [#allocation5], %s321
          %s323 = sand.u32 %s48, 1
          %s324 = smul.addr %s323, 64
          %s325 = scalar_lea.vmem [#allocation4], %s324
          %s326 = smul.u32 16, %s31
          %328 = vsyncadd %s322, 0
          %s329 = smul.addr %s326, 2
          %s330 = sadd.s32 %s32, %s329
          %s331 = smul.addr %s330, 4
          %s332 = scalar_lea.hbm %s0, %s331
          %s333 = sshll.u32 %s332, 4
          %s334 = int_to_ptr.hbm [resolvable:$true] %s333
          %s335 = sshll.u32 %s325, 4
          %s336 = int_to_ptr.vmem [resolvable:$true] %s335
          %341 = dma.hbm_to_vmem [thread:$0]  %s334, 1024, %s336, %s322, 128, 64, 4
        $region36: #{dirgnn_forward.5} parent=31 // pred_fallthru
          _
        // Predicated region
        $region37: #{dirgnn_forward.5} parent=31 // pred_check
          %p342 = pneg %p86
        $region38: #{dirgnn_forward.5} parent=31 // pred_check_branch
          %344 = sbr.rel (%p342) target = $region40
        $region39: #{dirgnn_forward.5} parent=31 // pred_region
          %s345 = sand.u32 %s24, 1
          %s346 = scalar_lea.sflag [#allocation8], %s345
          %s347 = sand.u32 %s76, 1
          %s348 = smul.addr %s347, 64
          %s349 = scalar_lea.vmem [#allocation7], %s348
          %s350 = smul.u32 16, %s31
          %352 = vsyncadd %s346, 0
          %s353 = smul.addr %s350, 2
          %s354 = sadd.s32 %s32, %s353
          %s355 = smul.addr %s354, 4
          %s356 = scalar_lea.hbm %s1, %s355
          %s357 = sshll.u32 %s356, 4
          %s358 = int_to_ptr.hbm [resolvable:$true] %s357
          %s359 = sshll.u32 %s349, 4
          %s360 = int_to_ptr.vmem [resolvable:$true] %s359
          %365 = dma.hbm_to_vmem [thread:$0]  %s358, 1024, %s360, %s346, 128, 64, 4
        $region40: #{dirgnn_forward.5} parent=31 // pred_fallthru
          _
        // Predicated region
        $region41: #{dirgnn_forward.5} parent=31 // pred_check
          %p366 = pneg %p112
        $region42: #{dirgnn_forward.5} parent=31 // pred_check_branch
          %368 = sbr.rel (%p366) target = $region44
        $region43: #{dirgnn_forward.5} parent=31 // pred_region
          %s369 = smul.u32 16, %s32
          %p370 = scmp.lt.s32.totalorder %s369, 31
          %s371 = scalar_select %p370, %s369, 31
          %s372 = smul.addr %s371, 4
          %s373 = scalar_lea.vmem %s2, %s372
          %s374 = smul.u32 16, %s32
        $region44: #{dirgnn_forward.5} parent=31 // pred_fallthru
          _
        // Predicated region
        $region45: #{dirgnn_forward.5} parent=31 // pred_check
          %p375 = pneg %p138
        $region46: #{dirgnn_forward.5} parent=31 // pred_check_branch
          %377 = sbr.rel (%p375) target = $region48
        $region47: #{dirgnn_forward.5} parent=31 // pred_region
          %s378 = smul.u32 16, %s31
          %p379 = scmp.lt.s32.totalorder %s378, 31
          %s380 = scalar_select %p379, %s378, 31
          %s381 = smul.addr %s380, 4
          %s382 = scalar_lea.vmem %s3, %s381
          %s383 = smul.u32 16, %s31
        $region48: #{dirgnn_forward.5} parent=31 // pred_fallthru
          _
      $region32: #{dirgnn_forward.5} parent=5 // pred_fallthru
        _
      %p384 = scmp.le.s32.totalorder 1, %s24
      %p385 = scmp.lt.s32.totalorder %s24, 5
      %p386 = pnand %p384, %p385
      %p387 = pneg %p386
      // Predicated region
      $region49: #{dirgnn_forward.5} parent=5 // pred_check
        _
      $region50: #{dirgnn_forward.5} parent=5 // pred_check_branch
        %389 = sbr.rel (%p386) target = $region52
      $region51: #{dirgnn_forward.5} parent=5 // pred_region
        %s390 = ssub.s32 %s24, 1
        %s391 = sand.u32 %s51, 1
        %s392 = scalar_lea.sflag [#allocation5], %s391
        %s393 = sand.u32 %s51, 1
        %s394 = smul.addr %s393, 64
        %s395 = scalar_lea.vmem [#allocation4], %s394
        // Predicated region
        $region53: #{dirgnn_forward.5} parent=51 // pred_check
          %p396 = pneg %p64
        $region54: #{dirgnn_forward.5} parent=51 // pred_check_branch
          %398 = sbr.rel (%p396) target = $region56
        $region55: #{dirgnn_forward.5} parent=51 // pred_region
          %400 = dma.done %s392, 1024
        $region56: #{dirgnn_forward.5} parent=51 // pred_fallthru
          _
        %s401 = sand.u32 %s29, 1
        %s402 = scalar_lea.sflag [#allocation8], %s401
        %s403 = sand.u32 %s79, 1
        %s404 = smul.addr %s403, 64
        %s405 = scalar_lea.vmem [#allocation7], %s404
        // Predicated region
        $region57: #{dirgnn_forward.5} parent=51 // pred_check
          %p406 = pneg %p92
        $region58: #{dirgnn_forward.5} parent=51 // pred_check_branch
          %408 = sbr.rel (%p406) target = $region60
        $region59: #{dirgnn_forward.5} parent=51 // pred_region
          %410 = dma.done %s402, 1024
        $region60: #{dirgnn_forward.5} parent=51 // pred_fallthru
          _
        // Predicated region
        $region61: #{dirgnn_forward.5} parent=51 // pred_check
          %p411 = pneg %p165
        $region62: #{dirgnn_forward.5} parent=51 // pred_check_branch
          %413 = sbr.rel (%p411) target = $region64
        $region63: #{dirgnn_forward.5} parent=51 // pred_region
          %415 = dma.done [#allocation8], 1024
        $region64: #{dirgnn_forward.5} parent=51 // pred_fallthru
          _
        // Predicated region
        $region65: #{dirgnn_forward.5} parent=51 // pred_check
          %p416 = pneg %p186
        $region66: #{dirgnn_forward.5} parent=51 // pred_check_branch
          %418 = sbr.rel (%p416) target = $region68
        $region67: #{dirgnn_forward.5} parent=51 // pred_region
          %420 = dma.done [#allocation11], 1024
        $region68: #{dirgnn_forward.5} parent=51 // pred_fallthru
          _
        // Predicated region
        $region69: #{dirgnn_forward.5} parent=51 // pred_check
          %p421 = pneg %p207
        $region70: #{dirgnn_forward.5} parent=51 // pred_check_branch
          %423 = sbr.rel (%p421) target = $region72
        $region71: #{dirgnn_forward.5} parent=51 // pred_region
          %425 = dma.done [#allocation11], 1024
        $region72: #{dirgnn_forward.5} parent=51 // pred_fallthru
          _
        %s426 = sand.u32 %s51, 1
        %s427 = scalar_lea.sflag [#allocation5], %s426
        %s428 = sand.u32 %s51, 1
        %s429 = smul.addr %s428, 64
        %s430 = scalar_lea.vmem [#allocation4], %s429
        %p431 = pneg %p64
        %p432 = pneg %p61
        %s433 = sand.u32 %s29, 1
        %s434 = scalar_lea.sflag [#allocation8], %s433
        %s435 = sand.u32 %s79, 1
        %s436 = smul.addr %s435, 64
        %s437 = scalar_lea.vmem [#allocation7], %s436
        %p438 = pneg %p92
        %p439 = pneg %p89
        %s440 = smul.u32 16, %s34
        %p441 = scmp.lt.s32.totalorder %s440, 31
        %s442 = scalar_select %p441, %s440, 31
        %s443 = smul.addr %s442, 4
        %s444 = scalar_lea.vmem %s2, %s443
        %p445 = pneg %p118
        %p446 = pneg %p115
        %s447 = smul.u32 16, %s33
        %p448 = scmp.lt.s32.totalorder %s447, 31
        %s449 = scalar_select %p448, %s447, 31
        %s450 = smul.addr %s449, 4
        %s451 = scalar_lea.vmem %s3, %s450
        %p452 = pneg %p144
        %p453 = pneg %p141
        %p454 = pneg %p165
        %p455 = pneg %p162
        %p456 = pneg %p186
        %p457 = pneg %p183
        %p458 = pneg %p207
        %p459 = pneg %p204
        %p460 = pneg %p228
        %p461 = pneg %p225
        %p462 = pneg %p254
        %p463 = pneg %p251
        %s464 = sand.u32 %s241, 1
        %s465 = scalar_lea.sflag [#allocation6], %s464
        %s466 = sand.u32 %s241, 1
        %s467 = smul.addr %s466, 128
        %s468 = scalar_lea.vmem [#allocation13], %s467
        %s469 = smul.u32 16, %s33
        %s470 = smul.u32 16, %s33
        %s471 = smul.u32 16, %s34
        %p472 = scmp.lt.s32.totalorder %s471, 31
        %s473 = scalar_select %p472, %s471, 31
        %s474 = smul.addr %s473, 4
        %s475 = scalar_lea.vmem %s2, %s474
        %s476 = smul.u32 16, %s34
        %s477 = smul.u32 16, %s33
        %p478 = scmp.lt.s32.totalorder %s477, 31
        %s479 = scalar_select %p478, %s477, 31
        %s480 = smul.addr %s479, 4
        %s481 = scalar_lea.vmem %s3, %s480
        %s482 = smul.u32 16, %s33
        %s483 = smul.u32 16, %s33
        %p484 = scmp.eq.s32.totalorder %s34, 0
        // Predicated region
        $region73: #{dirgnn_forward.5} parent=51 // pred_check
          %p485 = pneg %p484
        $region74: #{dirgnn_forward.5} parent=51 // pred_check_branch
          %487 = sbr.rel (%p485) target = $region76
        $region75: #{dirgnn_forward.5} parent=51 // pred_region
          %488 = vst [vmem:[#allocation2] sm:$0xff] 0.0
          %489 = vst [vmem:[#allocation2 + $0x8] sm:$0xff] 0.0
          %490 = vst [vmem:[#allocation2 + $0x10] sm:$0xff] 0.0
          %491 = vst [vmem:[#allocation2 + $0x18] sm:$0xff] 0.0
          %492 = vst [vmem:[#allocation2 + $0x20] sm:$0xff] 0.0
          %493 = vst [vmem:[#allocation2 + $0x28] sm:$0xff] 0.0
          %494 = vst [vmem:[#allocation2 + $0x30] sm:$0xff] 0.0
          %495 = vst [vmem:[#allocation2 + $0x38] sm:$0xff] 0.0
          %496 = vst [vmem:[#allocation2 + $0x40] sm:$0xff] 0.0
          %497 = vst [vmem:[#allocation2 + $0x48] sm:$0xff] 0.0
          %498 = vst [vmem:[#allocation2 + $0x50] sm:$0xff] 0.0
          %499 = vst [vmem:[#allocation2 + $0x58] sm:$0xff] 0.0
          %500 = vst [vmem:[#allocation2 + $0x60] sm:$0xff] 0.0
          %501 = vst [vmem:[#allocation2 + $0x68] sm:$0xff] 0.0
          %502 = vst [vmem:[#allocation2 + $0x70] sm:$0xff] 0.0
          %503 = vst [vmem:[#allocation2 + $0x78] sm:$0xff] 0.0
          %504 = vst [vmem:[#allocation3] sm:$0xff] 0.0
          %505 = vst [vmem:[#allocation3 + $0x8] sm:$0xff] 0.0
          %506 = vst [vmem:[#allocation3 + $0x10] sm:$0xff] 0.0
          %507 = vst [vmem:[#allocation3 + $0x18] sm:$0xff] 0.0
          %508 = vst [vmem:[#allocation3 + $0x20] sm:$0xff] 0.0
          %509 = vst [vmem:[#allocation3 + $0x28] sm:$0xff] 0.0
          %510 = vst [vmem:[#allocation3 + $0x30] sm:$0xff] 0.0
          %511 = vst [vmem:[#allocation3 + $0x38] sm:$0xff] 0.0
          %512 = vst [vmem:[#allocation3 + $0x40] sm:$0xff] 0.0
          %513 = vst [vmem:[#allocation3 + $0x48] sm:$0xff] 0.0
          %514 = vst [vmem:[#allocation3 + $0x50] sm:$0xff] 0.0
          %515 = vst [vmem:[#allocation3 + $0x58] sm:$0xff] 0.0
          %516 = vst [vmem:[#allocation3 + $0x60] sm:$0xff] 0.0
          %517 = vst [vmem:[#allocation3 + $0x68] sm:$0xff] 0.0
          %518 = vst [vmem:[#allocation3 + $0x70] sm:$0xff] 0.0
          %519 = vst [vmem:[#allocation3 + $0x78] sm:$0xff] 0.0
        $region76: #{dirgnn_forward.5} parent=51 // pred_fallthru
          _
        %v520 = vld [vmem:[%s475] sm:$0xf]
        %v521 = vld [vmem:[%s475 + $0x4] sm:$0xf]
        %v522 = vld [vmem:[%s475 + $0x8] sm:$0xf]
        %v523 = vld [vmem:[%s475 + $0xc] sm:$0xf]
        %v524 = vld [vmem:[%s475 + $0x10] sm:$0xf]
        %v525 = vld [vmem:[%s475 + $0x14] sm:$0xf]
        %v526 = vld [vmem:[%s475 + $0x18] sm:$0xf]
        %v527 = vld [vmem:[%s475 + $0x1c] sm:$0xf]
        %v528 = vld [vmem:[%s475 + $0x20] sm:$0xf]
        %v529 = vld [vmem:[%s475 + $0x24] sm:$0xf]
        %v530 = vld [vmem:[%s475 + $0x28] sm:$0xf]
        %v531 = vld [vmem:[%s475 + $0x2c] sm:$0xf]
        %v532 = vld [vmem:[%s475 + $0x30] sm:$0xf]
        %v533 = vld [vmem:[%s475 + $0x34] sm:$0xf]
        %v534 = vld [vmem:[%s475 + $0x38] sm:$0xf]
        %v535 = vld [vmem:[%s475 + $0x3c] sm:$0xf]
        %v536 = vld [vmem:[#allocation2] sm:$0xff]
        %v537 = vld [vmem:[#allocation2 + $0x8] sm:$0xff]
        %v538 = vld [vmem:[#allocation2 + $0x10] sm:$0xff]
        %v539 = vld [vmem:[#allocation2 + $0x18] sm:$0xff]
        %v540 = vld [vmem:[#allocation2 + $0x20] sm:$0xff]
        %v541 = vld [vmem:[#allocation2 + $0x28] sm:$0xff]
        %v542 = vld [vmem:[#allocation2 + $0x30] sm:$0xff]
        %v543 = vld [vmem:[#allocation2 + $0x38] sm:$0xff]
        %v544 = vld [vmem:[#allocation2 + $0x40] sm:$0xff]
        %v545 = vld [vmem:[#allocation2 + $0x48] sm:$0xff]
        %v546 = vld [vmem:[#allocation2 + $0x50] sm:$0xff]
        %v547 = vld [vmem:[#allocation2 + $0x58] sm:$0xff]
        %v548 = vld [vmem:[#allocation2 + $0x60] sm:$0xff]
        %v549 = vld [vmem:[#allocation2 + $0x68] sm:$0xff]
        %v550 = vld [vmem:[#allocation2 + $0x70] sm:$0xff]
        %v551 = vld [vmem:[#allocation2 + $0x78] sm:$0xff]
        %v552 = vld [vmem:[%s395] sm:$0xf]
        %v553 = vld [vmem:[%s395 + $0x4] sm:$0xf]
        %v554 = vld [vmem:[%s395 + $0x8] sm:$0xf]
        %v555 = vld [vmem:[%s395 + $0xc] sm:$0xf]
        %v556 = vld [vmem:[%s395 + $0x10] sm:$0xf]
        %v557 = vld [vmem:[%s395 + $0x14] sm:$0xf]
        %v558 = vld [vmem:[%s395 + $0x18] sm:$0xf]
        %v559 = vld [vmem:[%s395 + $0x1c] sm:$0xf]
        %v560 = vld [vmem:[%s395 + $0x20] sm:$0xf]
        %v561 = vld [vmem:[%s395 + $0x24] sm:$0xf]
        %v562 = vld [vmem:[%s395 + $0x28] sm:$0xf]
        %v563 = vld [vmem:[%s395 + $0x2c] sm:$0xf]
        %v564 = vld [vmem:[%s395 + $0x30] sm:$0xf]
        %v565 = vld [vmem:[%s395 + $0x34] sm:$0xf]
        %v566 = vld [vmem:[%s395 + $0x38] sm:$0xf]
        %v567 = vld [vmem:[%s395 + $0x3c] sm:$0xf]
        %v584 = vunpack.c.l.b16 %v552
        %v585 = vunpack.c.l.b16 %v553
        %v586 = vunpack.c.l.b16 %v554
        %v587 = vunpack.c.l.b16 %v555
        %v588 = vunpack.c.l.b16 %v556
        %v589 = vunpack.c.l.b16 %v557
        %v590 = vunpack.c.l.b16 %v558
        %v591 = vunpack.c.l.b16 %v559
        %v592 = vunpack.c.l.b16 %v560
        %v593 = vunpack.c.l.b16 %v561
        %v594 = vunpack.c.l.b16 %v562
        %v595 = vunpack.c.l.b16 %v563
        %v596 = vunpack.c.l.b16 %v564
        %v597 = vunpack.c.l.b16 %v565
        %v598 = vunpack.c.l.b16 %v566
        %v599 = vunpack.c.l.b16 %v567
        %v600 = vpack.c.b16 %v585, %v584
        %v601 = vpack.c.b16 %v587, %v586
        %v602 = vpack.c.b16 %v589, %v588
        %v603 = vpack.c.b16 %v591, %v590
        %v604 = vpack.c.b16 %v593, %v592
        %v605 = vpack.c.b16 %v595, %v594
        %v606 = vpack.c.b16 %v597, %v596
        %v607 = vpack.c.b16 %v599, %v598
        %v632 = vunpack.c.l.b16 %v520
        %v633 = vunpack.c.l.b16 %v521
        %v634 = vunpack.c.l.b16 %v522
        %v635 = vunpack.c.l.b16 %v523
        %v636 = vunpack.c.l.b16 %v524
        %v637 = vunpack.c.l.b16 %v525
        %v638 = vunpack.c.l.b16 %v526
        %v639 = vunpack.c.l.b16 %v527
        %v640 = vunpack.c.l.b16 %v528
        %v641 = vunpack.c.l.b16 %v529
        %v642 = vunpack.c.l.b16 %v530
        %v643 = vunpack.c.l.b16 %v531
        %v644 = vunpack.c.l.b16 %v532
        %v645 = vunpack.c.l.b16 %v533
        %v646 = vunpack.c.l.b16 %v534
        %v647 = vunpack.c.l.b16 %v535
        %v648 = vpack.c.b16 %v633, %v632
        %v649 = vpack.c.b16 %v635, %v634
        %v650 = vpack.c.b16 %v637, %v636
        %v651 = vpack.c.b16 %v639, %v638
        %v652 = vpack.c.b16 %v641, %v640
        %v653 = vpack.c.b16 %v643, %v642
        %v654 = vpack.c.b16 %v645, %v644
        %v655 = vpack.c.b16 %v647, %v646
        %664 = vmatpush.bf16.msra.mxu0 %v655
        %665 = vmatpush.bf16.msra.mxu0 %v654
        %666 = vmatpush.bf16.msra.mxu0 %v653
        %667 = vmatpush.bf16.msra.mxu0 %v652
        %668 = vmatpush.bf16.msra.mxu0 %v651
        %669 = vmatpush.bf16.msra.mxu0 %v650
        %670 = vmatpush.bf16.msra.mxu0 %v649
        %671 = vmatpush.bf16.msra.mxu0 %v648
        %672 = vmatmul.bf16.gmra.mxu0 %v600
        %v673 = vpop.f32.mrf.mxu0
        %v674 = vadd.f32 0.0, %v673
        %v675 = vpop.f32.mrf.mxu0
        %v676 = vadd.f32 0.0, %v675
        %677 = vmatmul.bf16.gmra.mxu0 %v601
        %v678 = vpop.f32.mrf.mxu0
        %v679 = vadd.f32 0.0, %v678
        %v680 = vpop.f32.mrf.mxu0
        %v681 = vadd.f32 0.0, %v680
        %682 = vmatmul.bf16.gmra.mxu0 %v602
        %v683 = vpop.f32.mrf.mxu0
        %v684 = vadd.f32 0.0, %v683
        %v685 = vpop.f32.mrf.mxu0
        %v686 = vadd.f32 0.0, %v685
        %687 = vmatmul.bf16.gmra.mxu0 %v603
        %v688 = vpop.f32.mrf.mxu0
        %v689 = vadd.f32 0.0, %v688
        %v690 = vpop.f32.mrf.mxu0
        %v691 = vadd.f32 0.0, %v690
        %692 = vmatmul.bf16.gmra.mxu0 %v604
        %v693 = vpop.f32.mrf.mxu0
        %v694 = vadd.f32 0.0, %v693
        %v695 = vpop.f32.mrf.mxu0
        %v696 = vadd.f32 0.0, %v695
        %697 = vmatmul.bf16.gmra.mxu0 %v605
        %v698 = vpop.f32.mrf.mxu0
        %v699 = vadd.f32 0.0, %v698
        %v700 = vpop.f32.mrf.mxu0
        %v701 = vadd.f32 0.0, %v700
        %702 = vmatmul.bf16.gmra.mxu0 %v606
        %v703 = vpop.f32.mrf.mxu0
        %v704 = vadd.f32 0.0, %v703
        %v705 = vpop.f32.mrf.mxu0
        %v706 = vadd.f32 0.0, %v705
        %707 = vmatmul.bf16.gmra.mxu0 %v607
        %v708 = vpop.f32.mrf.mxu0
        %v709 = vadd.f32 0.0, %v708
        %v710 = vpop.f32.mrf.mxu0
        %v711 = vadd.f32 0.0, %v710
        %712 = vdwg.mxu0
        %v713 = vadd.f32 %v536, %v674
        %v714 = vadd.f32 %v537, %v676
        %v715 = vadd.f32 %v538, %v679
        %v716 = vadd.f32 %v539, %v681
        %v717 = vadd.f32 %v540, %v684
        %v718 = vadd.f32 %v541, %v686
        %v719 = vadd.f32 %v542, %v689
        %v720 = vadd.f32 %v543, %v691
        %v721 = vadd.f32 %v544, %v694
        %v722 = vadd.f32 %v545, %v696
        %v723 = vadd.f32 %v546, %v699
        %v724 = vadd.f32 %v547, %v701
        %v725 = vadd.f32 %v548, %v704
        %v726 = vadd.f32 %v549, %v706
        %v727 = vadd.f32 %v550, %v709
        %v728 = vadd.f32 %v551, %v711
        %729 = vst [vmem:[#allocation2] sm:$0xff] %v713
        %730 = vst [vmem:[#allocation2 + $0x8] sm:$0xff] %v714
        %731 = vst [vmem:[#allocation2 + $0x10] sm:$0xff] %v715
        %732 = vst [vmem:[#allocation2 + $0x18] sm:$0xff] %v716
        %733 = vst [vmem:[#allocation2 + $0x20] sm:$0xff] %v717
        %734 = vst [vmem:[#allocation2 + $0x28] sm:$0xff] %v718
        %735 = vst [vmem:[#allocation2 + $0x30] sm:$0xff] %v719
        %736 = vst [vmem:[#allocation2 + $0x38] sm:$0xff] %v720
        %737 = vst [vmem:[#allocation2 + $0x40] sm:$0xff] %v721
        %738 = vst [vmem:[#allocation2 + $0x48] sm:$0xff] %v722
        %739 = vst [vmem:[#allocation2 + $0x50] sm:$0xff] %v723
        %740 = vst [vmem:[#allocation2 + $0x58] sm:$0xff] %v724
        %741 = vst [vmem:[#allocation2 + $0x60] sm:$0xff] %v725
        %742 = vst [vmem:[#allocation2 + $0x68] sm:$0xff] %v726
        %743 = vst [vmem:[#allocation2 + $0x70] sm:$0xff] %v727
        %744 = vst [vmem:[#allocation2 + $0x78] sm:$0xff] %v728
        %v745 = vld [vmem:[#allocation3] sm:$0xff]
        %v746 = vld [vmem:[#allocation3 + $0x8] sm:$0xff]
        %v747 = vld [vmem:[#allocation3 + $0x10] sm:$0xff]
        %v748 = vld [vmem:[#allocation3 + $0x18] sm:$0xff]
        %v749 = vld [vmem:[#allocation3 + $0x20] sm:$0xff]
        %v750 = vld [vmem:[#allocation3 + $0x28] sm:$0xff]
        %v751 = vld [vmem:[#allocation3 + $0x30] sm:$0xff]
        %v752 = vld [vmem:[#allocation3 + $0x38] sm:$0xff]
        %v753 = vld [vmem:[#allocation3 + $0x40] sm:$0xff]
        %v754 = vld [vmem:[#allocation3 + $0x48] sm:$0xff]
        %v755 = vld [vmem:[#allocation3 + $0x50] sm:$0xff]
        %v756 = vld [vmem:[#allocation3 + $0x58] sm:$0xff]
        %v757 = vld [vmem:[#allocation3 + $0x60] sm:$0xff]
        %v758 = vld [vmem:[#allocation3 + $0x68] sm:$0xff]
        %v759 = vld [vmem:[#allocation3 + $0x70] sm:$0xff]
        %v760 = vld [vmem:[#allocation3 + $0x78] sm:$0xff]
        %v761 = vld [vmem:[%s405] sm:$0xf]
        %v762 = vld [vmem:[%s405 + $0x4] sm:$0xf]
        %v763 = vld [vmem:[%s405 + $0x8] sm:$0xf]
        %v764 = vld [vmem:[%s405 + $0xc] sm:$0xf]
        %v765 = vld [vmem:[%s405 + $0x10] sm:$0xf]
        %v766 = vld [vmem:[%s405 + $0x14] sm:$0xf]
        %v767 = vld [vmem:[%s405 + $0x18] sm:$0xf]
        %v768 = vld [vmem:[%s405 + $0x1c] sm:$0xf]
        %v769 = vld [vmem:[%s405 + $0x20] sm:$0xf]
        %v770 = vld [vmem:[%s405 + $0x24] sm:$0xf]
        %v771 = vld [vmem:[%s405 + $0x28] sm:$0xf]
        %v772 = vld [vmem:[%s405 + $0x2c] sm:$0xf]
        %v773 = vld [vmem:[%s405 + $0x30] sm:$0xf]
        %v774 = vld [vmem:[%s405 + $0x34] sm:$0xf]
        %v775 = vld [vmem:[%s405 + $0x38] sm:$0xf]
        %v776 = vld [vmem:[%s405 + $0x3c] sm:$0xf]
        %v793 = vunpack.c.l.b16 %v761
        %v794 = vunpack.c.l.b16 %v762
        %v795 = vunpack.c.l.b16 %v763
        %v796 = vunpack.c.l.b16 %v764
        %v797 = vunpack.c.l.b16 %v765
        %v798 = vunpack.c.l.b16 %v766
        %v799 = vunpack.c.l.b16 %v767
        %v800 = vunpack.c.l.b16 %v768
        %v801 = vunpack.c.l.b16 %v769
        %v802 = vunpack.c.l.b16 %v770
        %v803 = vunpack.c.l.b16 %v771
        %v804 = vunpack.c.l.b16 %v772
        %v805 = vunpack.c.l.b16 %v773
        %v806 = vunpack.c.l.b16 %v774
        %v807 = vunpack.c.l.b16 %v775
        %v808 = vunpack.c.l.b16 %v776
        %v809 = vpack.c.b16 %v794, %v793
        %v810 = vpack.c.b16 %v796, %v795
        %v811 = vpack.c.b16 %v798, %v797
        %v812 = vpack.c.b16 %v800, %v799
        %v813 = vpack.c.b16 %v802, %v801
        %v814 = vpack.c.b16 %v804, %v803
        %v815 = vpack.c.b16 %v806, %v805
        %v816 = vpack.c.b16 %v808, %v807
        %825 = vmatpush.bf16.msra.mxu0 %v655
        %826 = vmatpush.bf16.msra.mxu0 %v654
        %827 = vmatpush.bf16.msra.mxu0 %v653
        %828 = vmatpush.bf16.msra.mxu0 %v652
        %829 = vmatpush.bf16.msra.mxu0 %v651
        %830 = vmatpush.bf16.msra.mxu0 %v650
        %831 = vmatpush.bf16.msra.mxu0 %v649
        %832 = vmatpush.bf16.msra.mxu0 %v648
        %833 = vmatmul.bf16.gmra.mxu0 %v809
        %v834 = vpop.f32.mrf.mxu0
        %v835 = vadd.f32 0.0, %v834
        %v836 = vpop.f32.mrf.mxu0
        %v837 = vadd.f32 0.0, %v836
        %838 = vmatmul.bf16.gmra.mxu0 %v810
        %v839 = vpop.f32.mrf.mxu0
        %v840 = vadd.f32 0.0, %v839
        %v841 = vpop.f32.mrf.mxu0
        %v842 = vadd.f32 0.0, %v841
        %843 = vmatmul.bf16.gmra.mxu0 %v811
        %v844 = vpop.f32.mrf.mxu0
        %v845 = vadd.f32 0.0, %v844
        %v846 = vpop.f32.mrf.mxu0
        %v847 = vadd.f32 0.0, %v846
        %848 = vmatmul.bf16.gmra.mxu0 %v812
        %v849 = vpop.f32.mrf.mxu0
        %v850 = vadd.f32 0.0, %v849
        %v851 = vpop.f32.mrf.mxu0
        %v852 = vadd.f32 0.0, %v851
        %853 = vmatmul.bf16.gmra.mxu0 %v813
        %v854 = vpop.f32.mrf.mxu0
        %v855 = vadd.f32 0.0, %v854
        %v856 = vpop.f32.mrf.mxu0
        %v857 = vadd.f32 0.0, %v856
        %858 = vmatmul.bf16.gmra.mxu0 %v814
        %v859 = vpop.f32.mrf.mxu0
        %v860 = vadd.f32 0.0, %v859
        %v861 = vpop.f32.mrf.mxu0
        %v862 = vadd.f32 0.0, %v861
        %863 = vmatmul.bf16.gmra.mxu0 %v815
        %v864 = vpop.f32.mrf.mxu0
        %v865 = vadd.f32 0.0, %v864
        %v866 = vpop.f32.mrf.mxu0
        %v867 = vadd.f32 0.0, %v866
        %868 = vmatmul.bf16.gmra.mxu0 %v816
        %v869 = vpop.f32.mrf.mxu0
        %v870 = vadd.f32 0.0, %v869
        %v871 = vpop.f32.mrf.mxu0
        %v872 = vadd.f32 0.0, %v871
        %873 = vdwg.mxu0
        %v874 = vadd.f32 %v745, %v835
        %v875 = vadd.f32 %v746, %v837
        %v876 = vadd.f32 %v747, %v840
        %v877 = vadd.f32 %v748, %v842
        %v878 = vadd.f32 %v749, %v845
        %v879 = vadd.f32 %v750, %v847
        %v880 = vadd.f32 %v751, %v850
        %v881 = vadd.f32 %v752, %v852
        %v882 = vadd.f32 %v753, %v855
        %v883 = vadd.f32 %v754, %v857
        %v884 = vadd.f32 %v755, %v860
        %v885 = vadd.f32 %v756, %v862
        %v886 = vadd.f32 %v757, %v865
        %v887 = vadd.f32 %v758, %v867
        %v888 = vadd.f32 %v759, %v870
        %v889 = vadd.f32 %v760, %v872
        %890 = vst [vmem:[#allocation3] sm:$0xff] %v874
        %891 = vst [vmem:[#allocation3 + $0x8] sm:$0xff] %v875
        %892 = vst [vmem:[#allocation3 + $0x10] sm:$0xff] %v876
        %893 = vst [vmem:[#allocation3 + $0x18] sm:$0xff] %v877
        %894 = vst [vmem:[#allocation3 + $0x20] sm:$0xff] %v878
        %895 = vst [vmem:[#allocation3 + $0x28] sm:$0xff] %v879
        %896 = vst [vmem:[#allocation3 + $0x30] sm:$0xff] %v880
        %897 = vst [vmem:[#allocation3 + $0x38] sm:$0xff] %v881
        %898 = vst [vmem:[#allocation3 + $0x40] sm:$0xff] %v882
        %899 = vst [vmem:[#allocation3 + $0x48] sm:$0xff] %v883
        %900 = vst [vmem:[#allocation3 + $0x50] sm:$0xff] %v884
        %901 = vst [vmem:[#allocation3 + $0x58] sm:$0xff] %v885
        %902 = vst [vmem:[#allocation3 + $0x60] sm:$0xff] %v886
        %903 = vst [vmem:[#allocation3 + $0x68] sm:$0xff] %v887
        %904 = vst [vmem:[#allocation3 + $0x70] sm:$0xff] %v888
        %905 = vst [vmem:[#allocation3 + $0x78] sm:$0xff] %v889
        %p906 = scmp.eq.s32.totalorder %s34, 1
        // Predicated region
        $region77: #{dirgnn_forward.5} parent=51 // pred_check
          %p907 = pneg %p906
        $region78: #{dirgnn_forward.5} parent=51 // pred_check_branch
          %909 = sbr.rel (%p907) target = $region80
        $region79: #{dirgnn_forward.5} parent=51 // pred_region
          %v910 = vld [vmem:[#allocation2] sm:$0xff]
          %v911 = vld [vmem:[#allocation2 + $0x8] sm:$0xff]
          %v912 = vld [vmem:[#allocation2 + $0x10] sm:$0xff]
          %v913 = vld [vmem:[#allocation2 + $0x18] sm:$0xff]
          %v914 = vld [vmem:[#allocation2 + $0x20] sm:$0xff]
          %v915 = vld [vmem:[#allocation2 + $0x28] sm:$0xff]
          %v916 = vld [vmem:[#allocation2 + $0x30] sm:$0xff]
          %v917 = vld [vmem:[#allocation2 + $0x38] sm:$0xff]
          %v918 = vld [vmem:[#allocation2 + $0x40] sm:$0xff]
          %v919 = vld [vmem:[#allocation2 + $0x48] sm:$0xff]
          %v920 = vld [vmem:[#allocation2 + $0x50] sm:$0xff]
          %v921 = vld [vmem:[#allocation2 + $0x58] sm:$0xff]
          %v922 = vld [vmem:[#allocation2 + $0x60] sm:$0xff]
          %v923 = vld [vmem:[#allocation2 + $0x68] sm:$0xff]
          %v924 = vld [vmem:[#allocation2 + $0x70] sm:$0xff]
          %v925 = vld [vmem:[#allocation2 + $0x78] sm:$0xff]
          %v926 = vpack.c.bf16 %v911, %v910
          %v927 = vpack.c.bf16 %v913, %v912
          %v928 = vpack.c.bf16 %v915, %v914
          %v929 = vpack.c.bf16 %v917, %v916
          %v930 = vpack.c.bf16 %v919, %v918
          %v931 = vpack.c.bf16 %v921, %v920
          %v932 = vpack.c.bf16 %v923, %v922
          %v933 = vpack.c.bf16 %v925, %v924
          %v934 = vld [vmem:[#allocation3] sm:$0xff]
          %v935 = vld [vmem:[#allocation3 + $0x8] sm:$0xff]
          %v936 = vld [vmem:[#allocation3 + $0x10] sm:$0xff]
          %v937 = vld [vmem:[#allocation3 + $0x18] sm:$0xff]
          %v938 = vld [vmem:[#allocation3 + $0x20] sm:$0xff]
          %v939 = vld [vmem:[#allocation3 + $0x28] sm:$0xff]
          %v940 = vld [vmem:[#allocation3 + $0x30] sm:$0xff]
          %v941 = vld [vmem:[#allocation3 + $0x38] sm:$0xff]
          %v942 = vld [vmem:[#allocation3 + $0x40] sm:$0xff]
          %v943 = vld [vmem:[#allocation3 + $0x48] sm:$0xff]
          %v944 = vld [vmem:[#allocation3 + $0x50] sm:$0xff]
          %v945 = vld [vmem:[#allocation3 + $0x58] sm:$0xff]
          %v946 = vld [vmem:[#allocation3 + $0x60] sm:$0xff]
          %v947 = vld [vmem:[#allocation3 + $0x68] sm:$0xff]
          %v948 = vld [vmem:[#allocation3 + $0x70] sm:$0xff]
          %v949 = vld [vmem:[#allocation3 + $0x78] sm:$0xff]
          %v950 = vpack.c.bf16 %v935, %v934
          %v951 = vpack.c.bf16 %v937, %v936
          %v952 = vpack.c.bf16 %v939, %v938
          %v953 = vpack.c.bf16 %v941, %v940
          %v954 = vpack.c.bf16 %v943, %v942
          %v955 = vpack.c.bf16 %v945, %v944
          %v956 = vpack.c.bf16 %v947, %v946
          %v957 = vpack.c.bf16 %v949, %v948
          %v958 = vld [vmem:[#allocation10] sm:$0xf]
          %v959 = vld [vmem:[#allocation10 + $0x4] sm:$0xf]
          %v960 = vld [vmem:[#allocation10 + $0x8] sm:$0xf]
          %v961 = vld [vmem:[#allocation10 + $0xc] sm:$0xf]
          %v962 = vld [vmem:[#allocation10 + $0x10] sm:$0xf]
          %v963 = vld [vmem:[#allocation10 + $0x14] sm:$0xf]
          %v964 = vld [vmem:[#allocation10 + $0x18] sm:$0xf]
          %v965 = vld [vmem:[#allocation10 + $0x1c] sm:$0xf]
          %v966 = vld [vmem:[#allocation10 + $0x20] sm:$0xf]
          %v967 = vld [vmem:[#allocation10 + $0x24] sm:$0xf]
          %v968 = vld [vmem:[#allocation10 + $0x28] sm:$0xf]
          %v969 = vld [vmem:[#allocation10 + $0x2c] sm:$0xf]
          %v970 = vld [vmem:[#allocation10 + $0x30] sm:$0xf]
          %v971 = vld [vmem:[#allocation10 + $0x34] sm:$0xf]
          %v972 = vld [vmem:[#allocation10 + $0x38] sm:$0xf]
          %v973 = vld [vmem:[#allocation10 + $0x3c] sm:$0xf]
          %v990 = vunpack.c.l.b16 %v958
          %v991 = vunpack.c.l.b16 %v959
          %v992 = vunpack.c.l.b16 %v960
          %v993 = vunpack.c.l.b16 %v961
          %v994 = vunpack.c.l.b16 %v962
          %v995 = vunpack.c.l.b16 %v963
          %v996 = vunpack.c.l.b16 %v964
          %v997 = vunpack.c.l.b16 %v965
          %v998 = vunpack.c.l.b16 %v966
          %v999 = vunpack.c.l.b16 %v967
          %v1000 = vunpack.c.l.b16 %v968
          %v1001 = vunpack.c.l.b16 %v969
          %v1002 = vunpack.c.l.b16 %v970
          %v1003 = vunpack.c.l.b16 %v971
          %v1004 = vunpack.c.l.b16 %v972
          %v1005 = vunpack.c.l.b16 %v973
          %v1006 = vpack.c.b16 %v991, %v990
          %v1007 = vpack.c.b16 %v993, %v992
          %v1008 = vpack.c.b16 %v995, %v994
          %v1009 = vpack.c.b16 %v997, %v996
          %v1010 = vpack.c.b16 %v999, %v998
          %v1011 = vpack.c.b16 %v1001, %v1000
          %v1012 = vpack.c.b16 %v1003, %v1002
          %v1013 = vpack.c.b16 %v1005, %v1004
          %1022 = vmatpush.bf16.msra.mxu0 %v1013
          %1023 = vmatpush.bf16.msra.mxu0 %v1012
          %1024 = vmatpush.bf16.msra.mxu0 %v1011
          %1025 = vmatpush.bf16.msra.mxu0 %v1010
          %1026 = vmatpush.bf16.msra.mxu0 %v1009
          %1027 = vmatpush.bf16.msra.mxu0 %v1008
          %1028 = vmatpush.bf16.msra.mxu0 %v1007
          %1029 = vmatpush.bf16.msra.mxu0 %v1006
          %1030 = vmatmul.bf16.gmra.mxu0 %v950
          %v1031 = vpop.f32.mrf.mxu0
          %v1032 = vadd.f32 0.0, %v1031
          %v1033 = vpop.f32.mrf.mxu0
          %v1034 = vadd.f32 0.0, %v1033
          %1035 = vmatmul.bf16.gmra.mxu0 %v951
          %v1036 = vpop.f32.mrf.mxu0
          %v1037 = vadd.f32 0.0, %v1036
          %v1038 = vpop.f32.mrf.mxu0
          %v1039 = vadd.f32 0.0, %v1038
          %1040 = vmatmul.bf16.gmra.mxu0 %v952
          %v1041 = vpop.f32.mrf.mxu0
          %v1042 = vadd.f32 0.0, %v1041
          %v1043 = vpop.f32.mrf.mxu0
          %v1044 = vadd.f32 0.0, %v1043
          %1045 = vmatmul.bf16.gmra.mxu0 %v953
          %v1046 = vpop.f32.mrf.mxu0
          %v1047 = vadd.f32 0.0, %v1046
          %v1048 = vpop.f32.mrf.mxu0
          %v1049 = vadd.f32 0.0, %v1048
          %1050 = vmatmul.bf16.gmra.mxu0 %v954
          %v1051 = vpop.f32.mrf.mxu0
          %v1052 = vadd.f32 0.0, %v1051
          %v1053 = vpop.f32.mrf.mxu0
          %v1054 = vadd.f32 0.0, %v1053
          %1055 = vmatmul.bf16.gmra.mxu0 %v955
          %v1056 = vpop.f32.mrf.mxu0
          %v1057 = vadd.f32 0.0, %v1056
          %v1058 = vpop.f32.mrf.mxu0
          %v1059 = vadd.f32 0.0, %v1058
          %1060 = vmatmul.bf16.gmra.mxu0 %v956
          %v1061 = vpop.f32.mrf.mxu0
          %v1062 = vadd.f32 0.0, %v1061
          %v1063 = vpop.f32.mrf.mxu0
          %v1064 = vadd.f32 0.0, %v1063
          %1065 = vmatmul.bf16.gmra.mxu0 %v957
          %v1066 = vpop.f32.mrf.mxu0
          %v1067 = vadd.f32 0.0, %v1066
          %v1068 = vpop.f32.mrf.mxu0
          %v1069 = vadd.f32 0.0, %v1068
          %1070 = vdwg.mxu0
          %v1071 = vmul.f32 %v1032, 0.5
          %v1072 = vmul.f32 %v1034, 0.5
          %v1073 = vmul.f32 %v1037, 0.5
          %v1074 = vmul.f32 %v1039, 0.5
          %v1075 = vmul.f32 %v1042, 0.5
          %v1076 = vmul.f32 %v1044, 0.5
          %v1077 = vmul.f32 %v1047, 0.5
          %v1078 = vmul.f32 %v1049, 0.5
          %v1079 = vmul.f32 %v1052, 0.5
          %v1080 = vmul.f32 %v1054, 0.5
          %v1081 = vmul.f32 %v1057, 0.5
          %v1082 = vmul.f32 %v1059, 0.5
          %v1083 = vmul.f32 %v1062, 0.5
          %v1084 = vmul.f32 %v1064, 0.5
          %v1085 = vmul.f32 %v1067, 0.5
          %v1086 = vmul.f32 %v1069, 0.5
          %v1087 = vld [vmem:[#allocation9] sm:$0xf]
          %v1088 = vld [vmem:[#allocation9 + $0x4] sm:$0xf]
          %v1089 = vld [vmem:[#allocation9 + $0x8] sm:$0xf]
          %v1090 = vld [vmem:[#allocation9 + $0xc] sm:$0xf]
          %v1091 = vld [vmem:[#allocation9 + $0x10] sm:$0xf]
          %v1092 = vld [vmem:[#allocation9 + $0x14] sm:$0xf]
          %v1093 = vld [vmem:[#allocation9 + $0x18] sm:$0xf]
          %v1094 = vld [vmem:[#allocation9 + $0x1c] sm:$0xf]
          %v1095 = vld [vmem:[#allocation9 + $0x20] sm:$0xf]
          %v1096 = vld [vmem:[#allocation9 + $0x24] sm:$0xf]
          %v1097 = vld [vmem:[#allocation9 + $0x28] sm:$0xf]
          %v1098 = vld [vmem:[#allocation9 + $0x2c] sm:$0xf]
          %v1099 = vld [vmem:[#allocation9 + $0x30] sm:$0xf]
          %v1100 = vld [vmem:[#allocation9 + $0x34] sm:$0xf]
          %v1101 = vld [vmem:[#allocation9 + $0x38] sm:$0xf]
          %v1102 = vld [vmem:[#allocation9 + $0x3c] sm:$0xf]
          %v1119 = vunpack.c.l.b16 %v1087
          %v1120 = vunpack.c.l.b16 %v1088
          %v1121 = vunpack.c.l.b16 %v1089
          %v1122 = vunpack.c.l.b16 %v1090
          %v1123 = vunpack.c.l.b16 %v1091
          %v1124 = vunpack.c.l.b16 %v1092
          %v1125 = vunpack.c.l.b16 %v1093
          %v1126 = vunpack.c.l.b16 %v1094
          %v1127 = vunpack.c.l.b16 %v1095
          %v1128 = vunpack.c.l.b16 %v1096
          %v1129 = vunpack.c.l.b16 %v1097
          %v1130 = vunpack.c.l.b16 %v1098
          %v1131 = vunpack.c.l.b16 %v1099
          %v1132 = vunpack.c.l.b16 %v1100
          %v1133 = vunpack.c.l.b16 %v1101
          %v1134 = vunpack.c.l.b16 %v1102
          %v1135 = vpack.c.b16 %v1120, %v1119
          %v1136 = vpack.c.b16 %v1122, %v1121
          %v1137 = vpack.c.b16 %v1124, %v1123
          %v1138 = vpack.c.b16 %v1126, %v1125
          %v1139 = vpack.c.b16 %v1128, %v1127
          %v1140 = vpack.c.b16 %v1130, %v1129
          %v1141 = vpack.c.b16 %v1132, %v1131
          %v1142 = vpack.c.b16 %v1134, %v1133
          %1151 = vmatpush.bf16.msra.mxu0 %v1142
          %1152 = vmatpush.bf16.msra.mxu0 %v1141
          %1153 = vmatpush.bf16.msra.mxu0 %v1140
          %1154 = vmatpush.bf16.msra.mxu0 %v1139
          %1155 = vmatpush.bf16.msra.mxu0 %v1138
          %1156 = vmatpush.bf16.msra.mxu0 %v1137
          %1157 = vmatpush.bf16.msra.mxu0 %v1136
          %1158 = vmatpush.bf16.msra.mxu0 %v1135
          %1159 = vmatmul.bf16.gmra.mxu0 %v926
          %v1160 = vpop.f32.mrf.mxu0
          %v1161 = vadd.f32 0.0, %v1160
          %v1162 = vpop.f32.mrf.mxu0
          %v1163 = vadd.f32 0.0, %v1162
          %1164 = vmatmul.bf16.gmra.mxu0 %v927
          %v1165 = vpop.f32.mrf.mxu0
          %v1166 = vadd.f32 0.0, %v1165
          %v1167 = vpop.f32.mrf.mxu0
          %v1168 = vadd.f32 0.0, %v1167
          %1169 = vmatmul.bf16.gmra.mxu0 %v928
          %v1170 = vpop.f32.mrf.mxu0
          %v1171 = vadd.f32 0.0, %v1170
          %v1172 = vpop.f32.mrf.mxu0
          %v1173 = vadd.f32 0.0, %v1172
          %1174 = vmatmul.bf16.gmra.mxu0 %v929
          %v1175 = vpop.f32.mrf.mxu0
          %v1176 = vadd.f32 0.0, %v1175
          %v1177 = vpop.f32.mrf.mxu0
          %v1178 = vadd.f32 0.0, %v1177
          %1179 = vmatmul.bf16.gmra.mxu0 %v930
          %v1180 = vpop.f32.mrf.mxu0
          %v1181 = vadd.f32 0.0, %v1180
          %v1182 = vpop.f32.mrf.mxu0
          %v1183 = vadd.f32 0.0, %v1182
          %1184 = vmatmul.bf16.gmra.mxu0 %v931
          %v1185 = vpop.f32.mrf.mxu0
          %v1186 = vadd.f32 0.0, %v1185
          %v1187 = vpop.f32.mrf.mxu0
          %v1188 = vadd.f32 0.0, %v1187
          %1189 = vmatmul.bf16.gmra.mxu0 %v932
          %v1190 = vpop.f32.mrf.mxu0
          %v1191 = vadd.f32 0.0, %v1190
          %v1192 = vpop.f32.mrf.mxu0
          %v1193 = vadd.f32 0.0, %v1192
          %1194 = vmatmul.bf16.gmra.mxu0 %v933
          %v1195 = vpop.f32.mrf.mxu0
          %v1196 = vadd.f32 0.0, %v1195
          %v1197 = vpop.f32.mrf.mxu0
          %v1198 = vadd.f32 0.0, %v1197
          %1199 = vdwg.mxu0
          %v1200 = vmul.f32 %v1161, 0.5
          %v1201 = vmul.f32 %v1163, 0.5
          %v1202 = vmul.f32 %v1166, 0.5
          %v1203 = vmul.f32 %v1168, 0.5
          %v1204 = vmul.f32 %v1171, 0.5
          %v1205 = vmul.f32 %v1173, 0.5
          %v1206 = vmul.f32 %v1176, 0.5
          %v1207 = vmul.f32 %v1178, 0.5
          %v1208 = vmul.f32 %v1181, 0.5
          %v1209 = vmul.f32 %v1183, 0.5
          %v1210 = vmul.f32 %v1186, 0.5
          %v1211 = vmul.f32 %v1188, 0.5
          %v1212 = vmul.f32 %v1191, 0.5
          %v1213 = vmul.f32 %v1193, 0.5
          %v1214 = vmul.f32 %v1196, 0.5
          %v1215 = vmul.f32 %v1198, 0.5
          %v1216 = vadd.f32 %v1071, %v1200
          %v1217 = vadd.f32 %v1072, %v1201
          %v1218 = vadd.f32 %v1073, %v1202
          %v1219 = vadd.f32 %v1074, %v1203
          %v1220 = vadd.f32 %v1075, %v1204
          %v1221 = vadd.f32 %v1076, %v1205
          %v1222 = vadd.f32 %v1077, %v1206
          %v1223 = vadd.f32 %v1078, %v1207
          %v1224 = vadd.f32 %v1079, %v1208
          %v1225 = vadd.f32 %v1080, %v1209
          %v1226 = vadd.f32 %v1081, %v1210
          %v1227 = vadd.f32 %v1082, %v1211
          %v1228 = vadd.f32 %v1083, %v1212
          %v1229 = vadd.f32 %v1084, %v1213
          %v1230 = vadd.f32 %v1085, %v1214
          %v1231 = vadd.f32 %v1086, %v1215
          %v1232 = vld [vmem:[%s481] sm:$0xf]
          %v1233 = vld [vmem:[%s481 + $0x4] sm:$0xf]
          %v1234 = vld [vmem:[%s481 + $0x8] sm:$0xf]
          %v1235 = vld [vmem:[%s481 + $0xc] sm:$0xf]
          %v1236 = vld [vmem:[%s481 + $0x10] sm:$0xf]
          %v1237 = vld [vmem:[%s481 + $0x14] sm:$0xf]
          %v1238 = vld [vmem:[%s481 + $0x18] sm:$0xf]
          %v1239 = vld [vmem:[%s481 + $0x1c] sm:$0xf]
          %v1240 = vld [vmem:[%s481 + $0x20] sm:$0xf]
          %v1241 = vld [vmem:[%s481 + $0x24] sm:$0xf]
          %v1242 = vld [vmem:[%s481 + $0x28] sm:$0xf]
          %v1243 = vld [vmem:[%s481 + $0x2c] sm:$0xf]
          %v1244 = vld [vmem:[%s481 + $0x30] sm:$0xf]
          %v1245 = vld [vmem:[%s481 + $0x34] sm:$0xf]
          %v1246 = vld [vmem:[%s481 + $0x38] sm:$0xf]
          %v1247 = vld [vmem:[%s481 + $0x3c] sm:$0xf]
          %v1248 = vld [vmem:[#allocation12] sm:$0xf]
          %v1249 = vld [vmem:[#allocation12 + $0x4] sm:$0xf]
          %v1250 = vld [vmem:[#allocation12 + $0x8] sm:$0xf]
          %v1251 = vld [vmem:[#allocation12 + $0xc] sm:$0xf]
          %v1252 = vld [vmem:[#allocation12 + $0x10] sm:$0xf]
          %v1253 = vld [vmem:[#allocation12 + $0x14] sm:$0xf]
          %v1254 = vld [vmem:[#allocation12 + $0x18] sm:$0xf]
          %v1255 = vld [vmem:[#allocation12 + $0x1c] sm:$0xf]
          %v1256 = vld [vmem:[#allocation12 + $0x20] sm:$0xf]
          %v1257 = vld [vmem:[#allocation12 + $0x24] sm:$0xf]
          %v1258 = vld [vmem:[#allocation12 + $0x28] sm:$0xf]
          %v1259 = vld [vmem:[#allocation12 + $0x2c] sm:$0xf]
          %v1260 = vld [vmem:[#allocation12 + $0x30] sm:$0xf]
          %v1261 = vld [vmem:[#allocation12 + $0x34] sm:$0xf]
          %v1262 = vld [vmem:[#allocation12 + $0x38] sm:$0xf]
          %v1263 = vld [vmem:[#allocation12 + $0x3c] sm:$0xf]
          %v1280 = vunpack.c.l.b16 %v1232
          %v1281 = vunpack.c.l.b16 %v1233
          %v1282 = vunpack.c.l.b16 %v1234
          %v1283 = vunpack.c.l.b16 %v1235
          %v1284 = vunpack.c.l.b16 %v1236
          %v1285 = vunpack.c.l.b16 %v1237
          %v1286 = vunpack.c.l.b16 %v1238
          %v1287 = vunpack.c.l.b16 %v1239
          %v1288 = vunpack.c.l.b16 %v1240
          %v1289 = vunpack.c.l.b16 %v1241
          %v1290 = vunpack.c.l.b16 %v1242
          %v1291 = vunpack.c.l.b16 %v1243
          %v1292 = vunpack.c.l.b16 %v1244
          %v1293 = vunpack.c.l.b16 %v1245
          %v1294 = vunpack.c.l.b16 %v1246
          %v1295 = vunpack.c.l.b16 %v1247
          %v1296 = vpack.c.b16 %v1281, %v1280
          %v1297 = vpack.c.b16 %v1283, %v1282
          %v1298 = vpack.c.b16 %v1285, %v1284
          %v1299 = vpack.c.b16 %v1287, %v1286
          %v1300 = vpack.c.b16 %v1289, %v1288
          %v1301 = vpack.c.b16 %v1291, %v1290
          %v1302 = vpack.c.b16 %v1293, %v1292
          %v1303 = vpack.c.b16 %v1295, %v1294
          %v1328 = vunpack.c.l.b16 %v1248
          %v1329 = vunpack.c.l.b16 %v1249
          %v1330 = vunpack.c.l.b16 %v1250
          %v1331 = vunpack.c.l.b16 %v1251
          %v1332 = vunpack.c.l.b16 %v1252
          %v1333 = vunpack.c.l.b16 %v1253
          %v1334 = vunpack.c.l.b16 %v1254
          %v1335 = vunpack.c.l.b16 %v1255
          %v1336 = vunpack.c.l.b16 %v1256
          %v1337 = vunpack.c.l.b16 %v1257
          %v1338 = vunpack.c.l.b16 %v1258
          %v1339 = vunpack.c.l.b16 %v1259
          %v1340 = vunpack.c.l.b16 %v1260
          %v1341 = vunpack.c.l.b16 %v1261
          %v1342 = vunpack.c.l.b16 %v1262
          %v1343 = vunpack.c.l.b16 %v1263
          %v1344 = vpack.c.b16 %v1329, %v1328
          %v1345 = vpack.c.b16 %v1331, %v1330
          %v1346 = vpack.c.b16 %v1333, %v1332
          %v1347 = vpack.c.b16 %v1335, %v1334
          %v1348 = vpack.c.b16 %v1337, %v1336
          %v1349 = vpack.c.b16 %v1339, %v1338
          %v1350 = vpack.c.b16 %v1341, %v1340
          %v1351 = vpack.c.b16 %v1343, %v1342
          %1360 = vmatpush.bf16.msra.mxu0 %v1351
          %1361 = vmatpush.bf16.msra.mxu0 %v1350
          %1362 = vmatpush.bf16.msra.mxu0 %v1349
          %1363 = vmatpush.bf16.msra.mxu0 %v1348
          %1364 = vmatpush.bf16.msra.mxu0 %v1347
          %1365 = vmatpush.bf16.msra.mxu0 %v1346
          %1366 = vmatpush.bf16.msra.mxu0 %v1345
          %1367 = vmatpush.bf16.msra.mxu0 %v1344
          %1368 = vmatmul.bf16.gmra.mxu0 %v1296
          %v1369 = vpop.f32.mrf.mxu0
          %v1370 = vadd.f32 0.0, %v1369
          %v1371 = vpop.f32.mrf.mxu0
          %v1372 = vadd.f32 0.0, %v1371
          %1373 = vmatmul.bf16.gmra.mxu0 %v1297
          %v1374 = vpop.f32.mrf.mxu0
          %v1375 = vadd.f32 0.0, %v1374
          %v1376 = vpop.f32.mrf.mxu0
          %v1377 = vadd.f32 0.0, %v1376
          %1378 = vmatmul.bf16.gmra.mxu0 %v1298
          %v1379 = vpop.f32.mrf.mxu0
          %v1380 = vadd.f32 0.0, %v1379
          %v1381 = vpop.f32.mrf.mxu0
          %v1382 = vadd.f32 0.0, %v1381
          %1383 = vmatmul.bf16.gmra.mxu0 %v1299
          %v1384 = vpop.f32.mrf.mxu0
          %v1385 = vadd.f32 0.0, %v1384
          %v1386 = vpop.f32.mrf.mxu0
          %v1387 = vadd.f32 0.0, %v1386
          %1388 = vmatmul.bf16.gmra.mxu0 %v1300
          %v1389 = vpop.f32.mrf.mxu0
          %v1390 = vadd.f32 0.0, %v1389
          %v1391 = vpop.f32.mrf.mxu0
          %v1392 = vadd.f32 0.0, %v1391
          %1393 = vmatmul.bf16.gmra.mxu0 %v1301
          %v1394 = vpop.f32.mrf.mxu0
          %v1395 = vadd.f32 0.0, %v1394
          %v1396 = vpop.f32.mrf.mxu0
          %v1397 = vadd.f32 0.0, %v1396
          %1398 = vmatmul.bf16.gmra.mxu0 %v1302
          %v1399 = vpop.f32.mrf.mxu0
          %v1400 = vadd.f32 0.0, %v1399
          %v1401 = vpop.f32.mrf.mxu0
          %v1402 = vadd.f32 0.0, %v1401
          %1403 = vmatmul.bf16.gmra.mxu0 %v1303
          %v1404 = vpop.f32.mrf.mxu0
          %v1405 = vadd.f32 0.0, %v1404
          %v1406 = vpop.f32.mrf.mxu0
          %v1407 = vadd.f32 0.0, %v1406
          %1408 = vdwg.mxu0
          %v1409 = vadd.f32 %v1216, %v1370
          %v1410 = vadd.f32 %v1217, %v1372
          %v1411 = vadd.f32 %v1218, %v1375
          %v1412 = vadd.f32 %v1219, %v1377
          %v1413 = vadd.f32 %v1220, %v1380
          %v1414 = vadd.f32 %v1221, %v1382
          %v1415 = vadd.f32 %v1222, %v1385
          %v1416 = vadd.f32 %v1223, %v1387
          %v1417 = vadd.f32 %v1224, %v1390
          %v1418 = vadd.f32 %v1225, %v1392
          %v1419 = vadd.f32 %v1226, %v1395
          %v1420 = vadd.f32 %v1227, %v1397
          %v1421 = vadd.f32 %v1228, %v1400
          %v1422 = vadd.f32 %v1229, %v1402
          %v1423 = vadd.f32 %v1230, %v1405
          %v1424 = vadd.f32 %v1231, %v1407
          %v1425 = vld [vmem:[%s7] sm:$0x1]
          %v1427 = vperm.slane %v1425, 0
          %v1429 = vadd.f32 %v1409, %v1427
          %v1430 = vadd.f32 %v1410, %v1427
          %v1431 = vadd.f32 %v1411, %v1427
          %v1432 = vadd.f32 %v1412, %v1427
          %v1433 = vadd.f32 %v1413, %v1427
          %v1434 = vadd.f32 %v1414, %v1427
          %v1435 = vadd.f32 %v1415, %v1427
          %v1436 = vadd.f32 %v1416, %v1427
          %v1437 = vadd.f32 %v1417, %v1427
          %v1438 = vadd.f32 %v1418, %v1427
          %v1439 = vadd.f32 %v1419, %v1427
          %v1440 = vadd.f32 %v1420, %v1427
          %v1441 = vadd.f32 %v1421, %v1427
          %v1442 = vadd.f32 %v1422, %v1427
          %v1443 = vadd.f32 %v1423, %v1427
          %v1444 = vadd.f32 %v1424, %v1427
          %v1445 = vlaneseq
          %v1446 = vand.u32 %v1445, 127
          %vm1447 = vcmp.lt.s32.totalorder %v1446, 8
          %v1448 = vsel %vm1447, %v1429, -1e+30
          %v1449 = vsel %vm1447, %v1430, -1e+30
          %v1450 = vsel %vm1447, %v1431, -1e+30
          %v1451 = vsel %vm1447, %v1432, -1e+30
          %v1452 = vsel %vm1447, %v1433, -1e+30
          %v1453 = vsel %vm1447, %v1434, -1e+30
          %v1454 = vsel %vm1447, %v1435, -1e+30
          %v1455 = vsel %vm1447, %v1436, -1e+30
          %v1456 = vsel %vm1447, %v1437, -1e+30
          %v1457 = vsel %vm1447, %v1438, -1e+30
          %v1458 = vsel %vm1447, %v1439, -1e+30
          %v1459 = vsel %vm1447, %v1440, -1e+30
          %v1460 = vsel %vm1447, %v1441, -1e+30
          %v1461 = vsel %vm1447, %v1442, -1e+30
          %v1462 = vsel %vm1447, %v1443, -1e+30
          %v1463 = vsel %vm1447, %v1444, -1e+30
          %1464 = vmax.xlane.f32.xlu0 %v1448
          %v1465 = vpop.xlane.xlu0 %1464
          %1466 = vmax.xlane.f32.xlu0 %v1449
          %v1467 = vpop.xlane.xlu0 %1466
          %1468 = vmax.xlane.f32.xlu0 %v1450
          %v1469 = vpop.xlane.xlu0 %1468
          %1470 = vmax.xlane.f32.xlu0 %v1451
          %v1471 = vpop.xlane.xlu0 %1470
          %1472 = vmax.xlane.f32.xlu0 %v1452
          %v1473 = vpop.xlane.xlu0 %1472
          %1474 = vmax.xlane.f32.xlu0 %v1453
          %v1475 = vpop.xlane.xlu0 %1474
          %1476 = vmax.xlane.f32.xlu0 %v1454
          %v1477 = vpop.xlane.xlu0 %1476
          %1478 = vmax.xlane.f32.xlu0 %v1455
          %v1479 = vpop.xlane.xlu0 %1478
          %1480 = vmax.xlane.f32.xlu0 %v1456
          %v1481 = vpop.xlane.xlu0 %1480
          %1482 = vmax.xlane.f32.xlu0 %v1457
          %v1483 = vpop.xlane.xlu0 %1482
          %1484 = vmax.xlane.f32.xlu0 %v1458
          %v1485 = vpop.xlane.xlu0 %1484
          %1486 = vmax.xlane.f32.xlu0 %v1459
          %v1487 = vpop.xlane.xlu0 %1486
          %1488 = vmax.xlane.f32.xlu0 %v1460
          %v1489 = vpop.xlane.xlu0 %1488
          %1490 = vmax.xlane.f32.xlu0 %v1461
          %v1491 = vpop.xlane.xlu0 %1490
          %1492 = vmax.xlane.f32.xlu0 %v1462
          %v1493 = vpop.xlane.xlu0 %1492
          %1494 = vmax.xlane.f32.xlu0 %v1463
          %v1495 = vpop.xlane.xlu0 %1494
          %v1496 = vsub.f32 %v1448, %v1465
          %v1497 = vsub.f32 %v1449, %v1467
          %v1498 = vsub.f32 %v1450, %v1469
          %v1499 = vsub.f32 %v1451, %v1471
          %v1500 = vsub.f32 %v1452, %v1473
          %v1501 = vsub.f32 %v1453, %v1475
          %v1502 = vsub.f32 %v1454, %v1477
          %v1503 = vsub.f32 %v1455, %v1479
          %v1504 = vsub.f32 %v1456, %v1481
          %v1505 = vsub.f32 %v1457, %v1483
          %v1506 = vsub.f32 %v1458, %v1485
          %v1507 = vsub.f32 %v1459, %v1487
          %v1508 = vsub.f32 %v1460, %v1489
          %v1509 = vsub.f32 %v1461, %v1491
          %v1510 = vsub.f32 %v1462, %v1493
          %v1511 = vsub.f32 %v1463, %v1495
          %v1512 = vmul.f32 %v1496, 1.442695
          %v1513 = vpow.pop %v1512
          %v1514 = vmul.f32 %v1497, 1.442695
          %v1515 = vpow.pop %v1514
          %v1516 = vmul.f32 %v1498, 1.442695
          %v1517 = vpow.pop %v1516
          %v1518 = vmul.f32 %v1499, 1.442695
          %v1519 = vpow.pop %v1518
          %v1520 = vmul.f32 %v1500, 1.442695
          %v1521 = vpow.pop %v1520
          %v1522 = vmul.f32 %v1501, 1.442695
          %v1523 = vpow.pop %v1522
          %v1524 = vmul.f32 %v1502, 1.442695
          %v1525 = vpow.pop %v1524
          %v1526 = vmul.f32 %v1503, 1.442695
          %v1527 = vpow.pop %v1526
          %v1528 = vmul.f32 %v1504, 1.442695
          %v1529 = vpow.pop %v1528
          %v1530 = vmul.f32 %v1505, 1.442695
          %v1531 = vpow.pop %v1530
          %v1532 = vmul.f32 %v1506, 1.442695
          %v1533 = vpow.pop %v1532
          %v1534 = vmul.f32 %v1507, 1.442695
          %v1535 = vpow.pop %v1534
          %v1536 = vmul.f32 %v1508, 1.442695
          %v1537 = vpow.pop %v1536
          %v1538 = vmul.f32 %v1509, 1.442695
          %v1539 = vpow.pop %v1538
          %v1540 = vmul.f32 %v1510, 1.442695
          %v1541 = vpow.pop %v1540
          %v1542 = vmul.f32 %v1511, 1.442695
          %v1543 = vpow.pop %v1542
          %1544 = vadd.xlane.f32.xlu0 %v1513
          %v1545 = vpop.xlane.xlu0 %1544
          %1546 = vadd.xlane.f32.xlu0 %v1515
          %v1547 = vpop.xlane.xlu0 %1546
          %1548 = vadd.xlane.f32.xlu0 %v1517
          %v1549 = vpop.xlane.xlu0 %1548
          %1550 = vadd.xlane.f32.xlu0 %v1519
          %v1551 = vpop.xlane.xlu0 %1550
          %1552 = vadd.xlane.f32.xlu0 %v1521
          %v1553 = vpop.xlane.xlu0 %1552
          %1554 = vadd.xlane.f32.xlu0 %v1523
          %v1555 = vpop.xlane.xlu0 %1554
          %1556 = vadd.xlane.f32.xlu0 %v1525
          %v1557 = vpop.xlane.xlu0 %1556
          %1558 = vadd.xlane.f32.xlu0 %v1527
          %v1559 = vpop.xlane.xlu0 %1558
          %1560 = vadd.xlane.f32.xlu0 %v1529
          %v1561 = vpop.xlane.xlu0 %1560
          %1562 = vadd.xlane.f32.xlu0 %v1531
          %v1563 = vpop.xlane.xlu0 %1562
          %1564 = vadd.xlane.f32.xlu0 %v1533
          %v1565 = vpop.xlane.xlu0 %1564
          %1566 = vadd.xlane.f32.xlu0 %v1535
          %v1567 = vpop.xlane.xlu0 %1566
          %1568 = vadd.xlane.f32.xlu0 %v1537
          %v1569 = vpop.xlane.xlu0 %1568
          %1570 = vadd.xlane.f32.xlu0 %v1539
          %v1571 = vpop.xlane.xlu0 %1570
          %1572 = vadd.xlane.f32.xlu0 %v1541
          %v1573 = vpop.xlane.xlu0 %1572
          %1574 = vadd.xlane.f32.xlu0 %v1543
          %v1575 = vpop.xlane.xlu0 %1574
          %v1576 = vlog2.pop %v1545
          %v1577 = vmul.f32 %v1576, 0.6931472
          %v1578 = vlog2.pop %v1547
          %v1579 = vmul.f32 %v1578, 0.6931472
          %v1580 = vlog2.pop %v1549
          %v1581 = vmul.f32 %v1580, 0.6931472
          %v1582 = vlog2.pop %v1551
          %v1583 = vmul.f32 %v1582, 0.6931472
          %v1584 = vlog2.pop %v1553
          %v1585 = vmul.f32 %v1584, 0.6931472
          %v1586 = vlog2.pop %v1555
          %v1587 = vmul.f32 %v1586, 0.6931472
          %v1588 = vlog2.pop %v1557
          %v1589 = vmul.f32 %v1588, 0.6931472
          %v1590 = vlog2.pop %v1559
          %v1591 = vmul.f32 %v1590, 0.6931472
          %v1592 = vlog2.pop %v1561
          %v1593 = vmul.f32 %v1592, 0.6931472
          %v1594 = vlog2.pop %v1563
          %v1595 = vmul.f32 %v1594, 0.6931472
          %v1596 = vlog2.pop %v1565
          %v1597 = vmul.f32 %v1596, 0.6931472
          %v1598 = vlog2.pop %v1567
          %v1599 = vmul.f32 %v1598, 0.6931472
          %v1600 = vlog2.pop %v1569
          %v1601 = vmul.f32 %v1600, 0.6931472
          %v1602 = vlog2.pop %v1571
          %v1603 = vmul.f32 %v1602, 0.6931472
          %v1604 = vlog2.pop %v1573
          %v1605 = vmul.f32 %v1604, 0.6931472
          %v1606 = vlog2.pop %v1575
          %v1607 = vmul.f32 %v1606, 0.6931472
          %v1608 = vsub.f32 %v1496, %v1577
          %v1609 = vsub.f32 %v1497, %v1579
          %v1610 = vsub.f32 %v1498, %v1581
          %v1611 = vsub.f32 %v1499, %v1583
          %v1612 = vsub.f32 %v1500, %v1585
          %v1613 = vsub.f32 %v1501, %v1587
          %v1614 = vsub.f32 %v1502, %v1589
          %v1615 = vsub.f32 %v1503, %v1591
          %v1616 = vsub.f32 %v1504, %v1593
          %v1617 = vsub.f32 %v1505, %v1595
          %v1618 = vsub.f32 %v1506, %v1597
          %v1619 = vsub.f32 %v1507, %v1599
          %v1620 = vsub.f32 %v1508, %v1601
          %v1621 = vsub.f32 %v1509, %v1603
          %v1622 = vsub.f32 %v1510, %v1605
          %v1623 = vsub.f32 %v1511, %v1607
          %1624 = vst [vmem:[%s468] sm:$0xff] %v1608
          %1625 = vst [vmem:[%s468 + $0x8] sm:$0xff] %v1609
          %1626 = vst [vmem:[%s468 + $0x10] sm:$0xff] %v1610
          %1627 = vst [vmem:[%s468 + $0x18] sm:$0xff] %v1611
          %1628 = vst [vmem:[%s468 + $0x20] sm:$0xff] %v1612
          %1629 = vst [vmem:[%s468 + $0x28] sm:$0xff] %v1613
          %1630 = vst [vmem:[%s468 + $0x30] sm:$0xff] %v1614
          %1631 = vst [vmem:[%s468 + $0x38] sm:$0xff] %v1615
          %1632 = vst [vmem:[%s468 + $0x40] sm:$0xff] %v1616
          %1633 = vst [vmem:[%s468 + $0x48] sm:$0xff] %v1617
          %1634 = vst [vmem:[%s468 + $0x50] sm:$0xff] %v1618
          %1635 = vst [vmem:[%s468 + $0x58] sm:$0xff] %v1619
          %1636 = vst [vmem:[%s468 + $0x60] sm:$0xff] %v1620
          %1637 = vst [vmem:[%s468 + $0x68] sm:$0xff] %v1621
          %1638 = vst [vmem:[%s468 + $0x70] sm:$0xff] %v1622
          %1639 = vst [vmem:[%s468 + $0x78] sm:$0xff] %v1623
        $region80: #{dirgnn_forward.5} parent=51 // pred_fallthru
          _
        %s1640 = sand.u32 %s241, 1
        %s1641 = scalar_lea.sflag [#allocation6], %s1640
        %s1642 = sand.u32 %s241, 1
        %s1643 = smul.addr %s1642, 128
        %s1644 = scalar_lea.vmem [#allocation13], %s1643
        // Predicated region
        $region81: #{dirgnn_forward.5} parent=51 // pred_check
          %p1645 = pneg %p251
        $region82: #{dirgnn_forward.5} parent=51 // pred_check_branch
          %1647 = sbr.rel (%p1645) target = $region84
        $region83: #{dirgnn_forward.5} parent=51 // pred_region
          %s1648 = smul.u32 16, %s33
          %1650 = vsyncadd %s1641, 0
          %s1651 = smul.addr %s1648, 8
          %s1652 = scalar_lea.hbm %s8, %s1651
          %s1653 = sshll.u32 %s1644, 4
          %s1654 = int_to_ptr.vmem [resolvable:$true] %s1653
          %s1655 = sshll.u32 %s1652, 4
          %s1656 = int_to_ptr.hbm [resolvable:$true] %s1655
          %1661 = dma.vmem_to_hbm [thread:$0]  %s1654, 2048, %s1656, %s1641, 128, 128, 8
        $region84: #{dirgnn_forward.5} parent=51 // pred_fallthru
          _
      $region52: #{dirgnn_forward.5} parent=5 // pred_fallthru
        _
      %p1662 = scmp.le.s32.totalorder 2, %s24
      // Predicated region
      $region85: #{dirgnn_forward.5} parent=5 // pred_check
        %p1663 = pneg %p1662
      $region86: #{dirgnn_forward.5} parent=5 // pred_check_branch
        %1665 = sbr.rel (%p1663) target = $region88
      $region87: #{dirgnn_forward.5} parent=5 // pred_region
        %s1666 = ssub.s32 %s24, 2
        // Predicated region
        $region89: #{dirgnn_forward.5} parent=87 // pred_check
          %p1667 = pneg %p257
        $region90: #{dirgnn_forward.5} parent=87 // pred_check_branch
          %1669 = sbr.rel (%p1667) target = $region92
        $region91: #{dirgnn_forward.5} parent=87 // pred_region
          %s1670 = sand.u32 %s242, 1
          %s1671 = scalar_lea.sflag [#allocation6], %s1670
          %s1672 = sand.u32 %s242, 1
          %s1673 = smul.addr %s1672, 128
          %s1674 = scalar_lea.vmem [#allocation13], %s1673
          %1676 = dma.done %s1671, 2048
        $region92: #{dirgnn_forward.5} parent=87 // pred_fallthru
          _
      $region88: #{dirgnn_forward.5} parent=5 // pred_fallthru
        _
    $region6: #{dirgnn_forward.5} parent=1 // loop_footer
      %s28 = sadd.s32 1, %s24
    $region7: #{dirgnn_forward.5} parent=1 // loop_footer_branch
      %23 = sbr.rel target = $region3
    $region8: #{dirgnn_forward.5} parent=1 // loop_exit
      _
    %1677 = vsyncpa [#allocation5], 1
    %s1678 = scalar_lea.sflag [#allocation5], 1
    %1679 = vsyncpa %s1678, 1
    %1680 = vsyncpa [#allocation8], 1
    %s1681 = scalar_lea.sflag [#allocation8], 1
    %1682 = vsyncpa %s1681, 1
    %1683 = vsyncpa [#allocation11], 1
    %1684 = vsyncpa [#allocation6], 1
    %s1685 = scalar_lea.sflag [#allocation6], 1
    %1686 = vsyncpa %s1685, 1

</llo_original>
